<compile_context>
chip_gen: v5e
topology: v5e:2x2
jax: 0.10.0
libtpu: 0.0.40
codegen_flags: <defaults>
</compile_context>

<pallas_src>
import functools

import jax
import jax.numpy as jnp
from jax.experimental import pallas as pl


# ---------------------------------------------------------------------------
# Single fused kernel: whole forward pass
# ---------------------------------------------------------------------------

def _net_kernel(x_ref, adj_ref,
                bn1_g, bn1_b, lin1_w, lin1_b, con1_w, con1_as, con1_ad, con1_b,
                bn2_g, bn2_b, lin2_w, lin2_b, con2_w, con2_as, con2_ad, con2_b,
                bn3_g, bn3_b, lin3_w, lin3_b, con3_w, con3_as, con3_ad, con3_b,
                o_ref, *, heads, hidden):
    # Adjacency (int8) loaded into VMEM once, reused by all 3 GAT layers.
    mask = adj_ref[...] != 0                                                       # (N, N) bool

    def batchnorm(xv, g_ref, b_ref):
        # Training-mode batch statistics (biased variance), eps=1e-5.
        mean = jnp.mean(xv, axis=0, keepdims=True)
        d = xv - mean
        var = jnp.mean(d * d, axis=0, keepdims=True)
        return d * jax.lax.rsqrt(var + 1e-5) * g_ref[...] + b_ref[...]

    def gat(xb_bf, w_ref, asrc_ref, adst_ref, b_ref, n_heads, d_head):
        # All heads in one matmul (bf16 operands, f32 accumulate);
        # columns of h_all are head-major [h0|h1|...].
        h_all = jnp.dot(xb_bf, w_ref[...].astype(jnp.bfloat16),
                        preferred_element_type=jnp.float32)                        # (N, H) f32
        h_all_bf = h_all.astype(jnp.bfloat16)
        # Per-head attention scores for ALL heads via single small f32 matmuls
        # against block-diagonal attention matrices (H, n_heads).
        s_src = jnp.dot(h_all, asrc_ref[...], preferred_element_type=jnp.float32)  # (N, n_heads)
        s_dst = jnp.dot(h_all, adst_ref[...], preferred_element_type=jnp.float32)  # (N, n_heads)
        s_src_t = s_src.T                                                          # (n_heads, N): 1 XLU transpose/layer

        head_outs = []
        for hd in range(n_heads):  # static unroll; heads is tiny
            e = s_dst[:, hd:hd + 1] + s_src_t[hd:hd + 1, :]                        # (N, N)
            e = jnp.maximum(e, 0.2 * e)                                            # LeakyReLU(0.2), 1 VPU op
            e = jnp.where(mask, e, -1e30)
            e = e - jnp.max(e, axis=-1, keepdims=True)
            p = jnp.exp(e)                                                         # masked entries underflow to 0
            denom = jnp.sum(p, axis=-1, keepdims=True)                             # >= 1 (self-loops present)
            alpha = p * pl.reciprocal(denom, approx=False)                         # exact divide (parity)
            # Static lane slice of this head's columns: (N, d_head).
            hv = h_all_bf[:, hd * d_head:(hd + 1) * d_head]
            head_outs.append(jnp.dot(alpha.astype(jnp.bfloat16), hv,
                                     preferred_element_type=jnp.float32))          # (N, d_head)
        out = head_outs[0] if n_heads == 1 else jnp.concatenate(head_outs, axis=-1)
        return out + b_ref[...]                                                    # GAT bias fused

    def layer(xv, bng, bnb, lw, lb, cw, cas, cad, cb, n_heads, d_head):
        xb = batchnorm(xv, bng, bnb)
        xb_bf = xb.astype(jnp.bfloat16)                                            # one cast, reused by both matmuls
        g = gat(xb_bf, cw, cas, cad, cb, n_heads, d_head)
        y = jnp.dot(xb_bf, lw[...].astype(jnp.bfloat16),
                    preferred_element_type=jnp.float32) + lb[...] + g
        return jnp.maximum(y, 0.0)                                                 # ReLU

    h = layer(x_ref[...], bn1_g, bn1_b, lin1_w, lin1_b,
              con1_w, con1_as, con1_ad, con1_b, heads, hidden)
    h = layer(h, bn2_g, bn2_b, lin2_w, lin2_b,
              con2_w, con2_as, con2_ad, con2_b, heads, hidden)
    h = layer(h, bn3_g, bn3_b, lin3_w, lin3_b,
              con3_w, con3_as, con3_ad, con3_b, 1, 2)
    o_ref[...] = h


# ---------------------------------------------------------------------------
# Wrapper: one pallas_call for the whole network
# ---------------------------------------------------------------------------

def net_forward(x, adj, p, *, heads, hidden):
    N = x.shape[0]
    kernel = functools.partial(_net_kernel, heads=heads, hidden=hidden)
    args = (x, adj,
            p["bn1_g"], p["bn1_b"], p["lin1_w"], p["lin1_b"],
            p["con1_w"], p["con1_asrc"], p["con1_adst"], p["con1_b"],
            p["bn2_g"], p["bn2_b"], p["lin2_w"], p["lin2_b"],
            p["con2_w"], p["con2_asrc"], p["con2_adst"], p["con2_b"],
            p["bn3_g"], p["bn3_b"], p["lin3_w"], p["lin3_b"],
            p["con3_w"], p["con3_asrc"], p["con3_adst"], p["con3_b"])
    # Whole arrays are VMEM-resident (total working set ~tens of KB); no grid needed.
    # TODO(synk): for large N / multi-graph batches, add a destination-row grid
    # with dimension_semantics=("parallel",) (v7x megacore) and row-tile the adjacency.
    return pl.pallas_call(
        kernel,
        out_shape=jax.ShapeDtypeStruct((N, 2), jnp.float32),
    )(*args)


# ---------------------------------------------------------------------------
# Parameters (deterministic, synthetic) with head-folded layouts
# ---------------------------------------------------------------------------

def _glorot(key, shape):
    fan_in, fan_out = shape[-2], shape[-1]
    scale = jnp.sqrt(6.0 / (fan_in + fan_out))
    return jax.random.uniform(key, shape, jnp.float32, -scale, scale)


def _fold_heads(w):
    # (heads, F, D) -> (F, heads*D), head-major along columns.
    heads, F, D = w.shape
    return jnp.transpose(w, (1, 0, 2)).reshape(F, heads * D)


def _att_block(a):
    # (heads, D) -> (heads*D, heads) block-diagonal columns so that
    # (h_all @ A)[:, h] = sum_d h_all[:, h*D+d] * a[h, d].
    heads, D = a.shape
    m = jnp.zeros((heads * D, heads), jnp.float32)
    for h in range(heads):
        m = m.at[h * D:(h + 1) * D, h].set(a[h])
    return m


def init_params(key, f_in, hidden, heads):
    ks = jax.random.split(key, 12)
    H = hidden * heads
    w1 = _glorot(ks[3], (heads, f_in, hidden))
    a1s, a1d = _glorot(ks[4], (heads, hidden)), _glorot(ks[5], (heads, hidden))
    w2 = _glorot(ks[6], (heads, H, hidden))
    a2s, a2d = _glorot(ks[7], (heads, hidden)), _glorot(ks[8], (heads, hidden))
    w3 = _glorot(ks[9], (1, H, 2))
    a3s, a3d = _glorot(ks[10], (1, 2)), _glorot(ks[11], (1, 2))
    return {
        # batchnorms
        "bn1_g": jnp.ones((1, f_in), jnp.float32), "bn1_b": jnp.zeros((1, f_in), jnp.float32),
        "bn2_g": jnp.ones((1, H), jnp.float32),    "bn2_b": jnp.zeros((1, H), jnp.float32),
        "bn3_g": jnp.ones((1, H), jnp.float32),    "bn3_b": jnp.zeros((1, H), jnp.float32),
        # linears
        "lin1_w": _glorot(ks[0], (f_in, H)), "lin1_b": jnp.zeros((1, H), jnp.float32),
        "lin2_w": _glorot(ks[1], (H, H)),    "lin2_b": jnp.zeros((1, H), jnp.float32),
        "lin3_w": _glorot(ks[2], (H, 2)),    "lin3_b": jnp.zeros((1, 2), jnp.float32),
        # GAT layers (heads folded into lane dim; attention as block matrices)
        "con1_w": _fold_heads(w1), "con1_asrc": _att_block(a1s), "con1_adst": _att_block(a1d),
        "con1_b": jnp.zeros((1, H), jnp.float32),
        "con2_w": _fold_heads(w2), "con2_asrc": _att_block(a2s), "con2_adst": _att_block(a2d),
        "con2_b": jnp.zeros((1, H), jnp.float32),
        "con3_w": _fold_heads(w3), "con3_asrc": _att_block(a3s), "con3_adst": _att_block(a3d),
        "con3_b": jnp.zeros((1, 2), jnp.float32),
    }


def edges_to_adj(edge_index, num_nodes):
    # Dense int8 adjacency mask; adj[i, j] = 1 iff edge j -> i exists (incl. self-loops).
    src, dst = edge_index[0], edge_index[1]
    adj = jnp.zeros((num_nodes, num_nodes), jnp.int8).at[dst, src].set(1)
    adj = jnp.maximum(adj, jnp.eye(num_nodes, dtype=jnp.int8))
    return adj


if __name__ == "__main__":
    # Small synthetic graph consistent with the module's forward:
    # N nodes, f_in input features, hidden_size=8, heads=4 -> hidden*heads=32, 2 classes.
    N, F_IN, HIDDEN, HEADS, E = 64, 32, 8, 4, 128

    key = jax.random.PRNGKey(0)
    kx, ke1, ke2, kp = jax.random.split(key, 4)

    x = jax.random.normal(kx, (N, F_IN), jnp.float32)
    edge_index = jnp.stack([
        jax.random.randint(ke1, (E,), 0, N),
        jax.random.randint(ke2, (E,), 0, N),
    ], axis=0)
    adj = edges_to_adj(edge_index, N)

    params = init_params(kp, F_IN, HIDDEN, HEADS)

    fwd = jax.jit(functools.partial(net_forward, heads=HEADS, hidden=HIDDEN))
    out = fwd(x, adj, params)
    out = jax.block_until_ready(out)

    assert out.shape == (N, 2) and out.dtype == jnp.float32
    assert bool(jnp.all(jnp.isfinite(out)))
    print("KERNEL_OK")
</pallas_src>

<mosaic_0001>
module attributes {stable_mosaic.version = 11 : i64} {
  func.func @_net_kernel(%arg0: memref<64x32xf32, #tpu.memory_space<vmem>>, %arg1: memref<64x64xi8, #tpu.memory_space<vmem>>, %arg2: memref<1x32xf32, #tpu.memory_space<vmem>>, %arg3: memref<1x32xf32, #tpu.memory_space<vmem>>, %arg4: memref<32x32xf32, #tpu.memory_space<vmem>>, %arg5: memref<1x32xf32, #tpu.memory_space<vmem>>, %arg6: memref<32x32xf32, #tpu.memory_space<vmem>>, %arg7: memref<32x4xf32, #tpu.memory_space<vmem>>, %arg8: memref<32x4xf32, #tpu.memory_space<vmem>>, %arg9: memref<1x32xf32, #tpu.memory_space<vmem>>, %arg10: memref<1x32xf32, #tpu.memory_space<vmem>>, %arg11: memref<1x32xf32, #tpu.memory_space<vmem>>, %arg12: memref<32x32xf32, #tpu.memory_space<vmem>>, %arg13: memref<1x32xf32, #tpu.memory_space<vmem>>, %arg14: memref<32x32xf32, #tpu.memory_space<vmem>>, %arg15: memref<32x4xf32, #tpu.memory_space<vmem>>, %arg16: memref<32x4xf32, #tpu.memory_space<vmem>>, %arg17: memref<1x32xf32, #tpu.memory_space<vmem>>, %arg18: memref<1x32xf32, #tpu.memory_space<vmem>>, %arg19: memref<1x32xf32, #tpu.memory_space<vmem>>, %arg20: memref<32x2xf32, #tpu.memory_space<vmem>>, %arg21: memref<1x2xf32, #tpu.memory_space<vmem>>, %arg22: memref<32x2xf32, #tpu.memory_space<vmem>>, %arg23: memref<2x1xf32, #tpu.memory_space<vmem>>, %arg24: memref<2x1xf32, #tpu.memory_space<vmem>>, %arg25: memref<1x2xf32, #tpu.memory_space<vmem>>, %arg26: memref<64x2xf32, #tpu.memory_space<vmem>>) attributes {dimension_semantics = [], scalar_prefetch = 0 : i64, scratch_operands = 0 : i64, tpu.core_type = #tpu.core_type<tc>} {
    %c0 = arith.constant 0 : index
    %c0_0 = arith.constant 0 : index
    %0 = vector.load %arg1[%c0, %c0_0] : memref<64x64xi8, #tpu.memory_space<vmem>>, vector<64x64xi8>
    %c0_i8 = arith.constant 0 : i8
    %1 = vector.broadcast %c0_i8 : i8 to vector<64x64xi8>
    %2 = arith.cmpi ne, %0, %1 : vector<64x64xi8>
    %c0_1 = arith.constant 0 : index
    %c0_2 = arith.constant 0 : index
    %3 = vector.load %arg0[%c0_1, %c0_2] : memref<64x32xf32, #tpu.memory_space<vmem>>, vector<64x32xf32>
    %cst = arith.constant dense<0.000000e+00> : vector<32xf32>
    %4 = vector.multi_reduction <add>, %3, %cst [0] : vector<64x32xf32> to vector<32xf32>
    %5 = vector.shape_cast %4 : vector<32xf32> to vector<1x32xf32>
    %cst_3 = arith.constant 6.400000e+01 : f32
    %6 = vector.broadcast %cst_3 : f32 to vector<1x32xf32>
    %7 = arith.divf %5, %6 : vector<1x32xf32>
    %8 = vector.broadcast %7 : vector<1x32xf32> to vector<64x32xf32>
    %9 = arith.subf %3, %8 : vector<64x32xf32>
    %10 = arith.mulf %9, %9 : vector<64x32xf32>
    %cst_4 = arith.constant dense<0.000000e+00> : vector<32xf32>
    %11 = vector.multi_reduction <add>, %10, %cst_4 [0] : vector<64x32xf32> to vector<32xf32>
    %12 = vector.shape_cast %11 : vector<32xf32> to vector<1x32xf32>
    %cst_5 = arith.constant 6.400000e+01 : f32
    %13 = vector.broadcast %cst_5 : f32 to vector<1x32xf32>
    %14 = arith.divf %12, %13 : vector<1x32xf32>
    %cst_6 = arith.constant 9.99999974E-6 : f32
    %15 = vector.broadcast %cst_6 : f32 to vector<1x32xf32>
    %16 = arith.addf %14, %15 : vector<1x32xf32>
    %17 = math.rsqrt %16 : vector<1x32xf32>
    %18 = vector.broadcast %17 : vector<1x32xf32> to vector<64x32xf32>
    %19 = arith.mulf %9, %18 : vector<64x32xf32>
    %c0_7 = arith.constant 0 : index
    %c0_8 = arith.constant 0 : index
    %20 = vector.load %arg2[%c0_7, %c0_8] : memref<1x32xf32, #tpu.memory_space<vmem>>, vector<1x32xf32>
    %21 = vector.broadcast %20 : vector<1x32xf32> to vector<64x32xf32>
    %22 = arith.mulf %19, %21 : vector<64x32xf32>
    %c0_9 = arith.constant 0 : index
    %c0_10 = arith.constant 0 : index
    %23 = vector.load %arg3[%c0_9, %c0_10] : memref<1x32xf32, #tpu.memory_space<vmem>>, vector<1x32xf32>
    %24 = vector.broadcast %23 : vector<1x32xf32> to vector<64x32xf32>
    %25 = arith.addf %22, %24 : vector<64x32xf32>
    %26 = arith.truncf %25 : vector<64x32xf32> to vector<64x32xbf16>
    %c0_11 = arith.constant 0 : index
    %c0_12 = arith.constant 0 : index
    %27 = vector.load %arg6[%c0_11, %c0_12] : memref<32x32xf32, #tpu.memory_space<vmem>>, vector<32x32xf32>
    %28 = arith.truncf %27 : vector<32x32xf32> to vector<32x32xbf16>
    %cst_13 = arith.constant dense<0.000000e+00> : vector<64x32xf32>
    %29 = tpu.matmul %26, %28, %cst_13 {dimension_numbers = #tpu.dot_dimension_numbers<[1], [0], [0], [1], [0, 0, 1, 1], [], []>} : vector<64x32xbf16>, vector<32x32xbf16>, vector<64x32xf32> -> vector<64x32xf32>
    %30 = arith.truncf %29 : vector<64x32xf32> to vector<64x32xbf16>
    %c0_14 = arith.constant 0 : index
    %c0_15 = arith.constant 0 : index
    %31 = vector.load %arg7[%c0_14, %c0_15] : memref<32x4xf32, #tpu.memory_space<vmem>>, vector<32x4xf32>
    %cst_16 = arith.constant dense<0.000000e+00> : vector<64x4xf32>
    %32 = tpu.matmul %29, %31, %cst_16 {dimension_numbers = #tpu.dot_dimension_numbers<[1], [0], [0], [1], [0, 0, 1, 1], [], []>} : vector<64x32xf32>, vector<32x4xf32>, vector<64x4xf32> -> vector<64x4xf32>
    %c0_17 = arith.constant 0 : index
    %c0_18 = arith.constant 0 : index
    %33 = vector.load %arg8[%c0_17, %c0_18] : memref<32x4xf32, #tpu.memory_space<vmem>>, vector<32x4xf32>
    %cst_19 = arith.constant dense<0.000000e+00> : vector<64x4xf32>
    %34 = tpu.matmul %29, %33, %cst_19 {dimension_numbers = #tpu.dot_dimension_numbers<[1], [0], [0], [1], [0, 0, 1, 1], [], []>} : vector<64x32xf32>, vector<32x4xf32>, vector<64x4xf32> -> vector<64x4xf32>
    %35 = tpu.transpose %32, [1, 0] : vector<64x4xf32> -> vector<4x64xf32>
    %36 = vector.extract_strided_slice %34 {offsets = [0, 0], sizes = [64, 1], strides = [1, 1]} : vector<64x4xf32> to vector<64x1xf32>
    %37 = vector.extract_strided_slice %35 {offsets = [0, 0], sizes = [1, 64], strides = [1, 1]} : vector<4x64xf32> to vector<1x64xf32>
    %38 = vector.broadcast %36 : vector<64x1xf32> to vector<64x64xf32>
    %39 = vector.broadcast %37 : vector<1x64xf32> to vector<64x64xf32>
    %40 = arith.addf %38, %39 : vector<64x64xf32>
    %cst_20 = arith.constant 2.000000e-01 : f32
    %41 = vector.broadcast %cst_20 : f32 to vector<64x64xf32>
    %42 = arith.mulf %41, %40 : vector<64x64xf32>
    %43 = arith.maximumf %40, %42 : vector<64x64xf32>
    %cst_21 = arith.constant -1.000000e+30 : f32
    %44 = vector.broadcast %cst_21 : f32 to vector<64x64xf32>
    %45 = arith.select %2, %43, %44 : vector<64x64xi1>, vector<64x64xf32>
    %cst_22 = arith.constant dense<0xFF800000> : vector<64xf32>
    %46 = vector.multi_reduction <maximumf>, %45, %cst_22 [1] : vector<64x64xf32> to vector<64xf32>
    %47 = vector.shape_cast %46 : vector<64xf32> to vector<64x1xf32>
    %48 = vector.broadcast %47 : vector<64x1xf32> to vector<64x64xf32>
    %49 = arith.subf %45, %48 : vector<64x64xf32>
    %50 = math.exp %49 : vector<64x64xf32>
    %cst_23 = arith.constant dense<0.000000e+00> : vector<64xf32>
    %51 = vector.multi_reduction <add>, %50, %cst_23 [1] : vector<64x64xf32> to vector<64xf32>
    %52 = vector.shape_cast %51 : vector<64xf32> to vector<64x1xf32>
    %53 = tpu.reciprocal %52 : vector<64x1xf32> -> vector<64x1xf32>
    %54 = vector.broadcast %53 : vector<64x1xf32> to vector<64x64xf32>
    %55 = arith.mulf %50, %54 : vector<64x64xf32>
    %56 = vector.extract_strided_slice %30 {offsets = [0, 0], sizes = [64, 8], strides = [1, 1]} : vector<64x32xbf16> to vector<64x8xbf16>
    %57 = arith.truncf %55 : vector<64x64xf32> to vector<64x64xbf16>
    %cst_24 = arith.constant dense<0.000000e+00> : vector<64x8xf32>
    %58 = tpu.matmul %57, %56, %cst_24 {dimension_numbers = #tpu.dot_dimension_numbers<[1], [0], [0], [1], [0, 0, 1, 1], [], []>} : vector<64x64xbf16>, vector<64x8xbf16>, vector<64x8xf32> -> vector<64x8xf32>
    %59 = vector.extract_strided_slice %34 {offsets = [0, 1], sizes = [64, 1], strides = [1, 1]} : vector<64x4xf32> to vector<64x1xf32>
    %60 = vector.extract_strided_slice %35 {offsets = [1, 0], sizes = [1, 64], strides = [1, 1]} : vector<4x64xf32> to vector<1x64xf32>
    %61 = vector.broadcast %59 : vector<64x1xf32> to vector<64x64xf32>
    %62 = vector.broadcast %60 : vector<1x64xf32> to vector<64x64xf32>
    %63 = arith.addf %61, %62 : vector<64x64xf32>
    %cst_25 = arith.constant 2.000000e-01 : f32
    %64 = vector.broadcast %cst_25 : f32 to vector<64x64xf32>
    %65 = arith.mulf %64, %63 : vector<64x64xf32>
    %66 = arith.maximumf %63, %65 : vector<64x64xf32>
    %cst_26 = arith.constant -1.000000e+30 : f32
    %67 = vector.broadcast %cst_26 : f32 to vector<64x64xf32>
    %68 = arith.select %2, %66, %67 : vector<64x64xi1>, vector<64x64xf32>
    %cst_27 = arith.constant dense<0xFF800000> : vector<64xf32>
    %69 = vector.multi_reduction <maximumf>, %68, %cst_27 [1] : vector<64x64xf32> to vector<64xf32>
    %70 = vector.shape_cast %69 : vector<64xf32> to vector<64x1xf32>
    %71 = vector.broadcast %70 : vector<64x1xf32> to vector<64x64xf32>
    %72 = arith.subf %68, %71 : vector<64x64xf32>
    %73 = math.exp %72 : vector<64x64xf32>
    %cst_28 = arith.constant dense<0.000000e+00> : vector<64xf32>
    %74 = vector.multi_reduction <add>, %73, %cst_28 [1] : vector<64x64xf32> to vector<64xf32>
    %75 = vector.shape_cast %74 : vector<64xf32> to vector<64x1xf32>
    %76 = tpu.reciprocal %75 : vector<64x1xf32> -> vector<64x1xf32>
    %77 = vector.broadcast %76 : vector<64x1xf32> to vector<64x64xf32>
    %78 = arith.mulf %73, %77 : vector<64x64xf32>
    %79 = vector.extract_strided_slice %30 {offsets = [0, 8], sizes = [64, 8], strides = [1, 1]} : vector<64x32xbf16> to vector<64x8xbf16>
    %80 = arith.truncf %78 : vector<64x64xf32> to vector<64x64xbf16>
    %cst_29 = arith.constant dense<0.000000e+00> : vector<64x8xf32>
    %81 = tpu.matmul %80, %79, %cst_29 {dimension_numbers = #tpu.dot_dimension_numbers<[1], [0], [0], [1], [0, 0, 1, 1], [], []>} : vector<64x64xbf16>, vector<64x8xbf16>, vector<64x8xf32> -> vector<64x8xf32>
    %82 = vector.extract_strided_slice %34 {offsets = [0, 2], sizes = [64, 1], strides = [1, 1]} : vector<64x4xf32> to vector<64x1xf32>
    %83 = vector.extract_strided_slice %35 {offsets = [2, 0], sizes = [1, 64], strides = [1, 1]} : vector<4x64xf32> to vector<1x64xf32>
    %84 = vector.broadcast %82 : vector<64x1xf32> to vector<64x64xf32>
    %85 = vector.broadcast %83 : vector<1x64xf32> to vector<64x64xf32>
    %86 = arith.addf %84, %85 : vector<64x64xf32>
    %cst_30 = arith.constant 2.000000e-01 : f32
    %87 = vector.broadcast %cst_30 : f32 to vector<64x64xf32>
    %88 = arith.mulf %87, %86 : vector<64x64xf32>
    %89 = arith.maximumf %86, %88 : vector<64x64xf32>
    %cst_31 = arith.constant -1.000000e+30 : f32
    %90 = vector.broadcast %cst_31 : f32 to vector<64x64xf32>
    %91 = arith.select %2, %89, %90 : vector<64x64xi1>, vector<64x64xf32>
    %cst_32 = arith.constant dense<0xFF800000> : vector<64xf32>
    %92 = vector.multi_reduction <maximumf>, %91, %cst_32 [1] : vector<64x64xf32> to vector<64xf32>
    %93 = vector.shape_cast %92 : vector<64xf32> to vector<64x1xf32>
    %94 = vector.broadcast %93 : vector<64x1xf32> to vector<64x64xf32>
    %95 = arith.subf %91, %94 : vector<64x64xf32>
    %96 = math.exp %95 : vector<64x64xf32>
    %cst_33 = arith.constant dense<0.000000e+00> : vector<64xf32>
    %97 = vector.multi_reduction <add>, %96, %cst_33 [1] : vector<64x64xf32> to vector<64xf32>
    %98 = vector.shape_cast %97 : vector<64xf32> to vector<64x1xf32>
    %99 = tpu.reciprocal %98 : vector<64x1xf32> -> vector<64x1xf32>
    %100 = vector.broadcast %99 : vector<64x1xf32> to vector<64x64xf32>
    %101 = arith.mulf %96, %100 : vector<64x64xf32>
    %102 = vector.extract_strided_slice %30 {offsets = [0, 16], sizes = [64, 8], strides = [1, 1]} : vector<64x32xbf16> to vector<64x8xbf16>
    %103 = arith.truncf %101 : vector<64x64xf32> to vector<64x64xbf16>
    %cst_34 = arith.constant dense<0.000000e+00> : vector<64x8xf32>
    %104 = tpu.matmul %103, %102, %cst_34 {dimension_numbers = #tpu.dot_dimension_numbers<[1], [0], [0], [1], [0, 0, 1, 1], [], []>} : vector<64x64xbf16>, vector<64x8xbf16>, vector<64x8xf32> -> vector<64x8xf32>
    %105 = vector.extract_strided_slice %34 {offsets = [0, 3], sizes = [64, 1], strides = [1, 1]} : vector<64x4xf32> to vector<64x1xf32>
    %106 = vector.extract_strided_slice %35 {offsets = [3, 0], sizes = [1, 64], strides = [1, 1]} : vector<4x64xf32> to vector<1x64xf32>
    %107 = vector.broadcast %105 : vector<64x1xf32> to vector<64x64xf32>
    %108 = vector.broadcast %106 : vector<1x64xf32> to vector<64x64xf32>
    %109 = arith.addf %107, %108 : vector<64x64xf32>
    %cst_35 = arith.constant 2.000000e-01 : f32
    %110 = vector.broadcast %cst_35 : f32 to vector<64x64xf32>
    %111 = arith.mulf %110, %109 : vector<64x64xf32>
    %112 = arith.maximumf %109, %111 : vector<64x64xf32>
    %cst_36 = arith.constant -1.000000e+30 : f32
    %113 = vector.broadcast %cst_36 : f32 to vector<64x64xf32>
    %114 = arith.select %2, %112, %113 : vector<64x64xi1>, vector<64x64xf32>
    %cst_37 = arith.constant dense<0xFF800000> : vector<64xf32>
    %115 = vector.multi_reduction <maximumf>, %114, %cst_37 [1] : vector<64x64xf32> to vector<64xf32>
    %116 = vector.shape_cast %115 : vector<64xf32> to vector<64x1xf32>
    %117 = vector.broadcast %116 : vector<64x1xf32> to vector<64x64xf32>
    %118 = arith.subf %114, %117 : vector<64x64xf32>
    %119 = math.exp %118 : vector<64x64xf32>
    %cst_38 = arith.constant dense<0.000000e+00> : vector<64xf32>
    %120 = vector.multi_reduction <add>, %119, %cst_38 [1] : vector<64x64xf32> to vector<64xf32>
    %121 = vector.shape_cast %120 : vector<64xf32> to vector<64x1xf32>
    %122 = tpu.reciprocal %121 : vector<64x1xf32> -> vector<64x1xf32>
    %123 = vector.broadcast %122 : vector<64x1xf32> to vector<64x64xf32>
    %124 = arith.mulf %119, %123 : vector<64x64xf32>
    %125 = vector.extract_strided_slice %30 {offsets = [0, 24], sizes = [64, 8], strides = [1, 1]} : vector<64x32xbf16> to vector<64x8xbf16>
    %126 = arith.truncf %124 : vector<64x64xf32> to vector<64x64xbf16>
    %cst_39 = arith.constant dense<0.000000e+00> : vector<64x8xf32>
    %127 = tpu.matmul %126, %125, %cst_39 {dimension_numbers = #tpu.dot_dimension_numbers<[1], [0], [0], [1], [0, 0, 1, 1], [], []>} : vector<64x64xbf16>, vector<64x8xbf16>, vector<64x8xf32> -> vector<64x8xf32>
    %128 = tpu.concatenate %58, %81, %104, %127 in 1 : vector<64x8xf32>, vector<64x8xf32>, vector<64x8xf32>, vector<64x8xf32> -> vector<64x32xf32>
    %c0_40 = arith.constant 0 : index
    %c0_41 = arith.constant 0 : index
    %129 = vector.load %arg9[%c0_40, %c0_41] : memref<1x32xf32, #tpu.memory_space<vmem>>, vector<1x32xf32>
    %130 = vector.broadcast %129 : vector<1x32xf32> to vector<64x32xf32>
    %131 = arith.addf %128, %130 : vector<64x32xf32>
    %c0_42 = arith.constant 0 : index
    %c0_43 = arith.constant 0 : index
    %132 = vector.load %arg4[%c0_42, %c0_43] : memref<32x32xf32, #tpu.memory_space<vmem>>, vector<32x32xf32>
    %133 = arith.truncf %132 : vector<32x32xf32> to vector<32x32xbf16>
    %cst_44 = arith.constant dense<0.000000e+00> : vector<64x32xf32>
    %134 = tpu.matmul %26, %133, %cst_44 {dimension_numbers = #tpu.dot_dimension_numbers<[1], [0], [0], [1], [0, 0, 1, 1], [], []>} : vector<64x32xbf16>, vector<32x32xbf16>, vector<64x32xf32> -> vector<64x32xf32>
    %c0_45 = arith.constant 0 : index
    %c0_46 = arith.constant 0 : index
    %135 = vector.load %arg5[%c0_45, %c0_46] : memref<1x32xf32, #tpu.memory_space<vmem>>, vector<1x32xf32>
    %136 = vector.broadcast %135 : vector<1x32xf32> to vector<64x32xf32>
    %137 = arith.addf %134, %136 : vector<64x32xf32>
    %138 = arith.addf %137, %131 : vector<64x32xf32>
    %cst_47 = arith.constant 0.000000e+00 : f32
    %139 = vector.broadcast %cst_47 : f32 to vector<64x32xf32>
    %140 = arith.maximumf %138, %139 : vector<64x32xf32>
    %cst_48 = arith.constant dense<0.000000e+00> : vector<32xf32>
    %141 = vector.multi_reduction <add>, %140, %cst_48 [0] : vector<64x32xf32> to vector<32xf32>
    %142 = vector.shape_cast %141 : vector<32xf32> to vector<1x32xf32>
    %cst_49 = arith.constant 6.400000e+01 : f32
    %143 = vector.broadcast %cst_49 : f32 to vector<1x32xf32>
    %144 = arith.divf %142, %143 : vector<1x32xf32>
    %145 = vector.broadcast %144 : vector<1x32xf32> to vector<64x32xf32>
    %146 = arith.subf %140, %145 : vector<64x32xf32>
    %147 = arith.mulf %146, %146 : vector<64x32xf32>
    %cst_50 = arith.constant dense<0.000000e+00> : vector<32xf32>
    %148 = vector.multi_reduction <add>, %147, %cst_50 [0] : vector<64x32xf32> to vector<32xf32>
    %149 = vector.shape_cast %148 : vector<32xf32> to vector<1x32xf32>
    %cst_51 = arith.constant 6.400000e+01 : f32
    %150 = vector.broadcast %cst_51 : f32 to vector<1x32xf32>
    %151 = arith.divf %149, %150 : vector<1x32xf32>
    %cst_52 = arith.constant 9.99999974E-6 : f32
    %152 = vector.broadcast %cst_52 : f32 to vector<1x32xf32>
    %153 = arith.addf %151, %152 : vector<1x32xf32>
    %154 = math.rsqrt %153 : vector<1x32xf32>
    %155 = vector.broadcast %154 : vector<1x32xf32> to vector<64x32xf32>
    %156 = arith.mulf %146, %155 : vector<64x32xf32>
    %c0_53 = arith.constant 0 : index
    %c0_54 = arith.constant 0 : index
    %157 = vector.load %arg10[%c0_53, %c0_54] : memref<1x32xf32, #tpu.memory_space<vmem>>, vector<1x32xf32>
    %158 = vector.broadcast %157 : vector<1x32xf32> to vector<64x32xf32>
    %159 = arith.mulf %156, %158 : vector<64x32xf32>
    %c0_55 = arith.constant 0 : index
    %c0_56 = arith.constant 0 : index
    %160 = vector.load %arg11[%c0_55, %c0_56] : memref<1x32xf32, #tpu.memory_space<vmem>>, vector<1x32xf32>
    %161 = vector.broadcast %160 : vector<1x32xf32> to vector<64x32xf32>
    %162 = arith.addf %159, %161 : vector<64x32xf32>
    %163 = arith.truncf %162 : vector<64x32xf32> to vector<64x32xbf16>
    %c0_57 = arith.constant 0 : index
    %c0_58 = arith.constant 0 : index
    %164 = vector.load %arg14[%c0_57, %c0_58] : memref<32x32xf32, #tpu.memory_space<vmem>>, vector<32x32xf32>
    %165 = arith.truncf %164 : vector<32x32xf32> to vector<32x32xbf16>
    %cst_59 = arith.constant dense<0.000000e+00> : vector<64x32xf32>
    %166 = tpu.matmul %163, %165, %cst_59 {dimension_numbers = #tpu.dot_dimension_numbers<[1], [0], [0], [1], [0, 0, 1, 1], [], []>} : vector<64x32xbf16>, vector<32x32xbf16>, vector<64x32xf32> -> vector<64x32xf32>
    %167 = arith.truncf %166 : vector<64x32xf32> to vector<64x32xbf16>
    %c0_60 = arith.constant 0 : index
    %c0_61 = arith.constant 0 : index
    %168 = vector.load %arg15[%c0_60, %c0_61] : memref<32x4xf32, #tpu.memory_space<vmem>>, vector<32x4xf32>
    %cst_62 = arith.constant dense<0.000000e+00> : vector<64x4xf32>
    %169 = tpu.matmul %166, %168, %cst_62 {dimension_numbers = #tpu.dot_dimension_numbers<[1], [0], [0], [1], [0, 0, 1, 1], [], []>} : vector<64x32xf32>, vector<32x4xf32>, vector<64x4xf32> -> vector<64x4xf32>
    %c0_63 = arith.constant 0 : index
    %c0_64 = arith.constant 0 : index
    %170 = vector.load %arg16[%c0_63, %c0_64] : memref<32x4xf32, #tpu.memory_space<vmem>>, vector<32x4xf32>
    %cst_65 = arith.constant dense<0.000000e+00> : vector<64x4xf32>
    %171 = tpu.matmul %166, %170, %cst_65 {dimension_numbers = #tpu.dot_dimension_numbers<[1], [0], [0], [1], [0, 0, 1, 1], [], []>} : vector<64x32xf32>, vector<32x4xf32>, vector<64x4xf32> -> vector<64x4xf32>
    %172 = tpu.transpose %169, [1, 0] : vector<64x4xf32> -> vector<4x64xf32>
    %173 = vector.extract_strided_slice %171 {offsets = [0, 0], sizes = [64, 1], strides = [1, 1]} : vector<64x4xf32> to vector<64x1xf32>
    %174 = vector.extract_strided_slice %172 {offsets = [0, 0], sizes = [1, 64], strides = [1, 1]} : vector<4x64xf32> to vector<1x64xf32>
    %175 = vector.broadcast %173 : vector<64x1xf32> to vector<64x64xf32>
    %176 = vector.broadcast %174 : vector<1x64xf32> to vector<64x64xf32>
    %177 = arith.addf %175, %176 : vector<64x64xf32>
    %cst_66 = arith.constant 2.000000e-01 : f32
    %178 = vector.broadcast %cst_66 : f32 to vector<64x64xf32>
    %179 = arith.mulf %178, %177 : vector<64x64xf32>
    %180 = arith.maximumf %177, %179 : vector<64x64xf32>
    %cst_67 = arith.constant -1.000000e+30 : f32
    %181 = vector.broadcast %cst_67 : f32 to vector<64x64xf32>
    %182 = arith.select %2, %180, %181 : vector<64x64xi1>, vector<64x64xf32>
    %cst_68 = arith.constant dense<0xFF800000> : vector<64xf32>
    %183 = vector.multi_reduction <maximumf>, %182, %cst_68 [1] : vector<64x64xf32> to vector<64xf32>
    %184 = vector.shape_cast %183 : vector<64xf32> to vector<64x1xf32>
    %185 = vector.broadcast %184 : vector<64x1xf32> to vector<64x64xf32>
    %186 = arith.subf %182, %185 : vector<64x64xf32>
    %187 = math.exp %186 : vector<64x64xf32>
    %cst_69 = arith.constant dense<0.000000e+00> : vector<64xf32>
    %188 = vector.multi_reduction <add>, %187, %cst_69 [1] : vector<64x64xf32> to vector<64xf32>
    %189 = vector.shape_cast %188 : vector<64xf32> to vector<64x1xf32>
    %190 = tpu.reciprocal %189 : vector<64x1xf32> -> vector<64x1xf32>
    %191 = vector.broadcast %190 : vector<64x1xf32> to vector<64x64xf32>
    %192 = arith.mulf %187, %191 : vector<64x64xf32>
    %193 = vector.extract_strided_slice %167 {offsets = [0, 0], sizes = [64, 8], strides = [1, 1]} : vector<64x32xbf16> to vector<64x8xbf16>
    %194 = arith.truncf %192 : vector<64x64xf32> to vector<64x64xbf16>
    %cst_70 = arith.constant dense<0.000000e+00> : vector<64x8xf32>
    %195 = tpu.matmul %194, %193, %cst_70 {dimension_numbers = #tpu.dot_dimension_numbers<[1], [0], [0], [1], [0, 0, 1, 1], [], []>} : vector<64x64xbf16>, vector<64x8xbf16>, vector<64x8xf32> -> vector<64x8xf32>
    %196 = vector.extract_strided_slice %171 {offsets = [0, 1], sizes = [64, 1], strides = [1, 1]} : vector<64x4xf32> to vector<64x1xf32>
    %197 = vector.extract_strided_slice %172 {offsets = [1, 0], sizes = [1, 64], strides = [1, 1]} : vector<4x64xf32> to vector<1x64xf32>
    %198 = vector.broadcast %196 : vector<64x1xf32> to vector<64x64xf32>
    %199 = vector.broadcast %197 : vector<1x64xf32> to vector<64x64xf32>
    %200 = arith.addf %198, %199 : vector<64x64xf32>
    %cst_71 = arith.constant 2.000000e-01 : f32
    %201 = vector.broadcast %cst_71 : f32 to vector<64x64xf32>
    %202 = arith.mulf %201, %200 : vector<64x64xf32>
    %203 = arith.maximumf %200, %202 : vector<64x64xf32>
    %cst_72 = arith.constant -1.000000e+30 : f32
    %204 = vector.broadcast %cst_72 : f32 to vector<64x64xf32>
    %205 = arith.select %2, %203, %204 : vector<64x64xi1>, vector<64x64xf32>
    %cst_73 = arith.constant dense<0xFF800000> : vector<64xf32>
    %206 = vector.multi_reduction <maximumf>, %205, %cst_73 [1] : vector<64x64xf32> to vector<64xf32>
    %207 = vector.shape_cast %206 : vector<64xf32> to vector<64x1xf32>
    %208 = vector.broadcast %207 : vector<64x1xf32> to vector<64x64xf32>
    %209 = arith.subf %205, %208 : vector<64x64xf32>
    %210 = math.exp %209 : vector<64x64xf32>
    %cst_74 = arith.constant dense<0.000000e+00> : vector<64xf32>
    %211 = vector.multi_reduction <add>, %210, %cst_74 [1] : vector<64x64xf32> to vector<64xf32>
    %212 = vector.shape_cast %211 : vector<64xf32> to vector<64x1xf32>
    %213 = tpu.reciprocal %212 : vector<64x1xf32> -> vector<64x1xf32>
    %214 = vector.broadcast %213 : vector<64x1xf32> to vector<64x64xf32>
    %215 = arith.mulf %210, %214 : vector<64x64xf32>
    %216 = vector.extract_strided_slice %167 {offsets = [0, 8], sizes = [64, 8], strides = [1, 1]} : vector<64x32xbf16> to vector<64x8xbf16>
    %217 = arith.truncf %215 : vector<64x64xf32> to vector<64x64xbf16>
    %cst_75 = arith.constant dense<0.000000e+00> : vector<64x8xf32>
    %218 = tpu.matmul %217, %216, %cst_75 {dimension_numbers = #tpu.dot_dimension_numbers<[1], [0], [0], [1], [0, 0, 1, 1], [], []>} : vector<64x64xbf16>, vector<64x8xbf16>, vector<64x8xf32> -> vector<64x8xf32>
    %219 = vector.extract_strided_slice %171 {offsets = [0, 2], sizes = [64, 1], strides = [1, 1]} : vector<64x4xf32> to vector<64x1xf32>
    %220 = vector.extract_strided_slice %172 {offsets = [2, 0], sizes = [1, 64], strides = [1, 1]} : vector<4x64xf32> to vector<1x64xf32>
    %221 = vector.broadcast %219 : vector<64x1xf32> to vector<64x64xf32>
    %222 = vector.broadcast %220 : vector<1x64xf32> to vector<64x64xf32>
    %223 = arith.addf %221, %222 : vector<64x64xf32>
    %cst_76 = arith.constant 2.000000e-01 : f32
    %224 = vector.broadcast %cst_76 : f32 to vector<64x64xf32>
    %225 = arith.mulf %224, %223 : vector<64x64xf32>
    %226 = arith.maximumf %223, %225 : vector<64x64xf32>
    %cst_77 = arith.constant -1.000000e+30 : f32
    %227 = vector.broadcast %cst_77 : f32 to vector<64x64xf32>
    %228 = arith.select %2, %226, %227 : vector<64x64xi1>, vector<64x64xf32>
    %cst_78 = arith.constant dense<0xFF800000> : vector<64xf32>
    %229 = vector.multi_reduction <maximumf>, %228, %cst_78 [1] : vector<64x64xf32> to vector<64xf32>
    %230 = vector.shape_cast %229 : vector<64xf32> to vector<64x1xf32>
    %231 = vector.broadcast %230 : vector<64x1xf32> to vector<64x64xf32>
    %232 = arith.subf %228, %231 : vector<64x64xf32>
    %233 = math.exp %232 : vector<64x64xf32>
    %cst_79 = arith.constant dense<0.000000e+00> : vector<64xf32>
    %234 = vector.multi_reduction <add>, %233, %cst_79 [1] : vector<64x64xf32> to vector<64xf32>
    %235 = vector.shape_cast %234 : vector<64xf32> to vector<64x1xf32>
    %236 = tpu.reciprocal %235 : vector<64x1xf32> -> vector<64x1xf32>
    %237 = vector.broadcast %236 : vector<64x1xf32> to vector<64x64xf32>
    %238 = arith.mulf %233, %237 : vector<64x64xf32>
    %239 = vector.extract_strided_slice %167 {offsets = [0, 16], sizes = [64, 8], strides = [1, 1]} : vector<64x32xbf16> to vector<64x8xbf16>
    %240 = arith.truncf %238 : vector<64x64xf32> to vector<64x64xbf16>
    %cst_80 = arith.constant dense<0.000000e+00> : vector<64x8xf32>
    %241 = tpu.matmul %240, %239, %cst_80 {dimension_numbers = #tpu.dot_dimension_numbers<[1], [0], [0], [1], [0, 0, 1, 1], [], []>} : vector<64x64xbf16>, vector<64x8xbf16>, vector<64x8xf32> -> vector<64x8xf32>
    %242 = vector.extract_strided_slice %171 {offsets = [0, 3], sizes = [64, 1], strides = [1, 1]} : vector<64x4xf32> to vector<64x1xf32>
    %243 = vector.extract_strided_slice %172 {offsets = [3, 0], sizes = [1, 64], strides = [1, 1]} : vector<4x64xf32> to vector<1x64xf32>
    %244 = vector.broadcast %242 : vector<64x1xf32> to vector<64x64xf32>
    %245 = vector.broadcast %243 : vector<1x64xf32> to vector<64x64xf32>
    %246 = arith.addf %244, %245 : vector<64x64xf32>
    %cst_81 = arith.constant 2.000000e-01 : f32
    %247 = vector.broadcast %cst_81 : f32 to vector<64x64xf32>
    %248 = arith.mulf %247, %246 : vector<64x64xf32>
    %249 = arith.maximumf %246, %248 : vector<64x64xf32>
    %cst_82 = arith.constant -1.000000e+30 : f32
    %250 = vector.broadcast %cst_82 : f32 to vector<64x64xf32>
    %251 = arith.select %2, %249, %250 : vector<64x64xi1>, vector<64x64xf32>
    %cst_83 = arith.constant dense<0xFF800000> : vector<64xf32>
    %252 = vector.multi_reduction <maximumf>, %251, %cst_83 [1] : vector<64x64xf32> to vector<64xf32>
    %253 = vector.shape_cast %252 : vector<64xf32> to vector<64x1xf32>
    %254 = vector.broadcast %253 : vector<64x1xf32> to vector<64x64xf32>
    %255 = arith.subf %251, %254 : vector<64x64xf32>
    %256 = math.exp %255 : vector<64x64xf32>
    %cst_84 = arith.constant dense<0.000000e+00> : vector<64xf32>
    %257 = vector.multi_reduction <add>, %256, %cst_84 [1] : vector<64x64xf32> to vector<64xf32>
    %258 = vector.shape_cast %257 : vector<64xf32> to vector<64x1xf32>
    %259 = tpu.reciprocal %258 : vector<64x1xf32> -> vector<64x1xf32>
    %260 = vector.broadcast %259 : vector<64x1xf32> to vector<64x64xf32>
    %261 = arith.mulf %256, %260 : vector<64x64xf32>
    %262 = vector.extract_strided_slice %167 {offsets = [0, 24], sizes = [64, 8], strides = [1, 1]} : vector<64x32xbf16> to vector<64x8xbf16>
    %263 = arith.truncf %261 : vector<64x64xf32> to vector<64x64xbf16>
    %cst_85 = arith.constant dense<0.000000e+00> : vector<64x8xf32>
    %264 = tpu.matmul %263, %262, %cst_85 {dimension_numbers = #tpu.dot_dimension_numbers<[1], [0], [0], [1], [0, 0, 1, 1], [], []>} : vector<64x64xbf16>, vector<64x8xbf16>, vector<64x8xf32> -> vector<64x8xf32>
    %265 = tpu.concatenate %195, %218, %241, %264 in 1 : vector<64x8xf32>, vector<64x8xf32>, vector<64x8xf32>, vector<64x8xf32> -> vector<64x32xf32>
    %c0_86 = arith.constant 0 : index
    %c0_87 = arith.constant 0 : index
    %266 = vector.load %arg17[%c0_86, %c0_87] : memref<1x32xf32, #tpu.memory_space<vmem>>, vector<1x32xf32>
    %267 = vector.broadcast %266 : vector<1x32xf32> to vector<64x32xf32>
    %268 = arith.addf %265, %267 : vector<64x32xf32>
    %c0_88 = arith.constant 0 : index
    %c0_89 = arith.constant 0 : index
    %269 = vector.load %arg12[%c0_88, %c0_89] : memref<32x32xf32, #tpu.memory_space<vmem>>, vector<32x32xf32>
    %270 = arith.truncf %269 : vector<32x32xf32> to vector<32x32xbf16>
    %cst_90 = arith.constant dense<0.000000e+00> : vector<64x32xf32>
    %271 = tpu.matmul %163, %270, %cst_90 {dimension_numbers = #tpu.dot_dimension_numbers<[1], [0], [0], [1], [0, 0, 1, 1], [], []>} : vector<64x32xbf16>, vector<32x32xbf16>, vector<64x32xf32> -> vector<64x32xf32>
    %c0_91 = arith.constant 0 : index
    %c0_92 = arith.constant 0 : index
    %272 = vector.load %arg13[%c0_91, %c0_92] : memref<1x32xf32, #tpu.memory_space<vmem>>, vector<1x32xf32>
    %273 = vector.broadcast %272 : vector<1x32xf32> to vector<64x32xf32>
    %274 = arith.addf %271, %273 : vector<64x32xf32>
    %275 = arith.addf %274, %268 : vector<64x32xf32>
    %cst_93 = arith.constant 0.000000e+00 : f32
    %276 = vector.broadcast %cst_93 : f32 to vector<64x32xf32>
    %277 = arith.maximumf %275, %276 : vector<64x32xf32>
    %cst_94 = arith.constant dense<0.000000e+00> : vector<32xf32>
    %278 = vector.multi_reduction <add>, %277, %cst_94 [0] : vector<64x32xf32> to vector<32xf32>
    %279 = vector.shape_cast %278 : vector<32xf32> to vector<1x32xf32>
    %cst_95 = arith.constant 6.400000e+01 : f32
    %280 = vector.broadcast %cst_95 : f32 to vector<1x32xf32>
    %281 = arith.divf %279, %280 : vector<1x32xf32>
    %282 = vector.broadcast %281 : vector<1x32xf32> to vector<64x32xf32>
    %283 = arith.subf %277, %282 : vector<64x32xf32>
    %284 = arith.mulf %283, %283 : vector<64x32xf32>
    %cst_96 = arith.constant dense<0.000000e+00> : vector<32xf32>
    %285 = vector.multi_reduction <add>, %284, %cst_96 [0] : vector<64x32xf32> to vector<32xf32>
    %286 = vector.shape_cast %285 : vector<32xf32> to vector<1x32xf32>
    %cst_97 = arith.constant 6.400000e+01 : f32
    %287 = vector.broadcast %cst_97 : f32 to vector<1x32xf32>
    %288 = arith.divf %286, %287 : vector<1x32xf32>
    %cst_98 = arith.constant 9.99999974E-6 : f32
    %289 = vector.broadcast %cst_98 : f32 to vector<1x32xf32>
    %290 = arith.addf %288, %289 : vector<1x32xf32>
    %291 = math.rsqrt %290 : vector<1x32xf32>
    %292 = vector.broadcast %291 : vector<1x32xf32> to vector<64x32xf32>
    %293 = arith.mulf %283, %292 : vector<64x32xf32>
    %c0_99 = arith.constant 0 : index
    %c0_100 = arith.constant 0 : index
    %294 = vector.load %arg18[%c0_99, %c0_100] : memref<1x32xf32, #tpu.memory_space<vmem>>, vector<1x32xf32>
    %295 = vector.broadcast %294 : vector<1x32xf32> to vector<64x32xf32>
    %296 = arith.mulf %293, %295 : vector<64x32xf32>
    %c0_101 = arith.constant 0 : index
    %c0_102 = arith.constant 0 : index
    %297 = vector.load %arg19[%c0_101, %c0_102] : memref<1x32xf32, #tpu.memory_space<vmem>>, vector<1x32xf32>
    %298 = vector.broadcast %297 : vector<1x32xf32> to vector<64x32xf32>
    %299 = arith.addf %296, %298 : vector<64x32xf32>
    %300 = arith.truncf %299 : vector<64x32xf32> to vector<64x32xbf16>
    %c0_103 = arith.constant 0 : index
    %c0_104 = arith.constant 0 : index
    %301 = vector.load %arg22[%c0_103, %c0_104] : memref<32x2xf32, #tpu.memory_space<vmem>>, vector<32x2xf32>
    %302 = arith.truncf %301 : vector<32x2xf32> to vector<32x2xbf16>
    %cst_105 = arith.constant dense<0.000000e+00> : vector<64x2xf32>
    %303 = tpu.matmul %300, %302, %cst_105 {dimension_numbers = #tpu.dot_dimension_numbers<[1], [0], [0], [1], [0, 0, 1, 1], [], []>} : vector<64x32xbf16>, vector<32x2xbf16>, vector<64x2xf32> -> vector<64x2xf32>
    %304 = arith.truncf %303 : vector<64x2xf32> to vector<64x2xbf16>
    %c0_106 = arith.constant 0 : index
    %c0_107 = arith.constant 0 : index
    %305 = vector.load %arg23[%c0_106, %c0_107] : memref<2x1xf32, #tpu.memory_space<vmem>>, vector<2x1xf32>
    %cst_108 = arith.constant dense<0.000000e+00> : vector<64x1xf32>
    %306 = tpu.matmul %303, %305, %cst_108 {dimension_numbers = #tpu.dot_dimension_numbers<[1], [0], [0], [1], [0, 0, 1, 1], [], []>} : vector<64x2xf32>, vector<2x1xf32>, vector<64x1xf32> -> vector<64x1xf32>
    %c0_109 = arith.constant 0 : index
    %c0_110 = arith.constant 0 : index
    %307 = vector.load %arg24[%c0_109, %c0_110] : memref<2x1xf32, #tpu.memory_space<vmem>>, vector<2x1xf32>
    %cst_111 = arith.constant dense<0.000000e+00> : vector<64x1xf32>
    %308 = tpu.matmul %303, %307, %cst_111 {dimension_numbers = #tpu.dot_dimension_numbers<[1], [0], [0], [1], [0, 0, 1, 1], [], []>} : vector<64x2xf32>, vector<2x1xf32>, vector<64x1xf32> -> vector<64x1xf32>
    %309 = tpu.transpose %306, [1, 0] : vector<64x1xf32> -> vector<1x64xf32>
    %310 = vector.broadcast %308 : vector<64x1xf32> to vector<64x64xf32>
    %311 = vector.broadcast %309 : vector<1x64xf32> to vector<64x64xf32>
    %312 = arith.addf %310, %311 : vector<64x64xf32>
    %cst_112 = arith.constant 2.000000e-01 : f32
    %313 = vector.broadcast %cst_112 : f32 to vector<64x64xf32>
    %314 = arith.mulf %313, %312 : vector<64x64xf32>
    %315 = arith.maximumf %312, %314 : vector<64x64xf32>
    %cst_113 = arith.constant -1.000000e+30 : f32
    %316 = vector.broadcast %cst_113 : f32 to vector<64x64xf32>
    %317 = arith.select %2, %315, %316 : vector<64x64xi1>, vector<64x64xf32>
    %cst_114 = arith.constant dense<0xFF800000> : vector<64xf32>
    %318 = vector.multi_reduction <maximumf>, %317, %cst_114 [1] : vector<64x64xf32> to vector<64xf32>
    %319 = vector.shape_cast %318 : vector<64xf32> to vector<64x1xf32>
    %320 = vector.broadcast %319 : vector<64x1xf32> to vector<64x64xf32>
    %321 = arith.subf %317, %320 : vector<64x64xf32>
    %322 = math.exp %321 : vector<64x64xf32>
    %cst_115 = arith.constant dense<0.000000e+00> : vector<64xf32>
    %323 = vector.multi_reduction <add>, %322, %cst_115 [1] : vector<64x64xf32> to vector<64xf32>
    %324 = vector.shape_cast %323 : vector<64xf32> to vector<64x1xf32>
    %325 = tpu.reciprocal %324 : vector<64x1xf32> -> vector<64x1xf32>
    %326 = vector.broadcast %325 : vector<64x1xf32> to vector<64x64xf32>
    %327 = arith.mulf %322, %326 : vector<64x64xf32>
    %328 = arith.truncf %327 : vector<64x64xf32> to vector<64x64xbf16>
    %cst_116 = arith.constant dense<0.000000e+00> : vector<64x2xf32>
    %329 = tpu.matmul %328, %304, %cst_116 {dimension_numbers = #tpu.dot_dimension_numbers<[1], [0], [0], [1], [0, 0, 1, 1], [], []>} : vector<64x64xbf16>, vector<64x2xbf16>, vector<64x2xf32> -> vector<64x2xf32>
    %c0_117 = arith.constant 0 : index
    %c0_118 = arith.constant 0 : index
    %330 = vector.load %arg25[%c0_117, %c0_118] : memref<1x2xf32, #tpu.memory_space<vmem>>, vector<1x2xf32>
    %331 = vector.broadcast %330 : vector<1x2xf32> to vector<64x2xf32>
    %332 = arith.addf %329, %331 : vector<64x2xf32>
    %c0_119 = arith.constant 0 : index
    %c0_120 = arith.constant 0 : index
    %333 = vector.load %arg20[%c0_119, %c0_120] : memref<32x2xf32, #tpu.memory_space<vmem>>, vector<32x2xf32>
    %334 = arith.truncf %333 : vector<32x2xf32> to vector<32x2xbf16>
    %cst_121 = arith.constant dense<0.000000e+00> : vector<64x2xf32>
    %335 = tpu.matmul %300, %334, %cst_121 {dimension_numbers = #tpu.dot_dimension_numbers<[1], [0], [0], [1], [0, 0, 1, 1], [], []>} : vector<64x32xbf16>, vector<32x2xbf16>, vector<64x2xf32> -> vector<64x2xf32>
    %c0_122 = arith.constant 0 : index
    %c0_123 = arith.constant 0 : index
    %336 = vector.load %arg21[%c0_122, %c0_123] : memref<1x2xf32, #tpu.memory_space<vmem>>, vector<1x2xf32>
    %337 = vector.broadcast %336 : vector<1x2xf32> to vector<64x2xf32>
    %338 = arith.addf %335, %337 : vector<64x2xf32>
    %339 = arith.addf %338, %332 : vector<64x2xf32>
    %cst_124 = arith.constant 0.000000e+00 : f32
    %340 = vector.broadcast %cst_124 : f32 to vector<64x2xf32>
    %341 = arith.maximumf %339, %340 : vector<64x2xf32>
    %c0_125 = arith.constant 0 : index
    %c0_126 = arith.constant 0 : index
    %342 = vector.load %arg26[%c0_125, %c0_126] : memref<64x2xf32, #tpu.memory_space<vmem>>, vector<64x2xf32>
    tpu.vector_store %arg26[%c0_125, %c0_126], %341 {strides = array<i32>} : memref<64x2xf32, #tpu.memory_space<vmem>>, vector<64x2xf32>,
    return
  }
}

</mosaic_0001>

<llo_original>
// kernel: net_forward.1
$region0: #{net_forward.1}
  #allocation0 [shape = 'u32[]', space=smem, size = 0x4, offset = 0x4, fixed_abs, tag = 'smem constant byte address 0x4 - core index']
  #allocation1 [shape = 'u32[72,128]{1,0:T(1,128)}', space=vmem, size = 0x9000, scoped, tag = 'internal scratch']
  %s0 = inlined_call_operand.vmem [shape: f32[64,32], index: 0, kind: input, shape index: {}]
  %s1 = inlined_call_operand.vmem [shape: s8[64,64], index: 1, kind: input, shape index: {}]
  %s2 = inlined_call_operand.vmem [shape: f32[1,32], index: 2, kind: input, shape index: {}]
  %s3 = inlined_call_operand.vmem [shape: f32[1,32], index: 3, kind: input, shape index: {}]
  %s4 = inlined_call_operand.vmem [shape: f32[32,32], index: 4, kind: input, shape index: {}]
  %s5 = inlined_call_operand.vmem [shape: f32[1,32], index: 5, kind: input, shape index: {}]
  %s6 = inlined_call_operand.vmem [shape: f32[32,32], index: 6, kind: input, shape index: {}]
  %s7 = inlined_call_operand.vmem [shape: f32[32,4], index: 7, kind: input, shape index: {}]
  %s8 = inlined_call_operand.vmem [shape: f32[32,4], index: 8, kind: input, shape index: {}]
  %s9 = inlined_call_operand.vmem [shape: f32[1,32], index: 9, kind: input, shape index: {}]
  %s10 = inlined_call_operand.vmem [shape: f32[1,32], index: 10, kind: input, shape index: {}]
  %s11 = inlined_call_operand.vmem [shape: f32[1,32], index: 11, kind: input, shape index: {}]
  %s12 = inlined_call_operand.vmem [shape: f32[32,32], index: 12, kind: input, shape index: {}]
  %s13 = inlined_call_operand.vmem [shape: f32[1,32], index: 13, kind: input, shape index: {}]
  %s14 = inlined_call_operand.vmem [shape: f32[32,32], index: 14, kind: input, shape index: {}]
  %s15 = inlined_call_operand.vmem [shape: f32[32,4], index: 15, kind: input, shape index: {}]
  %s16 = inlined_call_operand.vmem [shape: f32[32,4], index: 16, kind: input, shape index: {}]
  %s17 = inlined_call_operand.vmem [shape: f32[1,32], index: 17, kind: input, shape index: {}]
  %s18 = inlined_call_operand.vmem [shape: f32[1,32], index: 18, kind: input, shape index: {}]
  %s19 = inlined_call_operand.vmem [shape: f32[1,32], index: 19, kind: input, shape index: {}]
  %s20 = inlined_call_operand.vmem [shape: f32[32,2], index: 20, kind: input, shape index: {}]
  %s21 = inlined_call_operand.vmem [shape: f32[1,2], index: 21, kind: input, shape index: {}]
  %s22 = inlined_call_operand.vmem [shape: f32[32,2], index: 22, kind: input, shape index: {}]
  %s23 = inlined_call_operand.vmem [shape: f32[2,1], index: 23, kind: input, shape index: {}]
  %s24 = inlined_call_operand.vmem [shape: f32[2,1], index: 24, kind: input, shape index: {}]
  %s25 = inlined_call_operand.vmem [shape: f32[1,2], index: 25, kind: input, shape index: {}]
  %s26 = inlined_call_operand.vmem [shape: f32[64,2], index: 26, kind: output, shape index: {}]
  %s27 = sld [smem:[#allocation0]]
  $region114: #{net_forward.1} parent=0
    _
  %s29 = ssub.s32 1, %s27
  %s30 = scalar_select 0, %s29, %s27
  // Predicated region
  $region2: #{net_forward.1} parent=0 // pred_check
    _
  $region3: #{net_forward.1} parent=0 // pred_check_branch
    %32 = sbr.rel (0) target = $region5
  $region4: #{net_forward.1} parent=0 // pred_region
    _
  $region5: #{net_forward.1} parent=0 // pred_fallthru
    _
  // Predicated region
  $region6: #{net_forward.1} parent=0 // pred_check
    _
  $region7: #{net_forward.1} parent=0 // pred_check_branch
    %34 = sbr.rel (0) target = $region9
  $region8: #{net_forward.1} parent=0 // pred_region
    _
  $region9: #{net_forward.1} parent=0 // pred_fallthru
    _
  // Predicated region
  $region10: #{net_forward.1} parent=0 // pred_check
    _
  $region11: #{net_forward.1} parent=0 // pred_check_branch
    %36 = sbr.rel (0) target = $region13
  $region12: #{net_forward.1} parent=0 // pred_region
    _
  $region13: #{net_forward.1} parent=0 // pred_fallthru
    _
  // Predicated region
  $region14: #{net_forward.1} parent=0 // pred_check
    _
  $region15: #{net_forward.1} parent=0 // pred_check_branch
    %38 = sbr.rel (0) target = $region17
  $region16: #{net_forward.1} parent=0 // pred_region
    _
  $region17: #{net_forward.1} parent=0 // pred_fallthru
    _
  // Predicated region
  $region18: #{net_forward.1} parent=0 // pred_check
    _
  $region19: #{net_forward.1} parent=0 // pred_check_branch
    %40 = sbr.rel (0) target = $region21
  $region20: #{net_forward.1} parent=0 // pred_region
    _
  $region21: #{net_forward.1} parent=0 // pred_fallthru
    _
  // Predicated region
  $region22: #{net_forward.1} parent=0 // pred_check
    _
  $region23: #{net_forward.1} parent=0 // pred_check_branch
    %42 = sbr.rel (0) target = $region25
  $region24: #{net_forward.1} parent=0 // pred_region
    _
  $region25: #{net_forward.1} parent=0 // pred_fallthru
    _
  // Predicated region
  $region26: #{net_forward.1} parent=0 // pred_check
    _
  $region27: #{net_forward.1} parent=0 // pred_check_branch
    %44 = sbr.rel (0) target = $region29
  $region28: #{net_forward.1} parent=0 // pred_region
    _
  $region29: #{net_forward.1} parent=0 // pred_fallthru
    _
  // Predicated region
  $region30: #{net_forward.1} parent=0 // pred_check
    _
  $region31: #{net_forward.1} parent=0 // pred_check_branch
    %46 = sbr.rel (0) target = $region33
  $region32: #{net_forward.1} parent=0 // pred_region
    _
  $region33: #{net_forward.1} parent=0 // pred_fallthru
    _
  // Predicated region
  $region34: #{net_forward.1} parent=0 // pred_check
    _
  $region35: #{net_forward.1} parent=0 // pred_check_branch
    %48 = sbr.rel (0) target = $region37
  $region36: #{net_forward.1} parent=0 // pred_region
    _
  $region37: #{net_forward.1} parent=0 // pred_fallthru
    _
  // Predicated region
  $region38: #{net_forward.1} parent=0 // pred_check
    _
  $region39: #{net_forward.1} parent=0 // pred_check_branch
    %50 = sbr.rel (0) target = $region41
  $region40: #{net_forward.1} parent=0 // pred_region
    _
  $region41: #{net_forward.1} parent=0 // pred_fallthru
    _
  // Predicated region
  $region42: #{net_forward.1} parent=0 // pred_check
    _
  $region43: #{net_forward.1} parent=0 // pred_check_branch
    %52 = sbr.rel (0) target = $region45
  $region44: #{net_forward.1} parent=0 // pred_region
    _
  $region45: #{net_forward.1} parent=0 // pred_fallthru
    _
  // Predicated region
  $region46: #{net_forward.1} parent=0 // pred_check
    _
  $region47: #{net_forward.1} parent=0 // pred_check_branch
    %54 = sbr.rel (0) target = $region49
  $region48: #{net_forward.1} parent=0 // pred_region
    _
  $region49: #{net_forward.1} parent=0 // pred_fallthru
    _
  // Predicated region
  $region50: #{net_forward.1} parent=0 // pred_check
    _
  $region51: #{net_forward.1} parent=0 // pred_check_branch
    %56 = sbr.rel (0) target = $region53
  $region52: #{net_forward.1} parent=0 // pred_region
    _
  $region53: #{net_forward.1} parent=0 // pred_fallthru
    _
  // Predicated region
  $region54: #{net_forward.1} parent=0 // pred_check
    _
  $region55: #{net_forward.1} parent=0 // pred_check_branch
    %58 = sbr.rel (0) target = $region57
  $region56: #{net_forward.1} parent=0 // pred_region
    _
  $region57: #{net_forward.1} parent=0 // pred_fallthru
    _
  // Predicated region
  $region58: #{net_forward.1} parent=0 // pred_check
    _
  $region59: #{net_forward.1} parent=0 // pred_check_branch
    %60 = sbr.rel (0) target = $region61
  $region60: #{net_forward.1} parent=0 // pred_region
    _
  $region61: #{net_forward.1} parent=0 // pred_fallthru
    _
  // Predicated region
  $region62: #{net_forward.1} parent=0 // pred_check
    _
  $region63: #{net_forward.1} parent=0 // pred_check_branch
    %62 = sbr.rel (0) target = $region65
  $region64: #{net_forward.1} parent=0 // pred_region
    _
  $region65: #{net_forward.1} parent=0 // pred_fallthru
    _
  // Predicated region
  $region66: #{net_forward.1} parent=0 // pred_check
    _
  $region67: #{net_forward.1} parent=0 // pred_check_branch
    %64 = sbr.rel (0) target = $region69
  $region68: #{net_forward.1} parent=0 // pred_region
    _
  $region69: #{net_forward.1} parent=0 // pred_fallthru
    _
  // Predicated region
  $region70: #{net_forward.1} parent=0 // pred_check
    _
  $region71: #{net_forward.1} parent=0 // pred_check_branch
    %66 = sbr.rel (0) target = $region73
  $region72: #{net_forward.1} parent=0 // pred_region
    _
  $region73: #{net_forward.1} parent=0 // pred_fallthru
    _
  // Predicated region
  $region74: #{net_forward.1} parent=0 // pred_check
    _
  $region75: #{net_forward.1} parent=0 // pred_check_branch
    %68 = sbr.rel (0) target = $region77
  $region76: #{net_forward.1} parent=0 // pred_region
    _
  $region77: #{net_forward.1} parent=0 // pred_fallthru
    _
  // Predicated region
  $region78: #{net_forward.1} parent=0 // pred_check
    _
  $region79: #{net_forward.1} parent=0 // pred_check_branch
    %70 = sbr.rel (0) target = $region81
  $region80: #{net_forward.1} parent=0 // pred_region
    _
  $region81: #{net_forward.1} parent=0 // pred_fallthru
    _
  // Predicated region
  $region82: #{net_forward.1} parent=0 // pred_check
    _
  $region83: #{net_forward.1} parent=0 // pred_check_branch
    %72 = sbr.rel (0) target = $region85
  $region84: #{net_forward.1} parent=0 // pred_region
    _
  $region85: #{net_forward.1} parent=0 // pred_fallthru
    _
  // Predicated region
  $region86: #{net_forward.1} parent=0 // pred_check
    _
  $region87: #{net_forward.1} parent=0 // pred_check_branch
    %74 = sbr.rel (0) target = $region89
  $region88: #{net_forward.1} parent=0 // pred_region
    _
  $region89: #{net_forward.1} parent=0 // pred_fallthru
    _
  // Predicated region
  $region90: #{net_forward.1} parent=0 // pred_check
    _
  $region91: #{net_forward.1} parent=0 // pred_check_branch
    %76 = sbr.rel (0) target = $region93
  $region92: #{net_forward.1} parent=0 // pred_region
    _
  $region93: #{net_forward.1} parent=0 // pred_fallthru
    _
  // Predicated region
  $region94: #{net_forward.1} parent=0 // pred_check
    _
  $region95: #{net_forward.1} parent=0 // pred_check_branch
    %78 = sbr.rel (0) target = $region97
  $region96: #{net_forward.1} parent=0 // pred_region
    _
  $region97: #{net_forward.1} parent=0 // pred_fallthru
    _
  // Predicated region
  $region98: #{net_forward.1} parent=0 // pred_check
    _
  $region99: #{net_forward.1} parent=0 // pred_check_branch
    %80 = sbr.rel (0) target = $region101
  $region100: #{net_forward.1} parent=0 // pred_region
    _
  $region101: #{net_forward.1} parent=0 // pred_fallthru
    _
  // Predicated region
  $region102: #{net_forward.1} parent=0 // pred_check
    _
  $region103: #{net_forward.1} parent=0 // pred_check_branch
    %82 = sbr.rel (0) target = $region105
  $region104: #{net_forward.1} parent=0 // pred_region
    _
  $region105: #{net_forward.1} parent=0 // pred_fallthru
    _
  %v86 = vld [vmem:[%s1] sm:$0xff]
  %v87 = vld [vmem:[%s1 + $0x8] sm:$0xff]
  %vm88 = vnez %v86
  %vm89 = vnez %v87
  %v90 = vld [vmem:[%s0] sm:$0xff]
  %v91 = vld [vmem:[%s0 + $0x8] sm:$0xff]
  %v92 = vld [vmem:[%s0 + $0x10] sm:$0xff]
  %v93 = vld [vmem:[%s0 + $0x18] sm:$0xff]
  %v94 = vld [vmem:[%s0 + $0x20] sm:$0xff]
  %v95 = vld [vmem:[%s0 + $0x28] sm:$0xff]
  %v96 = vld [vmem:[%s0 + $0x30] sm:$0xff]
  %v97 = vld [vmem:[%s0 + $0x38] sm:$0xff]
  %vm98 = vcmask 261120
  %v99 = vsel %vm98, %v90, 0.0
  %v100 = vsel %vm98, %v91, 0.0
  %v101 = vadd.f32 %v99, %v100
  %v102 = vsel %vm98, %v92, 0.0
  %v103 = vadd.f32 %v101, %v102
  %v104 = vsel %vm98, %v93, 0.0
  %v105 = vadd.f32 %v103, %v104
  %v106 = vsel %vm98, %v94, 0.0
  %v107 = vadd.f32 %v105, %v106
  %v108 = vsel %vm98, %v95, 0.0
  %v109 = vadd.f32 %v107, %v108
  %v110 = vsel %vm98, %v96, 0.0
  %v111 = vadd.f32 %v109, %v110
  %v112 = vsel %vm98, %v97, 0.0
  %v113 = vadd.f32 %v111, %v112
  %v114 = vrot.slane %v113, 4
  %v115 = vadd.f32 %v113, %v114
  %v116 = vrot.slane %v115, 2
  %v117 = vadd.f32 %v115, %v116
  %v118 = vrot.slane %v117, 1
  %v119 = vadd.f32 %v117, %v118
  %v120 = vrcp.pop 64.0
  %v121 = vmul.f32 64.0, %v120
  %v122 = vsub.f32 1.0, %v121
  %v123 = vmul.f32 %v120, %v122
  %v124 = vadd.f32 %v120, %v123
  %vm125 = vweird.f32 %v120
  %v126 = vsel %vm125, %v120, %v124
  %v127 = vmul.f32 %v119, %v126
  %v128 = vsub.f32 %v90, %v127
  %v129 = vsub.f32 %v91, %v127
  %v130 = vsub.f32 %v92, %v127
  %v131 = vsub.f32 %v93, %v127
  %v132 = vsub.f32 %v94, %v127
  %v133 = vsub.f32 %v95, %v127
  %v134 = vsub.f32 %v96, %v127
  %v135 = vsub.f32 %v97, %v127
  %v136 = vmul.f32 %v128, %v128
  %v137 = vmul.f32 %v129, %v129
  %v138 = vmul.f32 %v130, %v130
  %v139 = vmul.f32 %v131, %v131
  %v140 = vmul.f32 %v132, %v132
  %v141 = vmul.f32 %v133, %v133
  %v142 = vmul.f32 %v134, %v134
  %v143 = vmul.f32 %v135, %v135
  %v144 = vsel %vm98, %v136, 0.0
  %v145 = vsel %vm98, %v137, 0.0
  %v146 = vadd.f32 %v144, %v145
  %v147 = vsel %vm98, %v138, 0.0
  %v148 = vadd.f32 %v146, %v147
  %v149 = vsel %vm98, %v139, 0.0
  %v150 = vadd.f32 %v148, %v149
  %v151 = vsel %vm98, %v140, 0.0
  %v152 = vadd.f32 %v150, %v151
  %v153 = vsel %vm98, %v141, 0.0
  %v154 = vadd.f32 %v152, %v153
  %v155 = vsel %vm98, %v142, 0.0
  %v156 = vadd.f32 %v154, %v155
  %v157 = vsel %vm98, %v143, 0.0
  %v158 = vadd.f32 %v156, %v157
  %v159 = vrot.slane %v158, 4
  %v160 = vadd.f32 %v158, %v159
  %v161 = vrot.slane %v160, 2
  %v162 = vadd.f32 %v160, %v161
  %v163 = vrot.slane %v162, 1
  %v164 = vadd.f32 %v162, %v163
  %v165 = vmul.f32 %v164, %v126
  %v166 = vadd.f32 %v165, 1e-05
  %v167 = vrsqrt.pop %v166
  %v168 = vmul.f32 %v167, %v166
  %v169 = vmul.f32 %v168, %v167
  %v170 = vmul.f32 0.5, %v169
  %v171 = vsub.f32 1.5, %v170
  %v172 = vmul.f32 %v167, %v171
  %vm173 = vweird.f32 %v166
  %vm174 = vweird.f32 %v167
  %vm175 = vmor %vm173, %vm174
  %v176 = vsel %vm175, %v167, %v172
  %v177 = vmul.f32 %v128, %v176
  %v178 = vmul.f32 %v129, %v176
  %v179 = vmul.f32 %v130, %v176
  %v180 = vmul.f32 %v131, %v176
  %v181 = vmul.f32 %v132, %v176
  %v182 = vmul.f32 %v133, %v176
  %v183 = vmul.f32 %v134, %v176
  %v184 = vmul.f32 %v135, %v176
  %v185 = vld [vmem:[%s2] sm:$0x1]
  %v187 = vperm.slane %v185, 0
  %v189 = vmul.f32 %v177, %v187
  %v190 = vmul.f32 %v178, %v187
  %v191 = vmul.f32 %v179, %v187
  %v192 = vmul.f32 %v180, %v187
  %v193 = vmul.f32 %v181, %v187
  %v194 = vmul.f32 %v182, %v187
  %v195 = vmul.f32 %v183, %v187
  %v196 = vmul.f32 %v184, %v187
  %v197 = vld [vmem:[%s3] sm:$0x1]
  %v199 = vperm.slane %v197, 0
  %v201 = vadd.f32 %v189, %v199
  %v202 = vadd.f32 %v190, %v199
  %v203 = vadd.f32 %v191, %v199
  %v204 = vadd.f32 %v192, %v199
  %v205 = vadd.f32 %v193, %v199
  %v206 = vadd.f32 %v194, %v199
  %v207 = vadd.f32 %v195, %v199
  %v208 = vadd.f32 %v196, %v199
  %v209 = vpack.c.bf16 %v202, %v201
  %v210 = vpack.c.bf16 %v204, %v203
  %v211 = vpack.c.bf16 %v206, %v205
  %v212 = vpack.c.bf16 %v208, %v207
  %v213 = vld [vmem:[%s6] sm:$0xff]
  %v214 = vld [vmem:[%s6 + $0x8] sm:$0xff]
  %v215 = vld [vmem:[%s6 + $0x10] sm:$0xff]
  %v216 = vld [vmem:[%s6 + $0x18] sm:$0xff]
  %v217 = vpack.c.bf16 %v214, %v213
  %v218 = vpack.c.bf16 %v216, %v215
  %v220 = vsel %vm98, %v209, 0
  %v223 = vsel %vm98, %v210, 0
  %v226 = vsel %vm98, %v211, 0
  %v229 = vsel %vm98, %v212, 0
  %231 = vmatpush.bf16.msra.mxu0 0
  %232 = vmatpush.bf16.msra.mxu0 0
  %233 = vmatpush.bf16.msra.mxu0 0
  %234 = vmatpush.bf16.msra.mxu0 0
  %235 = vmatpush.bf16.msra.mxu0 0
  %236 = vmatpush.bf16.msra.mxu0 0
  %237 = vmatpush.bf16.msra.mxu0 %v218
  %238 = vmatpush.bf16.msra.mxu0 %v217
  %239 = vmatmul.bf16.gmra.mxu0 %v220
  %v240 = vpop.f32.mrf.mxu0
  %v241 = vadd.f32 0.0, %v240
  %v242 = vpop.f32.mrf.mxu0
  %v243 = vadd.f32 0.0, %v242
  %244 = vmatmul.bf16.gmra.mxu0 %v223
  %v245 = vpop.f32.mrf.mxu0
  %v246 = vadd.f32 0.0, %v245
  %v247 = vpop.f32.mrf.mxu0
  %v248 = vadd.f32 0.0, %v247
  %249 = vmatmul.bf16.gmra.mxu0 %v226
  %v250 = vpop.f32.mrf.mxu0
  %v251 = vadd.f32 0.0, %v250
  %v252 = vpop.f32.mrf.mxu0
  %v253 = vadd.f32 0.0, %v252
  %254 = vmatmul.bf16.gmra.mxu0 %v229
  %v255 = vpop.f32.mrf.mxu0
  %v256 = vadd.f32 0.0, %v255
  %v257 = vpop.f32.mrf.mxu0
  %v258 = vadd.f32 0.0, %v257
  %259 = vdwg.mxu0
  %v260 = vpack.c.bf16 %v241, %v241
  %v261 = vpack.c.bf16 %v243, %v243
  %v262 = vpack.c.bf16 %v246, %v246
  %v263 = vpack.c.bf16 %v248, %v248
  %v264 = vpack.c.bf16 %v251, %v251
  %v265 = vpack.c.bf16 %v253, %v253
  %v266 = vpack.c.bf16 %v256, %v256
  %v267 = vpack.c.bf16 %v258, %v258
  %v268 = vld [vmem:[%s7] sm:$0xff]
  %v269 = vld [vmem:[%s7 + $0x8] sm:$0xff]
  %v270 = vld [vmem:[%s7 + $0x10] sm:$0xff]
  %v271 = vld [vmem:[%s7 + $0x18] sm:$0xff]
  %v273 = vsel %vm98, %v241, 0
  %v276 = vsel %vm98, %v243, 0
  %v279 = vsel %vm98, %v246, 0
  %v282 = vsel %vm98, %v248, 0
  %v285 = vsel %vm98, %v251, 0
  %v288 = vsel %vm98, %v253, 0
  %v291 = vsel %vm98, %v256, 0
  %v294 = vsel %vm98, %v258, 0
  %296 = vmatpush.msra.mxu0 0.0
  %297 = vmatpush.msra.mxu0 0.0
  %298 = vmatpush.msra.mxu0 0.0
  %299 = vmatpush.msra.mxu0 0.0
  %300 = vmatpush.msra.mxu0 0.0
  %301 = vmatpush.msra.mxu0 0.0
  %302 = vmatpush.msra.mxu0 0.0
  %303 = vmatpush.msra.mxu0 0.0
  %304 = vmatpush.msra.mxu0 0.0
  %305 = vmatpush.msra.mxu0 0.0
  %306 = vmatpush.msra.mxu0 0.0
  %307 = vmatpush.msra.mxu0 0.0
  %308 = vmatpush.msra.mxu0 %v271
  %309 = vmatpush.msra.mxu0 %v270
  %310 = vmatpush.msra.mxu0 %v269
  %311 = vmatpush.msra.mxu0 %v268
  %312 = vmatmul.f32.gmra.mxu0 %v273
  %v313 = vpop.f32.mrf.mxu0
  %v314 = vadd.f32 0.0, %v313
  %315 = vmatmul.f32.gmra.mxu0 %v276
  %v316 = vpop.f32.mrf.mxu0
  %v317 = vadd.f32 0.0, %v316
  %318 = vmatmul.f32.gmra.mxu0 %v279
  %v319 = vpop.f32.mrf.mxu0
  %v320 = vadd.f32 0.0, %v319
  %321 = vmatmul.f32.gmra.mxu0 %v282
  %v322 = vpop.f32.mrf.mxu0
  %v323 = vadd.f32 0.0, %v322
  %324 = vmatmul.f32.gmra.mxu0 %v285
  %v325 = vpop.f32.mrf.mxu0
  %v326 = vadd.f32 0.0, %v325
  %327 = vmatmul.f32.gmra.mxu0 %v288
  %v328 = vpop.f32.mrf.mxu0
  %v329 = vadd.f32 0.0, %v328
  %330 = vmatmul.f32.gmra.mxu0 %v291
  %v331 = vpop.f32.mrf.mxu0
  %v332 = vadd.f32 0.0, %v331
  %333 = vmatmul.f32.gmra.mxu0 %v294
  %v334 = vpop.f32.mrf.mxu0
  %v335 = vadd.f32 0.0, %v334
  %336 = vdwg.mxu0
  %v337 = vld [vmem:[%s8] sm:$0xff]
  %v338 = vld [vmem:[%s8 + $0x8] sm:$0xff]
  %v339 = vld [vmem:[%s8 + $0x10] sm:$0xff]
  %v340 = vld [vmem:[%s8 + $0x18] sm:$0xff]
  %341 = vmatpush.msra.mxu0 0.0
  %342 = vmatpush.msra.mxu0 0.0
  %343 = vmatpush.msra.mxu0 0.0
  %344 = vmatpush.msra.mxu0 0.0
  %345 = vmatpush.msra.mxu0 0.0
  %346 = vmatpush.msra.mxu0 0.0
  %347 = vmatpush.msra.mxu0 0.0
  %348 = vmatpush.msra.mxu0 0.0
  %349 = vmatpush.msra.mxu0 0.0
  %350 = vmatpush.msra.mxu0 0.0
  %351 = vmatpush.msra.mxu0 0.0
  %352 = vmatpush.msra.mxu0 0.0
  %353 = vmatpush.msra.mxu0 %v340
  %354 = vmatpush.msra.mxu0 %v339
  %355 = vmatpush.msra.mxu0 %v338
  %356 = vmatpush.msra.mxu0 %v337
  %357 = vmatmul.f32.gmra.mxu0 %v273
  %v358 = vpop.f32.mrf.mxu0
  %v359 = vadd.f32 0.0, %v358
  %360 = vmatmul.f32.gmra.mxu0 %v276
  %v361 = vpop.f32.mrf.mxu0
  %v362 = vadd.f32 0.0, %v361
  %363 = vmatmul.f32.gmra.mxu0 %v279
  %v364 = vpop.f32.mrf.mxu0
  %v365 = vadd.f32 0.0, %v364
  %366 = vmatmul.f32.gmra.mxu0 %v282
  %v367 = vpop.f32.mrf.mxu0
  %v368 = vadd.f32 0.0, %v367
  %369 = vmatmul.f32.gmra.mxu0 %v285
  %v370 = vpop.f32.mrf.mxu0
  %v371 = vadd.f32 0.0, %v370
  %372 = vmatmul.f32.gmra.mxu0 %v288
  %v373 = vpop.f32.mrf.mxu0
  %v374 = vadd.f32 0.0, %v373
  %375 = vmatmul.f32.gmra.mxu0 %v291
  %v376 = vpop.f32.mrf.mxu0
  %v377 = vadd.f32 0.0, %v376
  %378 = vmatmul.f32.gmra.mxu0 %v294
  %v379 = vpop.f32.mrf.mxu0
  %v380 = vadd.f32 0.0, %v379
  %381 = vdwg.mxu0
  %382 = vxpose.xlu0.b32.start [1/16] %v314, 128
  %383 = vxpose.xlu0.b32.cont [2/16] %v317, 128
  %384 = vxpose.xlu0.b32.cont [3/16] %v320, 128
  %385 = vxpose.xlu0.b32.cont [4/16] %v323, 128
  %386 = vxpose.xlu0.b32.cont [5/16] %v326, 128
  %387 = vxpose.xlu0.b32.cont [6/16] %v329, 128
  %388 = vxpose.xlu0.b32.cont [7/16] %v332, 128
  %389 = vxpose.xlu0.b32.cont [8/16] %v335, 128
  %390 = vxpose.xlu0.b32.cont [9/16] 0.0, 128
  %391 = vxpose.xlu0.b32.cont [10/16] 0.0, 128
  %392 = vxpose.xlu0.b32.cont [11/16] 0.0, 128
  %393 = vxpose.xlu0.b32.cont [12/16] 0.0, 128
  %394 = vxpose.xlu0.b32.cont [13/16] 0.0, 128
  %395 = vxpose.xlu0.b32.cont [14/16] 0.0, 128
  %396 = vxpose.xlu0.b32.cont [15/16] 0.0, 128
  %397 = vxpose.xlu0.b32.end [16/16] 0.0, 128
  %v398 = vpop.trf.xlu0
  %v399 = vpop.trf.xlu0
  %v400 = vpop.trf.xlu0
  %v401 = vpop.trf.xlu0
  %v402 = vpop.trf.xlu0
  %v403 = vpop.trf.xlu0
  %v404 = vpop.trf.xlu0
  %v405 = vpop.trf.xlu0
  %v406 = vpop.trf.xlu0
  %v407 = vpop.trf.xlu0
  %v408 = vpop.trf.xlu0
  %v409 = vpop.trf.xlu0
  %v410 = vpop.trf.xlu0
  %v411 = vpop.trf.xlu0
  %v412 = vpop.trf.xlu0
  %v413 = vpop.trf.xlu0
  %415 = vset.pattern.permute.xlu0 0
  %416 = vperm.xlu0 %415, %v359
  %v417 = vpop.permute.xlu0 %416
  %420 = vset.pattern.permute.xlu0 0
  %421 = vperm.xlu0 %420, %v362
  %v422 = vpop.permute.xlu0 %421
  %425 = vset.pattern.permute.xlu0 0
  %426 = vperm.xlu0 %425, %v365
  %v427 = vpop.permute.xlu0 %426
  %430 = vset.pattern.permute.xlu0 0
  %431 = vperm.xlu0 %430, %v368
  %v432 = vpop.permute.xlu0 %431
  %435 = vset.pattern.permute.xlu0 0
  %436 = vperm.xlu0 %435, %v371
  %v437 = vpop.permute.xlu0 %436
  %440 = vset.pattern.permute.xlu0 0
  %441 = vperm.xlu0 %440, %v374
  %v442 = vpop.permute.xlu0 %441
  %445 = vset.pattern.permute.xlu0 0
  %446 = vperm.xlu0 %445, %v377
  %v447 = vpop.permute.xlu0 %446
  %450 = vset.pattern.permute.xlu0 0
  %451 = vperm.xlu0 %450, %v380
  %v452 = vpop.permute.xlu0 %451
  %v454 = vperm.slane %v398, 0
  %v455 = vadd.f32 %v417, %v454
  %v456 = vadd.f32 %v422, %v454
  %v457 = vadd.f32 %v427, %v454
  %v458 = vadd.f32 %v432, %v454
  %v459 = vadd.f32 %v437, %v454
  %v460 = vadd.f32 %v442, %v454
  %v461 = vadd.f32 %v447, %v454
  %v462 = vadd.f32 %v452, %v454
  %v463 = vmul.f32 %v455, 0.2
  %v464 = vmul.f32 %v456, 0.2
  %v465 = vmul.f32 %v457, 0.2
  %v466 = vmul.f32 %v458, 0.2
  %v467 = vmul.f32 %v459, 0.2
  %v468 = vmul.f32 %v460, 0.2
  %v469 = vmul.f32 %v461, 0.2
  %v470 = vmul.f32 %v462, 0.2
  %v471 = vmax.f32 %v455, %v463
  %v472 = vmax.f32 %v456, %v464
  %v473 = vmax.f32 %v457, %v465
  %v474 = vmax.f32 %v458, %v466
  %v475 = vmax.f32 %v459, %v467
  %v476 = vmax.f32 %v460, %v468
  %v477 = vmax.f32 %v461, %v469
  %v478 = vmax.f32 %v462, %v470
  %v479 = vsel %vm88, 16843009, 0
  %v480 = vsel %vm89, 16843009, 0
  %v481 = vunpack.c.0.s8 %v479
  %v482 = vunpack.c.1.s8 %v479
  %v483 = vunpack.c.2.s8 %v479
  %v484 = vunpack.c.3.s8 %v479
  %v485 = vunpack.c.0.s8 %v480
  %v486 = vunpack.c.1.s8 %v480
  %v487 = vunpack.c.2.s8 %v480
  %v488 = vunpack.c.3.s8 %v480
  %v489 = vpack.c.b16 %v481, %v481
  %v490 = vpack.c.b8 %v489, %v489
  %v491 = vpack.c.b16 %v482, %v482
  %v492 = vpack.c.b8 %v491, %v491
  %v493 = vpack.c.b16 %v483, %v483
  %v494 = vpack.c.b8 %v493, %v493
  %v495 = vpack.c.b16 %v484, %v484
  %v496 = vpack.c.b8 %v495, %v495
  %v497 = vpack.c.b16 %v485, %v485
  %v498 = vpack.c.b8 %v497, %v497
  %v499 = vpack.c.b16 %v486, %v486
  %v500 = vpack.c.b8 %v499, %v499
  %v501 = vpack.c.b16 %v487, %v487
  %v502 = vpack.c.b8 %v501, %v501
  %v503 = vpack.c.b16 %v488, %v488
  %v504 = vpack.c.b8 %v503, %v503
  %vm505 = vnez %v490
  %vm506 = vnez %v492
  %vm507 = vnez %v494
  %vm508 = vnez %v496
  %vm509 = vnez %v498
  %vm510 = vnez %v500
  %vm511 = vnez %v502
  %vm512 = vnez %v504
  %v513 = vsel %vm505, 16843009, 0
  %v514 = vsel %vm506, 16843009, 0
  %v515 = vsel %vm507, 16843009, 0
  %v516 = vsel %vm508, 16843009, 0
  %v517 = vsel %vm509, 16843009, 0
  %v518 = vsel %vm510, 16843009, 0
  %v519 = vsel %vm511, 16843009, 0
  %v520 = vsel %vm512, 16843009, 0
  %v521 = vunpack.c.0.s8 %v513
  %v522 = vunpack.c.0.s8 %v514
  %v523 = vunpack.c.0.s8 %v515
  %v524 = vunpack.c.0.s8 %v516
  %v525 = vunpack.c.0.s8 %v517
  %v526 = vunpack.c.0.s8 %v518
  %v527 = vunpack.c.0.s8 %v519
  %v528 = vunpack.c.0.s8 %v520
  %vm529 = vcmp.ne.s32.totalorder %v521, 0
  %vm530 = vcmp.ne.s32.totalorder %v522, 0
  %vm531 = vcmp.ne.s32.totalorder %v523, 0
  %vm532 = vcmp.ne.s32.totalorder %v524, 0
  %vm533 = vcmp.ne.s32.totalorder %v525, 0
  %vm534 = vcmp.ne.s32.totalorder %v526, 0
  %vm535 = vcmp.ne.s32.totalorder %v527, 0
  %vm536 = vcmp.ne.s32.totalorder %v528, 0
  %v537 = vsel %vm529, %v471, -1e+30
  %v538 = vsel %vm530, %v472, -1e+30
  %v539 = vsel %vm531, %v473, -1e+30
  %v540 = vsel %vm532, %v474, -1e+30
  %v541 = vsel %vm533, %v475, -1e+30
  %v542 = vsel %vm534, %v476, -1e+30
  %v543 = vsel %vm535, %v477, -1e+30
  %v544 = vsel %vm536, %v478, -1e+30
  %vm545 = vcmask 523264
  %v546 = vsel %vm545, %v537, -inf
  %547 = vmax.xlane.f32.xlu0 %v546
  %v548 = vpop.xlane.xlu0 %547
  %v549 = vsel %vm545, %v538, -inf
  %550 = vmax.xlane.f32.xlu0 %v549
  %v551 = vpop.xlane.xlu0 %550
  %v552 = vsel %vm545, %v539, -inf
  %553 = vmax.xlane.f32.xlu0 %v552
  %v554 = vpop.xlane.xlu0 %553
  %v555 = vsel %vm545, %v540, -inf
  %556 = vmax.xlane.f32.xlu0 %v555
  %v557 = vpop.xlane.xlu0 %556
  %v558 = vsel %vm545, %v541, -inf
  %559 = vmax.xlane.f32.xlu0 %v558
  %v560 = vpop.xlane.xlu0 %559
  %v561 = vsel %vm545, %v542, -inf
  %562 = vmax.xlane.f32.xlu0 %v561
  %v563 = vpop.xlane.xlu0 %562
  %v564 = vsel %vm545, %v543, -inf
  %565 = vmax.xlane.f32.xlu0 %v564
  %v566 = vpop.xlane.xlu0 %565
  %v567 = vsel %vm545, %v544, -inf
  %568 = vmax.xlane.f32.xlu0 %v567
  %v569 = vpop.xlane.xlu0 %568
  %v570 = vsub.f32 %v537, %v548
  %v571 = vsub.f32 %v538, %v551
  %v572 = vsub.f32 %v539, %v554
  %v573 = vsub.f32 %v540, %v557
  %v574 = vsub.f32 %v541, %v560
  %v575 = vsub.f32 %v542, %v563
  %v576 = vsub.f32 %v543, %v566
  %v577 = vsub.f32 %v544, %v569
  %v578 = vmul.f32 %v570, 1.442695
  %v579 = vpow.pop %v578
  %v580 = vmul.f32 %v571, 1.442695
  %v581 = vpow.pop %v580
  %v582 = vmul.f32 %v572, 1.442695
  %v583 = vpow.pop %v582
  %v584 = vmul.f32 %v573, 1.442695
  %v585 = vpow.pop %v584
  %v586 = vmul.f32 %v574, 1.442695
  %v587 = vpow.pop %v586
  %v588 = vmul.f32 %v575, 1.442695
  %v589 = vpow.pop %v588
  %v590 = vmul.f32 %v576, 1.442695
  %v591 = vpow.pop %v590
  %v592 = vmul.f32 %v577, 1.442695
  %v593 = vpow.pop %v592
  %v594 = vsel %vm545, %v579, 0.0
  %595 = vadd.xlane.f32.xlu0 %v594
  %v596 = vpop.xlane.xlu0 %595
  %v597 = vsel %vm545, %v581, 0.0
  %598 = vadd.xlane.f32.xlu0 %v597
  %v599 = vpop.xlane.xlu0 %598
  %v600 = vsel %vm545, %v583, 0.0
  %601 = vadd.xlane.f32.xlu0 %v600
  %v602 = vpop.xlane.xlu0 %601
  %v603 = vsel %vm545, %v585, 0.0
  %604 = vadd.xlane.f32.xlu0 %v603
  %v605 = vpop.xlane.xlu0 %604
  %v606 = vsel %vm545, %v587, 0.0
  %607 = vadd.xlane.f32.xlu0 %v606
  %v608 = vpop.xlane.xlu0 %607
  %v609 = vsel %vm545, %v589, 0.0
  %610 = vadd.xlane.f32.xlu0 %v609
  %v611 = vpop.xlane.xlu0 %610
  %v612 = vsel %vm545, %v591, 0.0
  %613 = vadd.xlane.f32.xlu0 %v612
  %v614 = vpop.xlane.xlu0 %613
  %v615 = vsel %vm545, %v593, 0.0
  %616 = vadd.xlane.f32.xlu0 %v615
  %v617 = vpop.xlane.xlu0 %616
  %v618 = vrcp.pop %v596
  %v619 = vmul.f32 %v596, %v618
  %v620 = vsub.f32 1.0, %v619
  %v621 = vmul.f32 %v618, %v620
  %v622 = vadd.f32 %v618, %v621
  %vm623 = vweird.f32 %v596
  %vm624 = vweird.f32 %v618
  %vm625 = vmor %vm623, %vm624
  %v626 = vsel %vm625, %v618, %v622
  %v627 = vand.u32 2147483647, %v596
  %vm628 = vcmp.eq.f32.partialorder %v627, 8.507059e+37
  %v629 = vand.u32 %v596, 2147483648
  %v630 = vor.u32 1.1754944e-38, %v629
  %v631 = vsel %vm628, %v630, %v626
  %v632 = vrcp.pop %v599
  %v633 = vmul.f32 %v599, %v632
  %v634 = vsub.f32 1.0, %v633
  %v635 = vmul.f32 %v632, %v634
  %v636 = vadd.f32 %v632, %v635
  %vm637 = vweird.f32 %v599
  %vm638 = vweird.f32 %v632
  %vm639 = vmor %vm637, %vm638
  %v640 = vsel %vm639, %v632, %v636
  %v641 = vand.u32 2147483647, %v599
  %vm642 = vcmp.eq.f32.partialorder %v641, 8.507059e+37
  %v643 = vand.u32 %v599, 2147483648
  %v644 = vor.u32 1.1754944e-38, %v643
  %v645 = vsel %vm642, %v644, %v640
  %v646 = vrcp.pop %v602
  %v647 = vmul.f32 %v602, %v646
  %v648 = vsub.f32 1.0, %v647
  %v649 = vmul.f32 %v646, %v648
  %v650 = vadd.f32 %v646, %v649
  %vm651 = vweird.f32 %v602
  %vm652 = vweird.f32 %v646
  %vm653 = vmor %vm651, %vm652
  %v654 = vsel %vm653, %v646, %v650
  %v655 = vand.u32 2147483647, %v602
  %vm656 = vcmp.eq.f32.partialorder %v655, 8.507059e+37
  %v657 = vand.u32 %v602, 2147483648
  %v658 = vor.u32 1.1754944e-38, %v657
  %v659 = vsel %vm656, %v658, %v654
  %v660 = vrcp.pop %v605
  %v661 = vmul.f32 %v605, %v660
  %v662 = vsub.f32 1.0, %v661
  %v663 = vmul.f32 %v660, %v662
  %v664 = vadd.f32 %v660, %v663
  %vm665 = vweird.f32 %v605
  %vm666 = vweird.f32 %v660
  %vm667 = vmor %vm665, %vm666
  %v668 = vsel %vm667, %v660, %v664
  %v669 = vand.u32 2147483647, %v605
  %vm670 = vcmp.eq.f32.partialorder %v669, 8.507059e+37
  %v671 = vand.u32 %v605, 2147483648
  %v672 = vor.u32 1.1754944e-38, %v671
  %v673 = vsel %vm670, %v672, %v668
  %v674 = vrcp.pop %v608
  %v675 = vmul.f32 %v608, %v674
  %v676 = vsub.f32 1.0, %v675
  %v677 = vmul.f32 %v674, %v676
  %v678 = vadd.f32 %v674, %v677
  %vm679 = vweird.f32 %v608
  %vm680 = vweird.f32 %v674
  %vm681 = vmor %vm679, %vm680
  %v682 = vsel %vm681, %v674, %v678
  %v683 = vand.u32 2147483647, %v608
  %vm684 = vcmp.eq.f32.partialorder %v683, 8.507059e+37
  %v685 = vand.u32 %v608, 2147483648
  %v686 = vor.u32 1.1754944e-38, %v685
  %v687 = vsel %vm684, %v686, %v682
  %v688 = vrcp.pop %v611
  %v689 = vmul.f32 %v611, %v688
  %v690 = vsub.f32 1.0, %v689
  %v691 = vmul.f32 %v688, %v690
  %v692 = vadd.f32 %v688, %v691
  %vm693 = vweird.f32 %v611
  %vm694 = vweird.f32 %v688
  %vm695 = vmor %vm693, %vm694
  %v696 = vsel %vm695, %v688, %v692
  %v697 = vand.u32 2147483647, %v611
  %vm698 = vcmp.eq.f32.partialorder %v697, 8.507059e+37
  %v699 = vand.u32 %v611, 2147483648
  %v700 = vor.u32 1.1754944e-38, %v699
  %v701 = vsel %vm698, %v700, %v696
  %v702 = vrcp.pop %v614
  %v703 = vmul.f32 %v614, %v702
  %v704 = vsub.f32 1.0, %v703
  %v705 = vmul.f32 %v702, %v704
  %v706 = vadd.f32 %v702, %v705
  %vm707 = vweird.f32 %v614
  %vm708 = vweird.f32 %v702
  %vm709 = vmor %vm707, %vm708
  %v710 = vsel %vm709, %v702, %v706
  %v711 = vand.u32 2147483647, %v614
  %vm712 = vcmp.eq.f32.partialorder %v711, 8.507059e+37
  %v713 = vand.u32 %v614, 2147483648
  %v714 = vor.u32 1.1754944e-38, %v713
  %v715 = vsel %vm712, %v714, %v710
  %v716 = vrcp.pop %v617
  %v717 = vmul.f32 %v617, %v716
  %v718 = vsub.f32 1.0, %v717
  %v719 = vmul.f32 %v716, %v718
  %v720 = vadd.f32 %v716, %v719
  %vm721 = vweird.f32 %v617
  %vm722 = vweird.f32 %v716
  %vm723 = vmor %vm721, %vm722
  %v724 = vsel %vm723, %v716, %v720
  %v725 = vand.u32 2147483647, %v617
  %vm726 = vcmp.eq.f32.partialorder %v725, 8.507059e+37
  %v727 = vand.u32 %v617, 2147483648
  %v728 = vor.u32 1.1754944e-38, %v727
  %v729 = vsel %vm726, %v728, %v724
  %v730 = vmul.f32 %v579, %v631
  %v731 = vmul.f32 %v581, %v645
  %v732 = vmul.f32 %v583, %v659
  %v733 = vmul.f32 %v585, %v673
  %v734 = vmul.f32 %v587, %v687
  %v735 = vmul.f32 %v589, %v701
  %v736 = vmul.f32 %v591, %v715
  %v737 = vmul.f32 %v593, %v729
  %v738 = vpack.c.bf16 %v731, %v730
  %v739 = vpack.c.bf16 %v733, %v732
  %v740 = vpack.c.bf16 %v735, %v734
  %v741 = vpack.c.bf16 %v737, %v736
  %v750 = vunpack.c.l.b16 %v260
  %v751 = vunpack.c.l.b16 %v261
  %v752 = vunpack.c.l.b16 %v262
  %v753 = vunpack.c.l.b16 %v263
  %v754 = vunpack.c.l.b16 %v264
  %v755 = vunpack.c.l.b16 %v265
  %v756 = vunpack.c.l.b16 %v266
  %v757 = vunpack.c.l.b16 %v267
  %v758 = vpack.c.b16 %v751, %v750
  %v759 = vpack.c.b16 %v753, %v752
  %v760 = vpack.c.b16 %v755, %v754
  %v761 = vpack.c.b16 %v757, %v756
  %v767 = vsel %vm545, %v738, 0
  %v770 = vsel %vm545, %v739, 0
  %v773 = vsel %vm545, %v740, 0
  %v776 = vsel %vm545, %v741, 0
  %778 = vmatpush.bf16.msra.mxu0 0
  %779 = vmatpush.bf16.msra.mxu0 0
  %780 = vmatpush.bf16.msra.mxu0 0
  %781 = vmatpush.bf16.msra.mxu0 0
  %782 = vmatpush.bf16.msra.mxu0 %v761
  %783 = vmatpush.bf16.msra.mxu0 %v760
  %784 = vmatpush.bf16.msra.mxu0 %v759
  %785 = vmatpush.bf16.msra.mxu0 %v758
  %786 = vmatmul.bf16.gmra.mxu0 %v767
  %v787 = vpop.f32.mrf.mxu0
  %v788 = vadd.f32 0.0, %v787
  %v789 = vpop.f32.mrf.mxu0
  %v790 = vadd.f32 0.0, %v789
  %791 = vmatmul.bf16.gmra.mxu0 %v770
  %v792 = vpop.f32.mrf.mxu0
  %v793 = vadd.f32 0.0, %v792
  %v794 = vpop.f32.mrf.mxu0
  %v795 = vadd.f32 0.0, %v794
  %796 = vmatmul.bf16.gmra.mxu0 %v773
  %v797 = vpop.f32.mrf.mxu0
  %v798 = vadd.f32 0.0, %v797
  %v799 = vpop.f32.mrf.mxu0
  %v800 = vadd.f32 0.0, %v799
  %801 = vmatmul.bf16.gmra.mxu0 %v776
  %v802 = vpop.f32.mrf.mxu0
  %v803 = vadd.f32 0.0, %v802
  %v804 = vpop.f32.mrf.mxu0
  %v805 = vadd.f32 0.0, %v804
  %806 = vdwg.mxu0
  %807 = vset.pattern.permute.xlu0 1
  %808 = vperm.xlu0 %807, %v359
  %v809 = vpop.permute.xlu0 %808
  %811 = vset.pattern.permute.xlu0 1
  %812 = vperm.xlu0 %811, %v362
  %v813 = vpop.permute.xlu0 %812
  %815 = vset.pattern.permute.xlu0 1
  %816 = vperm.xlu0 %815, %v365
  %v817 = vpop.permute.xlu0 %816
  %819 = vset.pattern.permute.xlu0 1
  %820 = vperm.xlu0 %819, %v368
  %v821 = vpop.permute.xlu0 %820
  %823 = vset.pattern.permute.xlu0 1
  %824 = vperm.xlu0 %823, %v371
  %v825 = vpop.permute.xlu0 %824
  %827 = vset.pattern.permute.xlu0 1
  %828 = vperm.xlu0 %827, %v374
  %v829 = vpop.permute.xlu0 %828
  %831 = vset.pattern.permute.xlu0 1
  %832 = vperm.xlu0 %831, %v377
  %v833 = vpop.permute.xlu0 %832
  %835 = vset.pattern.permute.xlu0 1
  %836 = vperm.xlu0 %835, %v380
  %v837 = vpop.permute.xlu0 %836
  %v839 = vperm.slane %v398, 1
  %v840 = vadd.f32 %v809, %v839
  %v841 = vadd.f32 %v813, %v839
  %v842 = vadd.f32 %v817, %v839
  %v843 = vadd.f32 %v821, %v839
  %v844 = vadd.f32 %v825, %v839
  %v845 = vadd.f32 %v829, %v839
  %v846 = vadd.f32 %v833, %v839
  %v847 = vadd.f32 %v837, %v839
  %v848 = vmul.f32 %v840, 0.2
  %v849 = vmul.f32 %v841, 0.2
  %v850 = vmul.f32 %v842, 0.2
  %v851 = vmul.f32 %v843, 0.2
  %v852 = vmul.f32 %v844, 0.2
  %v853 = vmul.f32 %v845, 0.2
  %v854 = vmul.f32 %v846, 0.2
  %v855 = vmul.f32 %v847, 0.2
  %v856 = vmax.f32 %v840, %v848
  %v857 = vmax.f32 %v841, %v849
  %v858 = vmax.f32 %v842, %v850
  %v859 = vmax.f32 %v843, %v851
  %v860 = vmax.f32 %v844, %v852
  %v861 = vmax.f32 %v845, %v853
  %v862 = vmax.f32 %v846, %v854
  %v863 = vmax.f32 %v847, %v855
  %v864 = vsel %vm529, %v856, -1e+30
  %v865 = vsel %vm530, %v857, -1e+30
  %v866 = vsel %vm531, %v858, -1e+30
  %v867 = vsel %vm532, %v859, -1e+30
  %v868 = vsel %vm533, %v860, -1e+30
  %v869 = vsel %vm534, %v861, -1e+30
  %v870 = vsel %vm535, %v862, -1e+30
  %v871 = vsel %vm536, %v863, -1e+30
  %v872 = vsel %vm545, %v864, -inf
  %873 = vmax.xlane.f32.xlu0 %v872
  %v874 = vpop.xlane.xlu0 %873
  %v875 = vsel %vm545, %v865, -inf
  %876 = vmax.xlane.f32.xlu0 %v875
  %v877 = vpop.xlane.xlu0 %876
  %v878 = vsel %vm545, %v866, -inf
  %879 = vmax.xlane.f32.xlu0 %v878
  %v880 = vpop.xlane.xlu0 %879
  %v881 = vsel %vm545, %v867, -inf
  %882 = vmax.xlane.f32.xlu0 %v881
  %v883 = vpop.xlane.xlu0 %882
  %v884 = vsel %vm545, %v868, -inf
  %885 = vmax.xlane.f32.xlu0 %v884
  %v886 = vpop.xlane.xlu0 %885
  %v887 = vsel %vm545, %v869, -inf
  %888 = vmax.xlane.f32.xlu0 %v887
  %v889 = vpop.xlane.xlu0 %888
  %v890 = vsel %vm545, %v870, -inf
  %891 = vmax.xlane.f32.xlu0 %v890
  %v892 = vpop.xlane.xlu0 %891
  %v893 = vsel %vm545, %v871, -inf
  %894 = vmax.xlane.f32.xlu0 %v893
  %v895 = vpop.xlane.xlu0 %894
  %v896 = vsub.f32 %v864, %v874
  %v897 = vsub.f32 %v865, %v877
  %v898 = vsub.f32 %v866, %v880
  %v899 = vsub.f32 %v867, %v883
  %v900 = vsub.f32 %v868, %v886
  %v901 = vsub.f32 %v869, %v889
  %v902 = vsub.f32 %v870, %v892
  %v903 = vsub.f32 %v871, %v895
  %v904 = vmul.f32 %v896, 1.442695
  %v905 = vpow.pop %v904
  %v906 = vmul.f32 %v897, 1.442695
  %v907 = vpow.pop %v906
  %v908 = vmul.f32 %v898, 1.442695
  %v909 = vpow.pop %v908
  %v910 = vmul.f32 %v899, 1.442695
  %v911 = vpow.pop %v910
  %v912 = vmul.f32 %v900, 1.442695
  %v913 = vpow.pop %v912
  %v914 = vmul.f32 %v901, 1.442695
  %v915 = vpow.pop %v914
  %v916 = vmul.f32 %v902, 1.442695
  %v917 = vpow.pop %v916
  %v918 = vmul.f32 %v903, 1.442695
  %v919 = vpow.pop %v918
  %v920 = vsel %vm545, %v905, 0.0
  %921 = vadd.xlane.f32.xlu0 %v920
  %v922 = vpop.xlane.xlu0 %921
  %v923 = vsel %vm545, %v907, 0.0
  %924 = vadd.xlane.f32.xlu0 %v923
  %v925 = vpop.xlane.xlu0 %924
  %v926 = vsel %vm545, %v909, 0.0
  %927 = vadd.xlane.f32.xlu0 %v926
  %v928 = vpop.xlane.xlu0 %927
  %v929 = vsel %vm545, %v911, 0.0
  %930 = vadd.xlane.f32.xlu0 %v929
  %v931 = vpop.xlane.xlu0 %930
  %v932 = vsel %vm545, %v913, 0.0
  %933 = vadd.xlane.f32.xlu0 %v932
  %v934 = vpop.xlane.xlu0 %933
  %v935 = vsel %vm545, %v915, 0.0
  %936 = vadd.xlane.f32.xlu0 %v935
  %v937 = vpop.xlane.xlu0 %936
  %v938 = vsel %vm545, %v917, 0.0
  %939 = vadd.xlane.f32.xlu0 %v938
  %v940 = vpop.xlane.xlu0 %939
  %v941 = vsel %vm545, %v919, 0.0
  %942 = vadd.xlane.f32.xlu0 %v941
  %v943 = vpop.xlane.xlu0 %942
  %v944 = vrcp.pop %v922
  %v945 = vmul.f32 %v922, %v944
  %v946 = vsub.f32 1.0, %v945
  %v947 = vmul.f32 %v944, %v946
  %v948 = vadd.f32 %v944, %v947
  %vm949 = vweird.f32 %v922
  %vm950 = vweird.f32 %v944
  %vm951 = vmor %vm949, %vm950
  %v952 = vsel %vm951, %v944, %v948
  %v953 = vand.u32 2147483647, %v922
  %vm954 = vcmp.eq.f32.partialorder %v953, 8.507059e+37
  %v955 = vand.u32 %v922, 2147483648
  %v956 = vor.u32 1.1754944e-38, %v955
  %v957 = vsel %vm954, %v956, %v952
  %v958 = vrcp.pop %v925
  %v959 = vmul.f32 %v925, %v958
  %v960 = vsub.f32 1.0, %v959
  %v961 = vmul.f32 %v958, %v960
  %v962 = vadd.f32 %v958, %v961
  %vm963 = vweird.f32 %v925
  %vm964 = vweird.f32 %v958
  %vm965 = vmor %vm963, %vm964
  %v966 = vsel %vm965, %v958, %v962
  %v967 = vand.u32 2147483647, %v925
  %vm968 = vcmp.eq.f32.partialorder %v967, 8.507059e+37
  %v969 = vand.u32 %v925, 2147483648
  %v970 = vor.u32 1.1754944e-38, %v969
  %v971 = vsel %vm968, %v970, %v966
  %v972 = vrcp.pop %v928
  %v973 = vmul.f32 %v928, %v972
  %v974 = vsub.f32 1.0, %v973
  %v975 = vmul.f32 %v972, %v974
  %v976 = vadd.f32 %v972, %v975
  %vm977 = vweird.f32 %v928
  %vm978 = vweird.f32 %v972
  %vm979 = vmor %vm977, %vm978
  %v980 = vsel %vm979, %v972, %v976
  %v981 = vand.u32 2147483647, %v928
  %vm982 = vcmp.eq.f32.partialorder %v981, 8.507059e+37
  %v983 = vand.u32 %v928, 2147483648
  %v984 = vor.u32 1.1754944e-38, %v983
  %v985 = vsel %vm982, %v984, %v980
  %v986 = vrcp.pop %v931
  %v987 = vmul.f32 %v931, %v986
  %v988 = vsub.f32 1.0, %v987
  %v989 = vmul.f32 %v986, %v988
  %v990 = vadd.f32 %v986, %v989
  %vm991 = vweird.f32 %v931
  %vm992 = vweird.f32 %v986
  %vm993 = vmor %vm991, %vm992
  %v994 = vsel %vm993, %v986, %v990
  %v995 = vand.u32 2147483647, %v931
  %vm996 = vcmp.eq.f32.partialorder %v995, 8.507059e+37
  %v997 = vand.u32 %v931, 2147483648
  %v998 = vor.u32 1.1754944e-38, %v997
  %v999 = vsel %vm996, %v998, %v994
  %v1000 = vrcp.pop %v934
  %v1001 = vmul.f32 %v934, %v1000
  %v1002 = vsub.f32 1.0, %v1001
  %v1003 = vmul.f32 %v1000, %v1002
  %v1004 = vadd.f32 %v1000, %v1003
  %vm1005 = vweird.f32 %v934
  %vm1006 = vweird.f32 %v1000
  %vm1007 = vmor %vm1005, %vm1006
  %v1008 = vsel %vm1007, %v1000, %v1004
  %v1009 = vand.u32 2147483647, %v934
  %vm1010 = vcmp.eq.f32.partialorder %v1009, 8.507059e+37
  %v1011 = vand.u32 %v934, 2147483648
  %v1012 = vor.u32 1.1754944e-38, %v1011
  %v1013 = vsel %vm1010, %v1012, %v1008
  %v1014 = vrcp.pop %v937
  %v1015 = vmul.f32 %v937, %v1014
  %v1016 = vsub.f32 1.0, %v1015
  %v1017 = vmul.f32 %v1014, %v1016
  %v1018 = vadd.f32 %v1014, %v1017
  %vm1019 = vweird.f32 %v937
  %vm1020 = vweird.f32 %v1014
  %vm1021 = vmor %vm1019, %vm1020
  %v1022 = vsel %vm1021, %v1014, %v1018
  %v1023 = vand.u32 2147483647, %v937
  %vm1024 = vcmp.eq.f32.partialorder %v1023, 8.507059e+37
  %v1025 = vand.u32 %v937, 2147483648
  %v1026 = vor.u32 1.1754944e-38, %v1025
  %v1027 = vsel %vm1024, %v1026, %v1022
  %v1028 = vrcp.pop %v940
  %v1029 = vmul.f32 %v940, %v1028
  %v1030 = vsub.f32 1.0, %v1029
  %v1031 = vmul.f32 %v1028, %v1030
  %v1032 = vadd.f32 %v1028, %v1031
  %vm1033 = vweird.f32 %v940
  %vm1034 = vweird.f32 %v1028
  %vm1035 = vmor %vm1033, %vm1034
  %v1036 = vsel %vm1035, %v1028, %v1032
  %v1037 = vand.u32 2147483647, %v940
  %vm1038 = vcmp.eq.f32.partialorder %v1037, 8.507059e+37
  %v1039 = vand.u32 %v940, 2147483648
  %v1040 = vor.u32 1.1754944e-38, %v1039
  %v1041 = vsel %vm1038, %v1040, %v1036
  %v1042 = vrcp.pop %v943
  %v1043 = vmul.f32 %v943, %v1042
  %v1044 = vsub.f32 1.0, %v1043
  %v1045 = vmul.f32 %v1042, %v1044
  %v1046 = vadd.f32 %v1042, %v1045
  %vm1047 = vweird.f32 %v943
  %vm1048 = vweird.f32 %v1042
  %vm1049 = vmor %vm1047, %vm1048
  %v1050 = vsel %vm1049, %v1042, %v1046
  %v1051 = vand.u32 2147483647, %v943
  %vm1052 = vcmp.eq.f32.partialorder %v1051, 8.507059e+37
  %v1053 = vand.u32 %v943, 2147483648
  %v1054 = vor.u32 1.1754944e-38, %v1053
  %v1055 = vsel %vm1052, %v1054, %v1050
  %v1056 = vmul.f32 %v905, %v957
  %v1057 = vmul.f32 %v907, %v971
  %v1058 = vmul.f32 %v909, %v985
  %v1059 = vmul.f32 %v911, %v999
  %v1060 = vmul.f32 %v913, %v1013
  %v1061 = vmul.f32 %v915, %v1027
  %v1062 = vmul.f32 %v917, %v1041
  %v1063 = vmul.f32 %v919, %v1055
  %v1064 = vpack.c.bf16 %v1057, %v1056
  %v1065 = vpack.c.bf16 %v1059, %v1058
  %v1066 = vpack.c.bf16 %v1061, %v1060
  %v1067 = vpack.c.bf16 %v1063, %v1062
  %1068 = vrot.lane.b32.xlu0 %v758, 120
  %v1069 = vpop.permute.xlu0 %1068
  %1070 = vrot.lane.b32.xlu0 %v759, 120
  %v1071 = vpop.permute.xlu0 %1070
  %1072 = vrot.lane.b32.xlu0 %v760, 120
  %v1073 = vpop.permute.xlu0 %1072
  %1074 = vrot.lane.b32.xlu0 %v761, 120
  %v1075 = vpop.permute.xlu0 %1074
  %v1081 = vsel %vm545, %v1064, 0
  %v1084 = vsel %vm545, %v1065, 0
  %v1087 = vsel %vm545, %v1066, 0
  %v1090 = vsel %vm545, %v1067, 0
  %1092 = vmatpush.bf16.msra.mxu0 0
  %1093 = vmatpush.bf16.msra.mxu0 0
  %1094 = vmatpush.bf16.msra.mxu0 0
  %1095 = vmatpush.bf16.msra.mxu0 0
  %1096 = vmatpush.bf16.msra.mxu0 %v1075
  %1097 = vmatpush.bf16.msra.mxu0 %v1073
  %1098 = vmatpush.bf16.msra.mxu0 %v1071
  %1099 = vmatpush.bf16.msra.mxu0 %v1069
  %1100 = vmatmul.bf16.gmra.mxu0 %v1081
  %v1101 = vpop.f32.mrf.mxu0
  %v1102 = vadd.f32 0.0, %v1101
  %v1103 = vpop.f32.mrf.mxu0
  %v1104 = vadd.f32 0.0, %v1103
  %1105 = vmatmul.bf16.gmra.mxu0 %v1084
  %v1106 = vpop.f32.mrf.mxu0
  %v1107 = vadd.f32 0.0, %v1106
  %v1108 = vpop.f32.mrf.mxu0
  %v1109 = vadd.f32 0.0, %v1108
  %1110 = vmatmul.bf16.gmra.mxu0 %v1087
  %v1111 = vpop.f32.mrf.mxu0
  %v1112 = vadd.f32 0.0, %v1111
  %v1113 = vpop.f32.mrf.mxu0
  %v1114 = vadd.f32 0.0, %v1113
  %1115 = vmatmul.bf16.gmra.mxu0 %v1090
  %v1116 = vpop.f32.mrf.mxu0
  %v1117 = vadd.f32 0.0, %v1116
  %v1118 = vpop.f32.mrf.mxu0
  %v1119 = vadd.f32 0.0, %v1118
  %1120 = vdwg.mxu0
  %1121 = vset.pattern.permute.xlu0 2
  %1122 = vperm.xlu0 %1121, %v359
  %v1123 = vpop.permute.xlu0 %1122
  %1125 = vset.pattern.permute.xlu0 2
  %1126 = vperm.xlu0 %1125, %v362
  %v1127 = vpop.permute.xlu0 %1126
  %1129 = vset.pattern.permute.xlu0 2
  %1130 = vperm.xlu0 %1129, %v365
  %v1131 = vpop.permute.xlu0 %1130
  %1133 = vset.pattern.permute.xlu0 2
  %1134 = vperm.xlu0 %1133, %v368
  %v1135 = vpop.permute.xlu0 %1134
  %1137 = vset.pattern.permute.xlu0 2
  %1138 = vperm.xlu0 %1137, %v371
  %v1139 = vpop.permute.xlu0 %1138
  %1141 = vset.pattern.permute.xlu0 2
  %1142 = vperm.xlu0 %1141, %v374
  %v1143 = vpop.permute.xlu0 %1142
  %1145 = vset.pattern.permute.xlu0 2
  %1146 = vperm.xlu0 %1145, %v377
  %v1147 = vpop.permute.xlu0 %1146
  %1149 = vset.pattern.permute.xlu0 2
  %1150 = vperm.xlu0 %1149, %v380
  %v1151 = vpop.permute.xlu0 %1150
  %v1153 = vperm.slane %v398, 2
  %v1154 = vadd.f32 %v1123, %v1153
  %v1155 = vadd.f32 %v1127, %v1153
  %v1156 = vadd.f32 %v1131, %v1153
  %v1157 = vadd.f32 %v1135, %v1153
  %v1158 = vadd.f32 %v1139, %v1153
  %v1159 = vadd.f32 %v1143, %v1153
  %v1160 = vadd.f32 %v1147, %v1153
  %v1161 = vadd.f32 %v1151, %v1153
  %v1162 = vmul.f32 %v1154, 0.2
  %v1163 = vmul.f32 %v1155, 0.2
  %v1164 = vmul.f32 %v1156, 0.2
  %v1165 = vmul.f32 %v1157, 0.2
  %v1166 = vmul.f32 %v1158, 0.2
  %v1167 = vmul.f32 %v1159, 0.2
  %v1168 = vmul.f32 %v1160, 0.2
  %v1169 = vmul.f32 %v1161, 0.2
  %v1170 = vmax.f32 %v1154, %v1162
  %v1171 = vmax.f32 %v1155, %v1163
  %v1172 = vmax.f32 %v1156, %v1164
  %v1173 = vmax.f32 %v1157, %v1165
  %v1174 = vmax.f32 %v1158, %v1166
  %v1175 = vmax.f32 %v1159, %v1167
  %v1176 = vmax.f32 %v1160, %v1168
  %v1177 = vmax.f32 %v1161, %v1169
  %v1178 = vsel %vm529, %v1170, -1e+30
  %v1179 = vsel %vm530, %v1171, -1e+30
  %v1180 = vsel %vm531, %v1172, -1e+30
  %v1181 = vsel %vm532, %v1173, -1e+30
  %v1182 = vsel %vm533, %v1174, -1e+30
  %v1183 = vsel %vm534, %v1175, -1e+30
  %v1184 = vsel %vm535, %v1176, -1e+30
  %v1185 = vsel %vm536, %v1177, -1e+30
  %v1186 = vsel %vm545, %v1178, -inf
  %1187 = vmax.xlane.f32.xlu0 %v1186
  %v1188 = vpop.xlane.xlu0 %1187
  %v1189 = vsel %vm545, %v1179, -inf
  %1190 = vmax.xlane.f32.xlu0 %v1189
  %v1191 = vpop.xlane.xlu0 %1190
  %v1192 = vsel %vm545, %v1180, -inf
  %1193 = vmax.xlane.f32.xlu0 %v1192
  %v1194 = vpop.xlane.xlu0 %1193
  %v1195 = vsel %vm545, %v1181, -inf
  %1196 = vmax.xlane.f32.xlu0 %v1195
  %v1197 = vpop.xlane.xlu0 %1196
  %v1198 = vsel %vm545, %v1182, -inf
  %1199 = vmax.xlane.f32.xlu0 %v1198
  %v1200 = vpop.xlane.xlu0 %1199
  %v1201 = vsel %vm545, %v1183, -inf
  %1202 = vmax.xlane.f32.xlu0 %v1201
  %v1203 = vpop.xlane.xlu0 %1202
  %v1204 = vsel %vm545, %v1184, -inf
  %1205 = vmax.xlane.f32.xlu0 %v1204
  %v1206 = vpop.xlane.xlu0 %1205
  %v1207 = vsel %vm545, %v1185, -inf
  %1208 = vmax.xlane.f32.xlu0 %v1207
  %v1209 = vpop.xlane.xlu0 %1208
  %v1210 = vsub.f32 %v1178, %v1188
  %v1211 = vsub.f32 %v1179, %v1191
  %v1212 = vsub.f32 %v1180, %v1194
  %v1213 = vsub.f32 %v1181, %v1197
  %v1214 = vsub.f32 %v1182, %v1200
  %v1215 = vsub.f32 %v1183, %v1203
  %v1216 = vsub.f32 %v1184, %v1206
  %v1217 = vsub.f32 %v1185, %v1209
  %v1218 = vmul.f32 %v1210, 1.442695
  %v1219 = vpow.pop %v1218
  %v1220 = vmul.f32 %v1211, 1.442695
  %v1221 = vpow.pop %v1220
  %v1222 = vmul.f32 %v1212, 1.442695
  %v1223 = vpow.pop %v1222
  %v1224 = vmul.f32 %v1213, 1.442695
  %v1225 = vpow.pop %v1224
  %v1226 = vmul.f32 %v1214, 1.442695
  %v1227 = vpow.pop %v1226
  %v1228 = vmul.f32 %v1215, 1.442695
  %v1229 = vpow.pop %v1228
  %v1230 = vmul.f32 %v1216, 1.442695
  %v1231 = vpow.pop %v1230
  %v1232 = vmul.f32 %v1217, 1.442695
  %v1233 = vpow.pop %v1232
  %v1234 = vsel %vm545, %v1219, 0.0
  %1235 = vadd.xlane.f32.xlu0 %v1234
  %v1236 = vpop.xlane.xlu0 %1235
  %v1237 = vsel %vm545, %v1221, 0.0
  %1238 = vadd.xlane.f32.xlu0 %v1237
  %v1239 = vpop.xlane.xlu0 %1238
  %v1240 = vsel %vm545, %v1223, 0.0
  %1241 = vadd.xlane.f32.xlu0 %v1240
  %v1242 = vpop.xlane.xlu0 %1241
  %v1243 = vsel %vm545, %v1225, 0.0
  %1244 = vadd.xlane.f32.xlu0 %v1243
  %v1245 = vpop.xlane.xlu0 %1244
  %v1246 = vsel %vm545, %v1227, 0.0
  %1247 = vadd.xlane.f32.xlu0 %v1246
  %v1248 = vpop.xlane.xlu0 %1247
  %v1249 = vsel %vm545, %v1229, 0.0
  %1250 = vadd.xlane.f32.xlu0 %v1249
  %v1251 = vpop.xlane.xlu0 %1250
  %v1252 = vsel %vm545, %v1231, 0.0
  %1253 = vadd.xlane.f32.xlu0 %v1252
  %v1254 = vpop.xlane.xlu0 %1253
  %v1255 = vsel %vm545, %v1233, 0.0
  %1256 = vadd.xlane.f32.xlu0 %v1255
  %v1257 = vpop.xlane.xlu0 %1256
  %v1258 = vrcp.pop %v1236
  %v1259 = vmul.f32 %v1236, %v1258
  %v1260 = vsub.f32 1.0, %v1259
  %v1261 = vmul.f32 %v1258, %v1260
  %v1262 = vadd.f32 %v1258, %v1261
  %vm1263 = vweird.f32 %v1236
  %vm1264 = vweird.f32 %v1258
  %vm1265 = vmor %vm1263, %vm1264
  %v1266 = vsel %vm1265, %v1258, %v1262
  %v1267 = vand.u32 2147483647, %v1236
  %vm1268 = vcmp.eq.f32.partialorder %v1267, 8.507059e+37
  %v1269 = vand.u32 %v1236, 2147483648
  %v1270 = vor.u32 1.1754944e-38, %v1269
  %v1271 = vsel %vm1268, %v1270, %v1266
  %v1272 = vrcp.pop %v1239
  %v1273 = vmul.f32 %v1239, %v1272
  %v1274 = vsub.f32 1.0, %v1273
  %v1275 = vmul.f32 %v1272, %v1274
  %v1276 = vadd.f32 %v1272, %v1275
  %vm1277 = vweird.f32 %v1239
  %vm1278 = vweird.f32 %v1272
  %vm1279 = vmor %vm1277, %vm1278
  %v1280 = vsel %vm1279, %v1272, %v1276
  %v1281 = vand.u32 2147483647, %v1239
  %vm1282 = vcmp.eq.f32.partialorder %v1281, 8.507059e+37
  %v1283 = vand.u32 %v1239, 2147483648
  %v1284 = vor.u32 1.1754944e-38, %v1283
  %v1285 = vsel %vm1282, %v1284, %v1280
  %v1286 = vrcp.pop %v1242
  %v1287 = vmul.f32 %v1242, %v1286
  %v1288 = vsub.f32 1.0, %v1287
  %v1289 = vmul.f32 %v1286, %v1288
  %v1290 = vadd.f32 %v1286, %v1289
  %vm1291 = vweird.f32 %v1242
  %vm1292 = vweird.f32 %v1286
  %vm1293 = vmor %vm1291, %vm1292
  %v1294 = vsel %vm1293, %v1286, %v1290
  %v1295 = vand.u32 2147483647, %v1242
  %vm1296 = vcmp.eq.f32.partialorder %v1295, 8.507059e+37
  %v1297 = vand.u32 %v1242, 2147483648
  %v1298 = vor.u32 1.1754944e-38, %v1297
  %v1299 = vsel %vm1296, %v1298, %v1294
  %v1300 = vrcp.pop %v1245
  %v1301 = vmul.f32 %v1245, %v1300
  %v1302 = vsub.f32 1.0, %v1301
  %v1303 = vmul.f32 %v1300, %v1302
  %v1304 = vadd.f32 %v1300, %v1303
  %vm1305 = vweird.f32 %v1245
  %vm1306 = vweird.f32 %v1300
  %vm1307 = vmor %vm1305, %vm1306
  %v1308 = vsel %vm1307, %v1300, %v1304
  %v1309 = vand.u32 2147483647, %v1245
  %vm1310 = vcmp.eq.f32.partialorder %v1309, 8.507059e+37
  %v1311 = vand.u32 %v1245, 2147483648
  %v1312 = vor.u32 1.1754944e-38, %v1311
  %v1313 = vsel %vm1310, %v1312, %v1308
  %v1314 = vrcp.pop %v1248
  %v1315 = vmul.f32 %v1248, %v1314
  %v1316 = vsub.f32 1.0, %v1315
  %v1317 = vmul.f32 %v1314, %v1316
  %v1318 = vadd.f32 %v1314, %v1317
  %vm1319 = vweird.f32 %v1248
  %vm1320 = vweird.f32 %v1314
  %vm1321 = vmor %vm1319, %vm1320
  %v1322 = vsel %vm1321, %v1314, %v1318
  %v1323 = vand.u32 2147483647, %v1248
  %vm1324 = vcmp.eq.f32.partialorder %v1323, 8.507059e+37
  %v1325 = vand.u32 %v1248, 2147483648
  %v1326 = vor.u32 1.1754944e-38, %v1325
  %v1327 = vsel %vm1324, %v1326, %v1322
  %v1328 = vrcp.pop %v1251
  %v1329 = vmul.f32 %v1251, %v1328
  %v1330 = vsub.f32 1.0, %v1329
  %v1331 = vmul.f32 %v1328, %v1330
  %v1332 = vadd.f32 %v1328, %v1331
  %vm1333 = vweird.f32 %v1251
  %vm1334 = vweird.f32 %v1328
  %vm1335 = vmor %vm1333, %vm1334
  %v1336 = vsel %vm1335, %v1328, %v1332
  %v1337 = vand.u32 2147483647, %v1251
  %vm1338 = vcmp.eq.f32.partialorder %v1337, 8.507059e+37
  %v1339 = vand.u32 %v1251, 2147483648
  %v1340 = vor.u32 1.1754944e-38, %v1339
  %v1341 = vsel %vm1338, %v1340, %v1336
  %v1342 = vrcp.pop %v1254
  %v1343 = vmul.f32 %v1254, %v1342
  %v1344 = vsub.f32 1.0, %v1343
  %v1345 = vmul.f32 %v1342, %v1344
  %v1346 = vadd.f32 %v1342, %v1345
  %vm1347 = vweird.f32 %v1254
  %vm1348 = vweird.f32 %v1342
  %vm1349 = vmor %vm1347, %vm1348
  %v1350 = vsel %vm1349, %v1342, %v1346
  %v1351 = vand.u32 2147483647, %v1254
  %vm1352 = vcmp.eq.f32.partialorder %v1351, 8.507059e+37
  %v1353 = vand.u32 %v1254, 2147483648
  %v1354 = vor.u32 1.1754944e-38, %v1353
  %v1355 = vsel %vm1352, %v1354, %v1350
  %v1356 = vrcp.pop %v1257
  %v1357 = vmul.f32 %v1257, %v1356
  %v1358 = vsub.f32 1.0, %v1357
  %v1359 = vmul.f32 %v1356, %v1358
  %v1360 = vadd.f32 %v1356, %v1359
  %vm1361 = vweird.f32 %v1257
  %vm1362 = vweird.f32 %v1356
  %vm1363 = vmor %vm1361, %vm1362
  %v1364 = vsel %vm1363, %v1356, %v1360
  %v1365 = vand.u32 2147483647, %v1257
  %vm1366 = vcmp.eq.f32.partialorder %v1365, 8.507059e+37
  %v1367 = vand.u32 %v1257, 2147483648
  %v1368 = vor.u32 1.1754944e-38, %v1367
  %v1369 = vsel %vm1366, %v1368, %v1364
  %v1370 = vmul.f32 %v1219, %v1271
  %v1371 = vmul.f32 %v1221, %v1285
  %v1372 = vmul.f32 %v1223, %v1299
  %v1373 = vmul.f32 %v1225, %v1313
  %v1374 = vmul.f32 %v1227, %v1327
  %v1375 = vmul.f32 %v1229, %v1341
  %v1376 = vmul.f32 %v1231, %v1355
  %v1377 = vmul.f32 %v1233, %v1369
  %v1378 = vpack.c.bf16 %v1371, %v1370
  %v1379 = vpack.c.bf16 %v1373, %v1372
  %v1380 = vpack.c.bf16 %v1375, %v1374
  %v1381 = vpack.c.bf16 %v1377, %v1376
  %1382 = vrot.lane.b32.xlu0 %v758, 112
  %v1383 = vpop.permute.xlu0 %1382
  %1384 = vrot.lane.b32.xlu0 %v759, 112
  %v1385 = vpop.permute.xlu0 %1384
  %1386 = vrot.lane.b32.xlu0 %v760, 112
  %v1387 = vpop.permute.xlu0 %1386
  %1388 = vrot.lane.b32.xlu0 %v761, 112
  %v1389 = vpop.permute.xlu0 %1388
  %v1395 = vsel %vm545, %v1378, 0
  %v1398 = vsel %vm545, %v1379, 0
  %v1401 = vsel %vm545, %v1380, 0
  %v1404 = vsel %vm545, %v1381, 0
  %1406 = vmatpush.bf16.msra.mxu0 0
  %1407 = vmatpush.bf16.msra.mxu0 0
  %1408 = vmatpush.bf16.msra.mxu0 0
  %1409 = vmatpush.bf16.msra.mxu0 0
  %1410 = vmatpush.bf16.msra.mxu0 %v1389
  %1411 = vmatpush.bf16.msra.mxu0 %v1387
  %1412 = vmatpush.bf16.msra.mxu0 %v1385
  %1413 = vmatpush.bf16.msra.mxu0 %v1383
  %1414 = vmatmul.bf16.gmra.mxu0 %v1395
  %v1415 = vpop.f32.mrf.mxu0
  %v1416 = vadd.f32 0.0, %v1415
  %v1417 = vpop.f32.mrf.mxu0
  %v1418 = vadd.f32 0.0, %v1417
  %1419 = vmatmul.bf16.gmra.mxu0 %v1398
  %v1420 = vpop.f32.mrf.mxu0
  %v1421 = vadd.f32 0.0, %v1420
  %v1422 = vpop.f32.mrf.mxu0
  %v1423 = vadd.f32 0.0, %v1422
  %1424 = vmatmul.bf16.gmra.mxu0 %v1401
  %v1425 = vpop.f32.mrf.mxu0
  %v1426 = vadd.f32 0.0, %v1425
  %v1427 = vpop.f32.mrf.mxu0
  %v1428 = vadd.f32 0.0, %v1427
  %1429 = vmatmul.bf16.gmra.mxu0 %v1404
  %v1430 = vpop.f32.mrf.mxu0
  %v1431 = vadd.f32 0.0, %v1430
  %v1432 = vpop.f32.mrf.mxu0
  %v1433 = vadd.f32 0.0, %v1432
  %1434 = vdwg.mxu0
  %1435 = vset.pattern.permute.xlu0 3
  %1436 = vperm.xlu0 %1435, %v359
  %v1437 = vpop.permute.xlu0 %1436
  %1439 = vset.pattern.permute.xlu0 3
  %1440 = vperm.xlu0 %1439, %v362
  %v1441 = vpop.permute.xlu0 %1440
  %1443 = vset.pattern.permute.xlu0 3
  %1444 = vperm.xlu0 %1443, %v365
  %v1445 = vpop.permute.xlu0 %1444
  %1447 = vset.pattern.permute.xlu0 3
  %1448 = vperm.xlu0 %1447, %v368
  %v1449 = vpop.permute.xlu0 %1448
  %1451 = vset.pattern.permute.xlu0 3
  %1452 = vperm.xlu0 %1451, %v371
  %v1453 = vpop.permute.xlu0 %1452
  %1455 = vset.pattern.permute.xlu0 3
  %1456 = vperm.xlu0 %1455, %v374
  %v1457 = vpop.permute.xlu0 %1456
  %1459 = vset.pattern.permute.xlu0 3
  %1460 = vperm.xlu0 %1459, %v377
  %v1461 = vpop.permute.xlu0 %1460
  %1463 = vset.pattern.permute.xlu0 3
  %1464 = vperm.xlu0 %1463, %v380
  %v1465 = vpop.permute.xlu0 %1464
  %v1467 = vperm.slane %v398, 3
  %v1468 = vadd.f32 %v1437, %v1467
  %v1469 = vadd.f32 %v1441, %v1467
  %v1470 = vadd.f32 %v1445, %v1467
  %v1471 = vadd.f32 %v1449, %v1467
  %v1472 = vadd.f32 %v1453, %v1467
  %v1473 = vadd.f32 %v1457, %v1467
  %v1474 = vadd.f32 %v1461, %v1467
  %v1475 = vadd.f32 %v1465, %v1467
  %v1476 = vmul.f32 %v1468, 0.2
  %v1477 = vmul.f32 %v1469, 0.2
  %v1478 = vmul.f32 %v1470, 0.2
  %v1479 = vmul.f32 %v1471, 0.2
  %v1480 = vmul.f32 %v1472, 0.2
  %v1481 = vmul.f32 %v1473, 0.2
  %v1482 = vmul.f32 %v1474, 0.2
  %v1483 = vmul.f32 %v1475, 0.2
  %v1484 = vmax.f32 %v1468, %v1476
  %v1485 = vmax.f32 %v1469, %v1477
  %v1486 = vmax.f32 %v1470, %v1478
  %v1487 = vmax.f32 %v1471, %v1479
  %v1488 = vmax.f32 %v1472, %v1480
  %v1489 = vmax.f32 %v1473, %v1481
  %v1490 = vmax.f32 %v1474, %v1482
  %v1491 = vmax.f32 %v1475, %v1483
  %v1492 = vsel %vm529, %v1484, -1e+30
  %v1493 = vsel %vm530, %v1485, -1e+30
  %v1494 = vsel %vm531, %v1486, -1e+30
  %v1495 = vsel %vm532, %v1487, -1e+30
  %v1496 = vsel %vm533, %v1488, -1e+30
  %v1497 = vsel %vm534, %v1489, -1e+30
  %v1498 = vsel %vm535, %v1490, -1e+30
  %v1499 = vsel %vm536, %v1491, -1e+30
  %v1500 = vsel %vm545, %v1492, -inf
  %1501 = vmax.xlane.f32.xlu0 %v1500
  %v1502 = vpop.xlane.xlu0 %1501
  %v1503 = vsel %vm545, %v1493, -inf
  %1504 = vmax.xlane.f32.xlu0 %v1503
  %v1505 = vpop.xlane.xlu0 %1504
  %v1506 = vsel %vm545, %v1494, -inf
  %1507 = vmax.xlane.f32.xlu0 %v1506
  %v1508 = vpop.xlane.xlu0 %1507
  %v1509 = vsel %vm545, %v1495, -inf
  %1510 = vmax.xlane.f32.xlu0 %v1509
  %v1511 = vpop.xlane.xlu0 %1510
  %v1512 = vsel %vm545, %v1496, -inf
  %1513 = vmax.xlane.f32.xlu0 %v1512
  %v1514 = vpop.xlane.xlu0 %1513
  %v1515 = vsel %vm545, %v1497, -inf
  %1516 = vmax.xlane.f32.xlu0 %v1515
  %v1517 = vpop.xlane.xlu0 %1516
  %v1518 = vsel %vm545, %v1498, -inf
  %1519 = vmax.xlane.f32.xlu0 %v1518
  %v1520 = vpop.xlane.xlu0 %1519
  %v1521 = vsel %vm545, %v1499, -inf
  %1522 = vmax.xlane.f32.xlu0 %v1521
  %v1523 = vpop.xlane.xlu0 %1522
  %v1524 = vsub.f32 %v1492, %v1502
  %v1525 = vsub.f32 %v1493, %v1505
  %v1526 = vsub.f32 %v1494, %v1508
  %v1527 = vsub.f32 %v1495, %v1511
  %v1528 = vsub.f32 %v1496, %v1514
  %v1529 = vsub.f32 %v1497, %v1517
  %v1530 = vsub.f32 %v1498, %v1520
  %v1531 = vsub.f32 %v1499, %v1523
  %v1532 = vmul.f32 %v1524, 1.442695
  %v1533 = vpow.pop %v1532
  %v1534 = vmul.f32 %v1525, 1.442695
  %v1535 = vpow.pop %v1534
  %v1536 = vmul.f32 %v1526, 1.442695
  %v1537 = vpow.pop %v1536
  %v1538 = vmul.f32 %v1527, 1.442695
  %v1539 = vpow.pop %v1538
  %v1540 = vmul.f32 %v1528, 1.442695
  %v1541 = vpow.pop %v1540
  %v1542 = vmul.f32 %v1529, 1.442695
  %v1543 = vpow.pop %v1542
  %v1544 = vmul.f32 %v1530, 1.442695
  %v1545 = vpow.pop %v1544
  %v1546 = vmul.f32 %v1531, 1.442695
  %v1547 = vpow.pop %v1546
  %v1548 = vsel %vm545, %v1533, 0.0
  %1549 = vadd.xlane.f32.xlu0 %v1548
  %v1550 = vpop.xlane.xlu0 %1549
  %v1551 = vsel %vm545, %v1535, 0.0
  %1552 = vadd.xlane.f32.xlu0 %v1551
  %v1553 = vpop.xlane.xlu0 %1552
  %v1554 = vsel %vm545, %v1537, 0.0
  %1555 = vadd.xlane.f32.xlu0 %v1554
  %v1556 = vpop.xlane.xlu0 %1555
  %v1557 = vsel %vm545, %v1539, 0.0
  %1558 = vadd.xlane.f32.xlu0 %v1557
  %v1559 = vpop.xlane.xlu0 %1558
  %v1560 = vsel %vm545, %v1541, 0.0
  %1561 = vadd.xlane.f32.xlu0 %v1560
  %v1562 = vpop.xlane.xlu0 %1561
  %v1563 = vsel %vm545, %v1543, 0.0
  %1564 = vadd.xlane.f32.xlu0 %v1563
  %v1565 = vpop.xlane.xlu0 %1564
  %v1566 = vsel %vm545, %v1545, 0.0
  %1567 = vadd.xlane.f32.xlu0 %v1566
  %v1568 = vpop.xlane.xlu0 %1567
  %v1569 = vsel %vm545, %v1547, 0.0
  %1570 = vadd.xlane.f32.xlu0 %v1569
  %v1571 = vpop.xlane.xlu0 %1570
  %v1572 = vrcp.pop %v1550
  %v1573 = vmul.f32 %v1550, %v1572
  %v1574 = vsub.f32 1.0, %v1573
  %v1575 = vmul.f32 %v1572, %v1574
  %v1576 = vadd.f32 %v1572, %v1575
  %vm1577 = vweird.f32 %v1550
  %vm1578 = vweird.f32 %v1572
  %vm1579 = vmor %vm1577, %vm1578
  %v1580 = vsel %vm1579, %v1572, %v1576
  %v1581 = vand.u32 2147483647, %v1550
  %vm1582 = vcmp.eq.f32.partialorder %v1581, 8.507059e+37
  %v1583 = vand.u32 %v1550, 2147483648
  %v1584 = vor.u32 1.1754944e-38, %v1583
  %v1585 = vsel %vm1582, %v1584, %v1580
  %v1586 = vrcp.pop %v1553
  %v1587 = vmul.f32 %v1553, %v1586
  %v1588 = vsub.f32 1.0, %v1587
  %v1589 = vmul.f32 %v1586, %v1588
  %v1590 = vadd.f32 %v1586, %v1589
  %vm1591 = vweird.f32 %v1553
  %vm1592 = vweird.f32 %v1586
  %vm1593 = vmor %vm1591, %vm1592
  %v1594 = vsel %vm1593, %v1586, %v1590
  %v1595 = vand.u32 2147483647, %v1553
  %vm1596 = vcmp.eq.f32.partialorder %v1595, 8.507059e+37
  %v1597 = vand.u32 %v1553, 2147483648
  %v1598 = vor.u32 1.1754944e-38, %v1597
  %v1599 = vsel %vm1596, %v1598, %v1594
  %v1600 = vrcp.pop %v1556
  %v1601 = vmul.f32 %v1556, %v1600
  %v1602 = vsub.f32 1.0, %v1601
  %v1603 = vmul.f32 %v1600, %v1602
  %v1604 = vadd.f32 %v1600, %v1603
  %vm1605 = vweird.f32 %v1556
  %vm1606 = vweird.f32 %v1600
  %vm1607 = vmor %vm1605, %vm1606
  %v1608 = vsel %vm1607, %v1600, %v1604
  %v1609 = vand.u32 2147483647, %v1556
  %vm1610 = vcmp.eq.f32.partialorder %v1609, 8.507059e+37
  %v1611 = vand.u32 %v1556, 2147483648
  %v1612 = vor.u32 1.1754944e-38, %v1611
  %v1613 = vsel %vm1610, %v1612, %v1608
  %v1614 = vrcp.pop %v1559
  %v1615 = vmul.f32 %v1559, %v1614
  %v1616 = vsub.f32 1.0, %v1615
  %v1617 = vmul.f32 %v1614, %v1616
  %v1618 = vadd.f32 %v1614, %v1617
  %vm1619 = vweird.f32 %v1559
  %vm1620 = vweird.f32 %v1614
  %vm1621 = vmor %vm1619, %vm1620
  %v1622 = vsel %vm1621, %v1614, %v1618
  %v1623 = vand.u32 2147483647, %v1559
  %vm1624 = vcmp.eq.f32.partialorder %v1623, 8.507059e+37
  %v1625 = vand.u32 %v1559, 2147483648
  %v1626 = vor.u32 1.1754944e-38, %v1625
  %v1627 = vsel %vm1624, %v1626, %v1622
  %v1628 = vrcp.pop %v1562
  %v1629 = vmul.f32 %v1562, %v1628
  %v1630 = vsub.f32 1.0, %v1629
  %v1631 = vmul.f32 %v1628, %v1630
  %v1632 = vadd.f32 %v1628, %v1631
  %vm1633 = vweird.f32 %v1562
  %vm1634 = vweird.f32 %v1628
  %vm1635 = vmor %vm1633, %vm1634
  %v1636 = vsel %vm1635, %v1628, %v1632
  %v1637 = vand.u32 2147483647, %v1562
  %vm1638 = vcmp.eq.f32.partialorder %v1637, 8.507059e+37
  %v1639 = vand.u32 %v1562, 2147483648
  %v1640 = vor.u32 1.1754944e-38, %v1639
  %v1641 = vsel %vm1638, %v1640, %v1636
  %v1642 = vrcp.pop %v1565
  %v1643 = vmul.f32 %v1565, %v1642
  %v1644 = vsub.f32 1.0, %v1643
  %v1645 = vmul.f32 %v1642, %v1644
  %v1646 = vadd.f32 %v1642, %v1645
  %vm1647 = vweird.f32 %v1565
  %vm1648 = vweird.f32 %v1642
  %vm1649 = vmor %vm1647, %vm1648
  %v1650 = vsel %vm1649, %v1642, %v1646
  %v1651 = vand.u32 2147483647, %v1565
  %vm1652 = vcmp.eq.f32.partialorder %v1651, 8.507059e+37
  %v1653 = vand.u32 %v1565, 2147483648
  %v1654 = vor.u32 1.1754944e-38, %v1653
  %v1655 = vsel %vm1652, %v1654, %v1650
  %v1656 = vrcp.pop %v1568
  %v1657 = vmul.f32 %v1568, %v1656
  %v1658 = vsub.f32 1.0, %v1657
  %v1659 = vmul.f32 %v1656, %v1658
  %v1660 = vadd.f32 %v1656, %v1659
  %vm1661 = vweird.f32 %v1568
  %vm1662 = vweird.f32 %v1656
  %vm1663 = vmor %vm1661, %vm1662
  %v1664 = vsel %vm1663, %v1656, %v1660
  %v1665 = vand.u32 2147483647, %v1568
  %vm1666 = vcmp.eq.f32.partialorder %v1665, 8.507059e+37
  %v1667 = vand.u32 %v1568, 2147483648
  %v1668 = vor.u32 1.1754944e-38, %v1667
  %v1669 = vsel %vm1666, %v1668, %v1664
  %v1670 = vrcp.pop %v1571
  %v1671 = vmul.f32 %v1571, %v1670
  %v1672 = vsub.f32 1.0, %v1671
  %v1673 = vmul.f32 %v1670, %v1672
  %v1674 = vadd.f32 %v1670, %v1673
  %vm1675 = vweird.f32 %v1571
  %vm1676 = vweird.f32 %v1670
  %vm1677 = vmor %vm1675, %vm1676
  %v1678 = vsel %vm1677, %v1670, %v1674
  %v1679 = vand.u32 2147483647, %v1571
  %vm1680 = vcmp.eq.f32.partialorder %v1679, 8.507059e+37
  %v1681 = vand.u32 %v1571, 2147483648
  %v1682 = vor.u32 1.1754944e-38, %v1681
  %v1683 = vsel %vm1680, %v1682, %v1678
  %v1684 = vmul.f32 %v1533, %v1585
  %v1685 = vmul.f32 %v1535, %v1599
  %v1686 = vmul.f32 %v1537, %v1613
  %v1687 = vmul.f32 %v1539, %v1627
  %v1688 = vmul.f32 %v1541, %v1641
  %v1689 = vmul.f32 %v1543, %v1655
  %v1690 = vmul.f32 %v1545, %v1669
  %v1691 = vmul.f32 %v1547, %v1683
  %v1692 = vpack.c.bf16 %v1685, %v1684
  %v1693 = vpack.c.bf16 %v1687, %v1686
  %v1694 = vpack.c.bf16 %v1689, %v1688
  %v1695 = vpack.c.bf16 %v1691, %v1690
  %1696 = vrot.lane.b32.xlu0 %v758, 104
  %v1697 = vpop.permute.xlu0 %1696
  %1698 = vrot.lane.b32.xlu0 %v759, 104
  %v1699 = vpop.permute.xlu0 %1698
  %1700 = vrot.lane.b32.xlu0 %v760, 104
  %v1701 = vpop.permute.xlu0 %1700
  %1702 = vrot.lane.b32.xlu0 %v761, 104
  %v1703 = vpop.permute.xlu0 %1702
  %v1709 = vsel %vm545, %v1692, 0
  %v1712 = vsel %vm545, %v1693, 0
  %v1715 = vsel %vm545, %v1694, 0
  %v1718 = vsel %vm545, %v1695, 0
  %1720 = vmatpush.bf16.msra.mxu0 0
  %1721 = vmatpush.bf16.msra.mxu0 0
  %1722 = vmatpush.bf16.msra.mxu0 0
  %1723 = vmatpush.bf16.msra.mxu0 0
  %1724 = vmatpush.bf16.msra.mxu0 %v1703
  %1725 = vmatpush.bf16.msra.mxu0 %v1701
  %1726 = vmatpush.bf16.msra.mxu0 %v1699
  %1727 = vmatpush.bf16.msra.mxu0 %v1697
  %1728 = vmatmul.bf16.gmra.mxu0 %v1709
  %v1729 = vpop.f32.mrf.mxu0
  %v1730 = vadd.f32 0.0, %v1729
  %v1731 = vpop.f32.mrf.mxu0
  %v1732 = vadd.f32 0.0, %v1731
  %1733 = vmatmul.bf16.gmra.mxu0 %v1712
  %v1734 = vpop.f32.mrf.mxu0
  %v1735 = vadd.f32 0.0, %v1734
  %v1736 = vpop.f32.mrf.mxu0
  %v1737 = vadd.f32 0.0, %v1736
  %1738 = vmatmul.bf16.gmra.mxu0 %v1715
  %v1739 = vpop.f32.mrf.mxu0
  %v1740 = vadd.f32 0.0, %v1739
  %v1741 = vpop.f32.mrf.mxu0
  %v1742 = vadd.f32 0.0, %v1741
  %1743 = vmatmul.bf16.gmra.mxu0 %v1718
  %v1744 = vpop.f32.mrf.mxu0
  %v1745 = vadd.f32 0.0, %v1744
  %v1746 = vpop.f32.mrf.mxu0
  %v1747 = vadd.f32 0.0, %v1746
  %1748 = vdwg.mxu0
  %1757 = vrot.lane.b32.xlu0 %v1102, 8
  %v1758 = vpop.permute.xlu0 %1757
  %1759 = vrot.lane.b32.xlu0 %v1104, 8
  %v1760 = vpop.permute.xlu0 %1759
  %1761 = vrot.lane.b32.xlu0 %v1107, 8
  %v1762 = vpop.permute.xlu0 %1761
  %1763 = vrot.lane.b32.xlu0 %v1109, 8
  %v1764 = vpop.permute.xlu0 %1763
  %1765 = vrot.lane.b32.xlu0 %v1112, 8
  %v1766 = vpop.permute.xlu0 %1765
  %1767 = vrot.lane.b32.xlu0 %v1114, 8
  %v1768 = vpop.permute.xlu0 %1767
  %1769 = vrot.lane.b32.xlu0 %v1117, 8
  %v1770 = vpop.permute.xlu0 %1769
  %1771 = vrot.lane.b32.xlu0 %v1119, 8
  %v1772 = vpop.permute.xlu0 %1771
  %1789 = vrot.lane.b32.xlu0 %v1416, 16
  %v1790 = vpop.permute.xlu0 %1789
  %1791 = vrot.lane.b32.xlu0 %v1418, 16
  %v1792 = vpop.permute.xlu0 %1791
  %1793 = vrot.lane.b32.xlu0 %v1421, 16
  %v1794 = vpop.permute.xlu0 %1793
  %1795 = vrot.lane.b32.xlu0 %v1423, 16
  %v1796 = vpop.permute.xlu0 %1795
  %1797 = vrot.lane.b32.xlu0 %v1426, 16
  %v1798 = vpop.permute.xlu0 %1797
  %1799 = vrot.lane.b32.xlu0 %v1428, 16
  %v1800 = vpop.permute.xlu0 %1799
  %1801 = vrot.lane.b32.xlu0 %v1431, 16
  %v1802 = vpop.permute.xlu0 %1801
  %1803 = vrot.lane.b32.xlu0 %v1433, 16
  %v1804 = vpop.permute.xlu0 %1803
  %1821 = vrot.lane.b32.xlu0 %v1730, 24
  %v1822 = vpop.permute.xlu0 %1821
  %1823 = vrot.lane.b32.xlu0 %v1732, 24
  %v1824 = vpop.permute.xlu0 %1823
  %1825 = vrot.lane.b32.xlu0 %v1735, 24
  %v1826 = vpop.permute.xlu0 %1825
  %1827 = vrot.lane.b32.xlu0 %v1737, 24
  %v1828 = vpop.permute.xlu0 %1827
  %1829 = vrot.lane.b32.xlu0 %v1740, 24
  %v1830 = vpop.permute.xlu0 %1829
  %1831 = vrot.lane.b32.xlu0 %v1742, 24
  %v1832 = vpop.permute.xlu0 %1831
  %1833 = vrot.lane.b32.xlu0 %v1745, 24
  %v1834 = vpop.permute.xlu0 %1833
  %1835 = vrot.lane.b32.xlu0 %v1747, 24
  %v1836 = vpop.permute.xlu0 %1835
  %vm1845 = vcmask 64512
  %v1846 = vsel %vm1845, %v788, %v1758
  %v1847 = vsel %vm1845, %v790, %v1760
  %v1848 = vsel %vm1845, %v793, %v1762
  %v1849 = vsel %vm1845, %v795, %v1764
  %v1850 = vsel %vm1845, %v798, %v1766
  %v1851 = vsel %vm1845, %v800, %v1768
  %v1852 = vsel %vm1845, %v803, %v1770
  %v1853 = vsel %vm1845, %v805, %v1772
  %vm1854 = vcmask 130048
  %v1855 = vsel %vm1854, %v1846, %v1790
  %v1856 = vsel %vm1854, %v1847, %v1792
  %v1857 = vsel %vm1854, %v1848, %v1794
  %v1858 = vsel %vm1854, %v1849, %v1796
  %v1859 = vsel %vm1854, %v1850, %v1798
  %v1860 = vsel %vm1854, %v1851, %v1800
  %v1861 = vsel %vm1854, %v1852, %v1802
  %v1862 = vsel %vm1854, %v1853, %v1804
  %vm1863 = vcmask 195584
  %v1864 = vsel %vm1863, %v1855, %v1822
  %v1865 = vsel %vm1863, %v1856, %v1824
  %v1866 = vsel %vm1863, %v1857, %v1826
  %v1867 = vsel %vm1863, %v1858, %v1828
  %v1868 = vsel %vm1863, %v1859, %v1830
  %v1869 = vsel %vm1863, %v1860, %v1832
  %v1870 = vsel %vm1863, %v1861, %v1834
  %v1871 = vsel %vm1863, %v1862, %v1836
  %v1872 = vld [vmem:[%s9] sm:$0x1]
  %v1874 = vperm.slane %v1872, 0
  %v1876 = vadd.f32 %v1864, %v1874
  %v1877 = vadd.f32 %v1865, %v1874
  %v1878 = vadd.f32 %v1866, %v1874
  %v1879 = vadd.f32 %v1867, %v1874
  %v1880 = vadd.f32 %v1868, %v1874
  %v1881 = vadd.f32 %v1869, %v1874
  %v1882 = vadd.f32 %v1870, %v1874
  %v1883 = vadd.f32 %v1871, %v1874
  %v1884 = vld [vmem:[%s4] sm:$0xff]
  %v1885 = vld [vmem:[%s4 + $0x8] sm:$0xff]
  %v1886 = vld [vmem:[%s4 + $0x10] sm:$0xff]
  %v1887 = vld [vmem:[%s4 + $0x18] sm:$0xff]
  %v1888 = vpack.c.bf16 %v1885, %v1884
  %v1889 = vpack.c.bf16 %v1887, %v1886
  %v1890 = vld [vmem:[%s5] sm:$0x1]
  %v1892 = vperm.slane %v1890, 0
  %1894 = vmatpush.bf16.msra.mxu0 0
  %1895 = vmatpush.bf16.msra.mxu0 0
  %1896 = vmatpush.bf16.msra.mxu0 0
  %1897 = vmatpush.bf16.msra.mxu0 0
  %1898 = vmatpush.bf16.msra.mxu0 0
  %1899 = vmatpush.bf16.msra.mxu0 0
  %1900 = vmatpush.bf16.msra.mxu0 %v1889
  %1901 = vmatpush.bf16.msra.mxu0 %v1888
  %1902 = vmatmul.bf16.gmra.mxu0 %v220
  %v1903 = vpop.f32.mrf.mxu0
  %v1904 = vadd.f32 %v1892, %v1903
  %v1905 = vpop.f32.mrf.mxu0
  %v1906 = vadd.f32 %v1892, %v1905
  %1907 = vmatmul.bf16.gmra.mxu0 %v223
  %v1908 = vpop.f32.mrf.mxu0
  %v1909 = vadd.f32 %v1892, %v1908
  %v1910 = vpop.f32.mrf.mxu0
  %v1911 = vadd.f32 %v1892, %v1910
  %1912 = vmatmul.bf16.gmra.mxu0 %v226
  %v1913 = vpop.f32.mrf.mxu0
  %v1914 = vadd.f32 %v1892, %v1913
  %v1915 = vpop.f32.mrf.mxu0
  %v1916 = vadd.f32 %v1892, %v1915
  %1917 = vmatmul.bf16.gmra.mxu0 %v229
  %v1918 = vpop.f32.mrf.mxu0
  %v1919 = vadd.f32 %v1892, %v1918
  %v1920 = vpop.f32.mrf.mxu0
  %v1921 = vadd.f32 %v1892, %v1920
  %1922 = vdwg.mxu0
  %v1923 = vadd.f32 %v1904, %v1876
  %v1924 = vadd.f32 %v1906, %v1877
  %v1925 = vadd.f32 %v1909, %v1878
  %v1926 = vadd.f32 %v1911, %v1879
  %v1927 = vadd.f32 %v1914, %v1880
  %v1928 = vadd.f32 %v1916, %v1881
  %v1929 = vadd.f32 %v1919, %v1882
  %v1930 = vadd.f32 %v1921, %v1883
  %v1931 = vmax.f32 %v1923, 0.0
  %v1932 = vmax.f32 %v1924, 0.0
  %v1933 = vmax.f32 %v1925, 0.0
  %v1934 = vmax.f32 %v1926, 0.0
  %v1935 = vmax.f32 %v1927, 0.0
  %v1936 = vmax.f32 %v1928, 0.0
  %v1937 = vmax.f32 %v1929, 0.0
  %v1938 = vmax.f32 %v1930, 0.0
  %v1939 = vsel %vm98, %v1931, 0.0
  %v1940 = vsel %vm98, %v1932, 0.0
  %v1941 = vadd.f32 %v1939, %v1940
  %v1942 = vsel %vm98, %v1933, 0.0
  %v1943 = vadd.f32 %v1941, %v1942
  %v1944 = vsel %vm98, %v1934, 0.0
  %v1945 = vadd.f32 %v1943, %v1944
  %v1946 = vsel %vm98, %v1935, 0.0
  %v1947 = vadd.f32 %v1945, %v1946
  %v1948 = vsel %vm98, %v1936, 0.0
  %v1949 = vadd.f32 %v1947, %v1948
  %v1950 = vsel %vm98, %v1937, 0.0
  %v1951 = vadd.f32 %v1949, %v1950
  %v1952 = vsel %vm98, %v1938, 0.0
  %v1953 = vadd.f32 %v1951, %v1952
  %v1954 = vrot.slane %v1953, 4
  %v1955 = vadd.f32 %v1953, %v1954
  %v1956 = vrot.slane %v1955, 2
  %v1957 = vadd.f32 %v1955, %v1956
  %v1958 = vrot.slane %v1957, 1
  %v1959 = vadd.f32 %v1957, %v1958
  %v1960 = vmul.f32 %v1959, %v126
  %v1961 = vsub.f32 %v1931, %v1960
  %v1962 = vsub.f32 %v1932, %v1960
  %v1963 = vsub.f32 %v1933, %v1960
  %v1964 = vsub.f32 %v1934, %v1960
  %v1965 = vsub.f32 %v1935, %v1960
  %v1966 = vsub.f32 %v1936, %v1960
  %v1967 = vsub.f32 %v1937, %v1960
  %v1968 = vsub.f32 %v1938, %v1960
  %v1969 = vmul.f32 %v1961, %v1961
  %v1970 = vmul.f32 %v1962, %v1962
  %v1971 = vmul.f32 %v1963, %v1963
  %v1972 = vmul.f32 %v1964, %v1964
  %v1973 = vmul.f32 %v1965, %v1965
  %v1974 = vmul.f32 %v1966, %v1966
  %v1975 = vmul.f32 %v1967, %v1967
  %v1976 = vmul.f32 %v1968, %v1968
  %v1977 = vsel %vm98, %v1969, 0.0
  %v1978 = vsel %vm98, %v1970, 0.0
  %v1979 = vadd.f32 %v1977, %v1978
  %v1980 = vsel %vm98, %v1971, 0.0
  %v1981 = vadd.f32 %v1979, %v1980
  %v1982 = vsel %vm98, %v1972, 0.0
  %v1983 = vadd.f32 %v1981, %v1982
  %v1984 = vsel %vm98, %v1973, 0.0
  %v1985 = vadd.f32 %v1983, %v1984
  %v1986 = vsel %vm98, %v1974, 0.0
  %v1987 = vadd.f32 %v1985, %v1986
  %v1988 = vsel %vm98, %v1975, 0.0
  %v1989 = vadd.f32 %v1987, %v1988
  %v1990 = vsel %vm98, %v1976, 0.0
  %v1991 = vadd.f32 %v1989, %v1990
  %v1992 = vrot.slane %v1991, 4
  %v1993 = vadd.f32 %v1991, %v1992
  %v1994 = vrot.slane %v1993, 2
  %v1995 = vadd.f32 %v1993, %v1994
  %v1996 = vrot.slane %v1995, 1
  %v1997 = vadd.f32 %v1995, %v1996
  %v1998 = vmul.f32 %v1997, %v126
  %v1999 = vadd.f32 %v1998, 1e-05
  %v2000 = vrsqrt.pop %v1999
  %v2001 = vmul.f32 %v2000, %v1999
  %v2002 = vmul.f32 %v2001, %v2000
  %v2003 = vmul.f32 0.5, %v2002
  %v2004 = vsub.f32 1.5, %v2003
  %v2005 = vmul.f32 %v2000, %v2004
  %vm2006 = vweird.f32 %v1999
  %vm2007 = vweird.f32 %v2000
  %vm2008 = vmor %vm2006, %vm2007
  %v2009 = vsel %vm2008, %v2000, %v2005
  %v2010 = vmul.f32 %v1961, %v2009
  %v2011 = vmul.f32 %v1962, %v2009
  %v2012 = vmul.f32 %v1963, %v2009
  %v2013 = vmul.f32 %v1964, %v2009
  %v2014 = vmul.f32 %v1965, %v2009
  %v2015 = vmul.f32 %v1966, %v2009
  %v2016 = vmul.f32 %v1967, %v2009
  %v2017 = vmul.f32 %v1968, %v2009
  %v2018 = vld [vmem:[%s10] sm:$0x1]
  %v2020 = vperm.slane %v2018, 0
  %v2022 = vmul.f32 %v2010, %v2020
  %v2023 = vmul.f32 %v2011, %v2020
  %v2024 = vmul.f32 %v2012, %v2020
  %v2025 = vmul.f32 %v2013, %v2020
  %v2026 = vmul.f32 %v2014, %v2020
  %v2027 = vmul.f32 %v2015, %v2020
  %v2028 = vmul.f32 %v2016, %v2020
  %v2029 = vmul.f32 %v2017, %v2020
  %v2030 = vld [vmem:[%s11] sm:$0x1]
  %v2032 = vperm.slane %v2030, 0
  %v2034 = vadd.f32 %v2022, %v2032
  %v2035 = vadd.f32 %v2023, %v2032
  %v2036 = vadd.f32 %v2024, %v2032
  %v2037 = vadd.f32 %v2025, %v2032
  %v2038 = vadd.f32 %v2026, %v2032
  %v2039 = vadd.f32 %v2027, %v2032
  %v2040 = vadd.f32 %v2028, %v2032
  %v2041 = vadd.f32 %v2029, %v2032
  %v2042 = vpack.c.bf16 %v2035, %v2034
  %v2043 = vpack.c.bf16 %v2037, %v2036
  %v2044 = vpack.c.bf16 %v2039, %v2038
  %v2045 = vpack.c.bf16 %v2041, %v2040
  %v2046 = vld [vmem:[%s14] sm:$0xff]
  %v2047 = vld [vmem:[%s14 + $0x8] sm:$0xff]
  %v2048 = vld [vmem:[%s14 + $0x10] sm:$0xff]
  %v2049 = vld [vmem:[%s14 + $0x18] sm:$0xff]
  %v2050 = vpack.c.bf16 %v2047, %v2046
  %v2051 = vpack.c.bf16 %v2049, %v2048
  %v2053 = vsel %vm98, %v2042, 0
  %v2056 = vsel %vm98, %v2043, 0
  %v2059 = vsel %vm98, %v2044, 0
  %v2062 = vsel %vm98, %v2045, 0
  %2064 = vmatpush.bf16.msra.mxu0 0
  %2065 = vmatpush.bf16.msra.mxu0 0
  %2066 = vmatpush.bf16.msra.mxu0 0
  %2067 = vmatpush.bf16.msra.mxu0 0
  %2068 = vmatpush.bf16.msra.mxu0 0
  %2069 = vmatpush.bf16.msra.mxu0 0
  %2070 = vmatpush.bf16.msra.mxu0 %v2051
  %2071 = vmatpush.bf16.msra.mxu0 %v2050
  %2072 = vmatmul.bf16.gmra.mxu0 %v2053
  %v2073 = vpop.f32.mrf.mxu0
  %v2074 = vadd.f32 0.0, %v2073
  %v2075 = vpop.f32.mrf.mxu0
  %v2076 = vadd.f32 0.0, %v2075
  %2077 = vmatmul.bf16.gmra.mxu0 %v2056
  %v2078 = vpop.f32.mrf.mxu0
  %v2079 = vadd.f32 0.0, %v2078
  %v2080 = vpop.f32.mrf.mxu0
  %v2081 = vadd.f32 0.0, %v2080
  %2082 = vmatmul.bf16.gmra.mxu0 %v2059
  %v2083 = vpop.f32.mrf.mxu0
  %v2084 = vadd.f32 0.0, %v2083
  %v2085 = vpop.f32.mrf.mxu0
  %v2086 = vadd.f32 0.0, %v2085
  %2087 = vmatmul.bf16.gmra.mxu0 %v2062
  %v2088 = vpop.f32.mrf.mxu0
  %v2089 = vadd.f32 0.0, %v2088
  %v2090 = vpop.f32.mrf.mxu0
  %v2091 = vadd.f32 0.0, %v2090
  %2092 = vdwg.mxu0
  %v2093 = vpack.c.bf16 %v2074, %v2074
  %v2094 = vpack.c.bf16 %v2076, %v2076
  %v2095 = vpack.c.bf16 %v2079, %v2079
  %v2096 = vpack.c.bf16 %v2081, %v2081
  %v2097 = vpack.c.bf16 %v2084, %v2084
  %v2098 = vpack.c.bf16 %v2086, %v2086
  %v2099 = vpack.c.bf16 %v2089, %v2089
  %v2100 = vpack.c.bf16 %v2091, %v2091
  %v2101 = vld [vmem:[%s15] sm:$0xff]
  %v2102 = vld [vmem:[%s15 + $0x8] sm:$0xff]
  %v2103 = vld [vmem:[%s15 + $0x10] sm:$0xff]
  %v2104 = vld [vmem:[%s15 + $0x18] sm:$0xff]
  %v2106 = vsel %vm98, %v2074, 0
  %v2109 = vsel %vm98, %v2076, 0
  %v2112 = vsel %vm98, %v2079, 0
  %v2115 = vsel %vm98, %v2081, 0
  %v2118 = vsel %vm98, %v2084, 0
  %v2121 = vsel %vm98, %v2086, 0
  %v2124 = vsel %vm98, %v2089, 0
  %v2127 = vsel %vm98, %v2091, 0
  %2129 = vmatpush.msra.mxu0 0.0
  %2130 = vmatpush.msra.mxu0 0.0
  %2131 = vmatpush.msra.mxu0 0.0
  %2132 = vmatpush.msra.mxu0 0.0
  %2133 = vmatpush.msra.mxu0 0.0
  %2134 = vmatpush.msra.mxu0 0.0
  %2135 = vmatpush.msra.mxu0 0.0
  %2136 = vmatpush.msra.mxu0 0.0
  %2137 = vmatpush.msra.mxu0 0.0
  %2138 = vmatpush.msra.mxu0 0.0
  %2139 = vmatpush.msra.mxu0 0.0
  %2140 = vmatpush.msra.mxu0 0.0
  %2141 = vmatpush.msra.mxu0 %v2104
  %2142 = vmatpush.msra.mxu0 %v2103
  %2143 = vmatpush.msra.mxu0 %v2102
  %2144 = vmatpush.msra.mxu0 %v2101
  %2145 = vmatmul.f32.gmra.mxu0 %v2106
  %v2146 = vpop.f32.mrf.mxu0
  %v2147 = vadd.f32 0.0, %v2146
  %2148 = vmatmul.f32.gmra.mxu0 %v2109
  %v2149 = vpop.f32.mrf.mxu0
  %v2150 = vadd.f32 0.0, %v2149
  %2151 = vmatmul.f32.gmra.mxu0 %v2112
  %v2152 = vpop.f32.mrf.mxu0
  %v2153 = vadd.f32 0.0, %v2152
  %2154 = vmatmul.f32.gmra.mxu0 %v2115
  %v2155 = vpop.f32.mrf.mxu0
  %v2156 = vadd.f32 0.0, %v2155
  %2157 = vmatmul.f32.gmra.mxu0 %v2118
  %v2158 = vpop.f32.mrf.mxu0
  %v2159 = vadd.f32 0.0, %v2158
  %2160 = vmatmul.f32.gmra.mxu0 %v2121
  %v2161 = vpop.f32.mrf.mxu0
  %v2162 = vadd.f32 0.0, %v2161
  %2163 = vmatmul.f32.gmra.mxu0 %v2124
  %v2164 = vpop.f32.mrf.mxu0
  %v2165 = vadd.f32 0.0, %v2164
  %2166 = vmatmul.f32.gmra.mxu0 %v2127
  %v2167 = vpop.f32.mrf.mxu0
  %v2168 = vadd.f32 0.0, %v2167
  %2169 = vdwg.mxu0
  %v2170 = vld [vmem:[%s16] sm:$0xff]
  %v2171 = vld [vmem:[%s16 + $0x8] sm:$0xff]
  %v2172 = vld [vmem:[%s16 + $0x10] sm:$0xff]
  %v2173 = vld [vmem:[%s16 + $0x18] sm:$0xff]
  %2174 = vmatpush.msra.mxu0 0.0
  %2175 = vmatpush.msra.mxu0 0.0
  %2176 = vmatpush.msra.mxu0 0.0
  %2177 = vmatpush.msra.mxu0 0.0
  %2178 = vmatpush.msra.mxu0 0.0
  %2179 = vmatpush.msra.mxu0 0.0
  %2180 = vmatpush.msra.mxu0 0.0
  %2181 = vmatpush.msra.mxu0 0.0
  %2182 = vmatpush.msra.mxu0 0.0
  %2183 = vmatpush.msra.mxu0 0.0
  %2184 = vmatpush.msra.mxu0 0.0
  %2185 = vmatpush.msra.mxu0 0.0
  %2186 = vmatpush.msra.mxu0 %v2173
  %2187 = vmatpush.msra.mxu0 %v2172
  %2188 = vmatpush.msra.mxu0 %v2171
  %2189 = vmatpush.msra.mxu0 %v2170
  %2190 = vmatmul.f32.gmra.mxu0 %v2106
  %v2191 = vpop.f32.mrf.mxu0
  %v2192 = vadd.f32 0.0, %v2191
  %2193 = vmatmul.f32.gmra.mxu0 %v2109
  %v2194 = vpop.f32.mrf.mxu0
  %v2195 = vadd.f32 0.0, %v2194
  %2196 = vmatmul.f32.gmra.mxu0 %v2112
  %v2197 = vpop.f32.mrf.mxu0
  %v2198 = vadd.f32 0.0, %v2197
  %2199 = vmatmul.f32.gmra.mxu0 %v2115
  %v2200 = vpop.f32.mrf.mxu0
  %v2201 = vadd.f32 0.0, %v2200
  %2202 = vmatmul.f32.gmra.mxu0 %v2118
  %v2203 = vpop.f32.mrf.mxu0
  %v2204 = vadd.f32 0.0, %v2203
  %2205 = vmatmul.f32.gmra.mxu0 %v2121
  %v2206 = vpop.f32.mrf.mxu0
  %v2207 = vadd.f32 0.0, %v2206
  %2208 = vmatmul.f32.gmra.mxu0 %v2124
  %v2209 = vpop.f32.mrf.mxu0
  %v2210 = vadd.f32 0.0, %v2209
  %2211 = vmatmul.f32.gmra.mxu0 %v2127
  %v2212 = vpop.f32.mrf.mxu0
  %v2213 = vadd.f32 0.0, %v2212
  %2214 = vdwg.mxu0
  %2215 = vxpose.xlu0.b32.start [1/16] %v2147, 128
  %2216 = vxpose.xlu0.b32.cont [2/16] %v2150, 128
  %2217 = vxpose.xlu0.b32.cont [3/16] %v2153, 128
  %2218 = vxpose.xlu0.b32.cont [4/16] %v2156, 128
  %2219 = vxpose.xlu0.b32.cont [5/16] %v2159, 128
  %2220 = vxpose.xlu0.b32.cont [6/16] %v2162, 128
  %2221 = vxpose.xlu0.b32.cont [7/16] %v2165, 128
  %2222 = vxpose.xlu0.b32.cont [8/16] %v2168, 128
  %2223 = vxpose.xlu0.b32.cont [9/16] 0.0, 128
  %2224 = vxpose.xlu0.b32.cont [10/16] 0.0, 128
  %2225 = vxpose.xlu0.b32.cont [11/16] 0.0, 128
  %2226 = vxpose.xlu0.b32.cont [12/16] 0.0, 128
  %2227 = vxpose.xlu0.b32.cont [13/16] 0.0, 128
  %2228 = vxpose.xlu0.b32.cont [14/16] 0.0, 128
  %2229 = vxpose.xlu0.b32.cont [15/16] 0.0, 128
  %2230 = vxpose.xlu0.b32.end [16/16] 0.0, 128
  %v2231 = vpop.trf.xlu0
  %v2232 = vpop.trf.xlu0
  %v2233 = vpop.trf.xlu0
  %v2234 = vpop.trf.xlu0
  %v2235 = vpop.trf.xlu0
  %v2236 = vpop.trf.xlu0
  %v2237 = vpop.trf.xlu0
  %v2238 = vpop.trf.xlu0
  %v2239 = vpop.trf.xlu0
  %v2240 = vpop.trf.xlu0
  %v2241 = vpop.trf.xlu0
  %v2242 = vpop.trf.xlu0
  %v2243 = vpop.trf.xlu0
  %v2244 = vpop.trf.xlu0
  %v2245 = vpop.trf.xlu0
  %v2246 = vpop.trf.xlu0
  %2248 = vset.pattern.permute.xlu0 0
  %2249 = vperm.xlu0 %2248, %v2192
  %v2250 = vpop.permute.xlu0 %2249
  %2253 = vset.pattern.permute.xlu0 0
  %2254 = vperm.xlu0 %2253, %v2195
  %v2255 = vpop.permute.xlu0 %2254
  %2258 = vset.pattern.permute.xlu0 0
  %2259 = vperm.xlu0 %2258, %v2198
  %v2260 = vpop.permute.xlu0 %2259
  %2263 = vset.pattern.permute.xlu0 0
  %2264 = vperm.xlu0 %2263, %v2201
  %v2265 = vpop.permute.xlu0 %2264
  %2268 = vset.pattern.permute.xlu0 0
  %2269 = vperm.xlu0 %2268, %v2204
  %v2270 = vpop.permute.xlu0 %2269
  %2273 = vset.pattern.permute.xlu0 0
  %2274 = vperm.xlu0 %2273, %v2207
  %v2275 = vpop.permute.xlu0 %2274
  %2278 = vset.pattern.permute.xlu0 0
  %2279 = vperm.xlu0 %2278, %v2210
  %v2280 = vpop.permute.xlu0 %2279
  %2283 = vset.pattern.permute.xlu0 0
  %2284 = vperm.xlu0 %2283, %v2213
  %v2285 = vpop.permute.xlu0 %2284
  %v2287 = vperm.slane %v2231, 0
  %v2288 = vadd.f32 %v2250, %v2287
  %v2289 = vadd.f32 %v2255, %v2287
  %v2290 = vadd.f32 %v2260, %v2287
  %v2291 = vadd.f32 %v2265, %v2287
  %v2292 = vadd.f32 %v2270, %v2287
  %v2293 = vadd.f32 %v2275, %v2287
  %v2294 = vadd.f32 %v2280, %v2287
  %v2295 = vadd.f32 %v2285, %v2287
  %v2296 = vmul.f32 %v2288, 0.2
  %v2297 = vmul.f32 %v2289, 0.2
  %v2298 = vmul.f32 %v2290, 0.2
  %v2299 = vmul.f32 %v2291, 0.2
  %v2300 = vmul.f32 %v2292, 0.2
  %v2301 = vmul.f32 %v2293, 0.2
  %v2302 = vmul.f32 %v2294, 0.2
  %v2303 = vmul.f32 %v2295, 0.2
  %v2304 = vmax.f32 %v2288, %v2296
  %v2305 = vmax.f32 %v2289, %v2297
  %v2306 = vmax.f32 %v2290, %v2298
  %v2307 = vmax.f32 %v2291, %v2299
  %v2308 = vmax.f32 %v2292, %v2300
  %v2309 = vmax.f32 %v2293, %v2301
  %v2310 = vmax.f32 %v2294, %v2302
  %v2311 = vmax.f32 %v2295, %v2303
  %v2312 = vsel %vm529, %v2304, -1e+30
  %v2313 = vsel %vm530, %v2305, -1e+30
  %v2314 = vsel %vm531, %v2306, -1e+30
  %v2315 = vsel %vm532, %v2307, -1e+30
  %v2316 = vsel %vm533, %v2308, -1e+30
  %v2317 = vsel %vm534, %v2309, -1e+30
  %v2318 = vsel %vm535, %v2310, -1e+30
  %v2319 = vsel %vm536, %v2311, -1e+30
  %v2320 = vsel %vm545, %v2312, -inf
  %2321 = vmax.xlane.f32.xlu0 %v2320
  %v2322 = vpop.xlane.xlu0 %2321
  %v2323 = vsel %vm545, %v2313, -inf
  %2324 = vmax.xlane.f32.xlu0 %v2323
  %v2325 = vpop.xlane.xlu0 %2324
  %v2326 = vsel %vm545, %v2314, -inf
  %2327 = vmax.xlane.f32.xlu0 %v2326
  %v2328 = vpop.xlane.xlu0 %2327
  %v2329 = vsel %vm545, %v2315, -inf
  %2330 = vmax.xlane.f32.xlu0 %v2329
  %v2331 = vpop.xlane.xlu0 %2330
  %v2332 = vsel %vm545, %v2316, -inf
  %2333 = vmax.xlane.f32.xlu0 %v2332
  %v2334 = vpop.xlane.xlu0 %2333
  %v2335 = vsel %vm545, %v2317, -inf
  %2336 = vmax.xlane.f32.xlu0 %v2335
  %v2337 = vpop.xlane.xlu0 %2336
  %v2338 = vsel %vm545, %v2318, -inf
  %2339 = vmax.xlane.f32.xlu0 %v2338
  %v2340 = vpop.xlane.xlu0 %2339
  %v2341 = vsel %vm545, %v2319, -inf
  %2342 = vmax.xlane.f32.xlu0 %v2341
  %v2343 = vpop.xlane.xlu0 %2342
  %v2344 = vsub.f32 %v2312, %v2322
  %v2345 = vsub.f32 %v2313, %v2325
  %v2346 = vsub.f32 %v2314, %v2328
  %v2347 = vsub.f32 %v2315, %v2331
  %v2348 = vsub.f32 %v2316, %v2334
  %v2349 = vsub.f32 %v2317, %v2337
  %v2350 = vsub.f32 %v2318, %v2340
  %v2351 = vsub.f32 %v2319, %v2343
  %v2352 = vmul.f32 %v2344, 1.442695
  %v2353 = vpow.pop %v2352
  %v2354 = vmul.f32 %v2345, 1.442695
  %v2355 = vpow.pop %v2354
  %v2356 = vmul.f32 %v2346, 1.442695
  %v2357 = vpow.pop %v2356
  %v2358 = vmul.f32 %v2347, 1.442695
  %v2359 = vpow.pop %v2358
  %v2360 = vmul.f32 %v2348, 1.442695
  %v2361 = vpow.pop %v2360
  %v2362 = vmul.f32 %v2349, 1.442695
  %v2363 = vpow.pop %v2362
  %v2364 = vmul.f32 %v2350, 1.442695
  %v2365 = vpow.pop %v2364
  %v2366 = vmul.f32 %v2351, 1.442695
  %v2367 = vpow.pop %v2366
  %v2368 = vsel %vm545, %v2353, 0.0
  %2369 = vadd.xlane.f32.xlu0 %v2368
  %v2370 = vpop.xlane.xlu0 %2369
  %v2371 = vsel %vm545, %v2355, 0.0
  %2372 = vadd.xlane.f32.xlu0 %v2371
  %v2373 = vpop.xlane.xlu0 %2372
  %v2374 = vsel %vm545, %v2357, 0.0
  %2375 = vadd.xlane.f32.xlu0 %v2374
  %v2376 = vpop.xlane.xlu0 %2375
  %v2377 = vsel %vm545, %v2359, 0.0
  %2378 = vadd.xlane.f32.xlu0 %v2377
  %v2379 = vpop.xlane.xlu0 %2378
  %v2380 = vsel %vm545, %v2361, 0.0
  %2381 = vadd.xlane.f32.xlu0 %v2380
  %v2382 = vpop.xlane.xlu0 %2381
  %v2383 = vsel %vm545, %v2363, 0.0
  %2384 = vadd.xlane.f32.xlu0 %v2383
  %v2385 = vpop.xlane.xlu0 %2384
  %v2386 = vsel %vm545, %v2365, 0.0
  %2387 = vadd.xlane.f32.xlu0 %v2386
  %v2388 = vpop.xlane.xlu0 %2387
  %v2389 = vsel %vm545, %v2367, 0.0
  %2390 = vadd.xlane.f32.xlu0 %v2389
  %v2391 = vpop.xlane.xlu0 %2390
  %v2392 = vrcp.pop %v2370
  %v2393 = vmul.f32 %v2370, %v2392
  %v2394 = vsub.f32 1.0, %v2393
  %v2395 = vmul.f32 %v2392, %v2394
  %v2396 = vadd.f32 %v2392, %v2395
  %vm2397 = vweird.f32 %v2370
  %vm2398 = vweird.f32 %v2392
  %vm2399 = vmor %vm2397, %vm2398
  %v2400 = vsel %vm2399, %v2392, %v2396
  %v2401 = vand.u32 2147483647, %v2370
  %vm2402 = vcmp.eq.f32.partialorder %v2401, 8.507059e+37
  %v2403 = vand.u32 %v2370, 2147483648
  %v2404 = vor.u32 1.1754944e-38, %v2403
  %v2405 = vsel %vm2402, %v2404, %v2400
  %v2406 = vrcp.pop %v2373
  %v2407 = vmul.f32 %v2373, %v2406
  %v2408 = vsub.f32 1.0, %v2407
  %v2409 = vmul.f32 %v2406, %v2408
  %v2410 = vadd.f32 %v2406, %v2409
  %vm2411 = vweird.f32 %v2373
  %vm2412 = vweird.f32 %v2406
  %vm2413 = vmor %vm2411, %vm2412
  %v2414 = vsel %vm2413, %v2406, %v2410
  %v2415 = vand.u32 2147483647, %v2373
  %vm2416 = vcmp.eq.f32.partialorder %v2415, 8.507059e+37
  %v2417 = vand.u32 %v2373, 2147483648
  %v2418 = vor.u32 1.1754944e-38, %v2417
  %v2419 = vsel %vm2416, %v2418, %v2414
  %v2420 = vrcp.pop %v2376
  %v2421 = vmul.f32 %v2376, %v2420
  %v2422 = vsub.f32 1.0, %v2421
  %v2423 = vmul.f32 %v2420, %v2422
  %v2424 = vadd.f32 %v2420, %v2423
  %vm2425 = vweird.f32 %v2376
  %vm2426 = vweird.f32 %v2420
  %vm2427 = vmor %vm2425, %vm2426
  %v2428 = vsel %vm2427, %v2420, %v2424
  %v2429 = vand.u32 2147483647, %v2376
  %vm2430 = vcmp.eq.f32.partialorder %v2429, 8.507059e+37
  %v2431 = vand.u32 %v2376, 2147483648
  %v2432 = vor.u32 1.1754944e-38, %v2431
  %v2433 = vsel %vm2430, %v2432, %v2428
  %v2434 = vrcp.pop %v2379
  %v2435 = vmul.f32 %v2379, %v2434
  %v2436 = vsub.f32 1.0, %v2435
  %v2437 = vmul.f32 %v2434, %v2436
  %v2438 = vadd.f32 %v2434, %v2437
  %vm2439 = vweird.f32 %v2379
  %vm2440 = vweird.f32 %v2434
  %vm2441 = vmor %vm2439, %vm2440
  %v2442 = vsel %vm2441, %v2434, %v2438
  %v2443 = vand.u32 2147483647, %v2379
  %vm2444 = vcmp.eq.f32.partialorder %v2443, 8.507059e+37
  %v2445 = vand.u32 %v2379, 2147483648
  %v2446 = vor.u32 1.1754944e-38, %v2445
  %v2447 = vsel %vm2444, %v2446, %v2442
  %v2448 = vrcp.pop %v2382
  %v2449 = vmul.f32 %v2382, %v2448
  %v2450 = vsub.f32 1.0, %v2449
  %v2451 = vmul.f32 %v2448, %v2450
  %v2452 = vadd.f32 %v2448, %v2451
  %vm2453 = vweird.f32 %v2382
  %vm2454 = vweird.f32 %v2448
  %vm2455 = vmor %vm2453, %vm2454
  %v2456 = vsel %vm2455, %v2448, %v2452
  %v2457 = vand.u32 2147483647, %v2382
  %vm2458 = vcmp.eq.f32.partialorder %v2457, 8.507059e+37
  %v2459 = vand.u32 %v2382, 2147483648
  %v2460 = vor.u32 1.1754944e-38, %v2459
  %v2461 = vsel %vm2458, %v2460, %v2456
  %v2462 = vrcp.pop %v2385
  %v2463 = vmul.f32 %v2385, %v2462
  %v2464 = vsub.f32 1.0, %v2463
  %v2465 = vmul.f32 %v2462, %v2464
  %v2466 = vadd.f32 %v2462, %v2465
  %vm2467 = vweird.f32 %v2385
  %vm2468 = vweird.f32 %v2462
  %vm2469 = vmor %vm2467, %vm2468
  %v2470 = vsel %vm2469, %v2462, %v2466
  %v2471 = vand.u32 2147483647, %v2385
  %vm2472 = vcmp.eq.f32.partialorder %v2471, 8.507059e+37
  %v2473 = vand.u32 %v2385, 2147483648
  %v2474 = vor.u32 1.1754944e-38, %v2473
  %v2475 = vsel %vm2472, %v2474, %v2470
  %v2476 = vrcp.pop %v2388
  %v2477 = vmul.f32 %v2388, %v2476
  %v2478 = vsub.f32 1.0, %v2477
  %v2479 = vmul.f32 %v2476, %v2478
  %v2480 = vadd.f32 %v2476, %v2479
  %vm2481 = vweird.f32 %v2388
  %vm2482 = vweird.f32 %v2476
  %vm2483 = vmor %vm2481, %vm2482
  %v2484 = vsel %vm2483, %v2476, %v2480
  %v2485 = vand.u32 2147483647, %v2388
  %vm2486 = vcmp.eq.f32.partialorder %v2485, 8.507059e+37
  %v2487 = vand.u32 %v2388, 2147483648
  %v2488 = vor.u32 1.1754944e-38, %v2487
  %v2489 = vsel %vm2486, %v2488, %v2484
  %v2490 = vrcp.pop %v2391
  %v2491 = vmul.f32 %v2391, %v2490
  %v2492 = vsub.f32 1.0, %v2491
  %v2493 = vmul.f32 %v2490, %v2492
  %v2494 = vadd.f32 %v2490, %v2493
  %vm2495 = vweird.f32 %v2391
  %vm2496 = vweird.f32 %v2490
  %vm2497 = vmor %vm2495, %vm2496
  %v2498 = vsel %vm2497, %v2490, %v2494
  %v2499 = vand.u32 2147483647, %v2391
  %vm2500 = vcmp.eq.f32.partialorder %v2499, 8.507059e+37
  %v2501 = vand.u32 %v2391, 2147483648
  %v2502 = vor.u32 1.1754944e-38, %v2501
  %v2503 = vsel %vm2500, %v2502, %v2498
  %v2504 = vmul.f32 %v2353, %v2405
  %v2505 = vmul.f32 %v2355, %v2419
  %v2506 = vmul.f32 %v2357, %v2433
  %v2507 = vmul.f32 %v2359, %v2447
  %v2508 = vmul.f32 %v2361, %v2461
  %v2509 = vmul.f32 %v2363, %v2475
  %v2510 = vmul.f32 %v2365, %v2489
  %v2511 = vmul.f32 %v2367, %v2503
  %v2512 = vpack.c.bf16 %v2505, %v2504
  %v2513 = vpack.c.bf16 %v2507, %v2506
  %v2514 = vpack.c.bf16 %v2509, %v2508
  %v2515 = vpack.c.bf16 %v2511, %v2510
  %v2524 = vunpack.c.l.b16 %v2093
  %v2525 = vunpack.c.l.b16 %v2094
  %v2526 = vunpack.c.l.b16 %v2095
  %v2527 = vunpack.c.l.b16 %v2096
  %v2528 = vunpack.c.l.b16 %v2097
  %v2529 = vunpack.c.l.b16 %v2098
  %v2530 = vunpack.c.l.b16 %v2099
  %v2531 = vunpack.c.l.b16 %v2100
  %v2532 = vpack.c.b16 %v2525, %v2524
  %v2533 = vpack.c.b16 %v2527, %v2526
  %v2534 = vpack.c.b16 %v2529, %v2528
  %v2535 = vpack.c.b16 %v2531, %v2530
  %v2541 = vsel %vm545, %v2512, 0
  %v2544 = vsel %vm545, %v2513, 0
  %v2547 = vsel %vm545, %v2514, 0
  %v2550 = vsel %vm545, %v2515, 0
  %2552 = vmatpush.bf16.msra.mxu0 0
  %2553 = vmatpush.bf16.msra.mxu0 0
  %2554 = vmatpush.bf16.msra.mxu0 0
  %2555 = vmatpush.bf16.msra.mxu0 0
  %2556 = vmatpush.bf16.msra.mxu0 %v2535
  %2557 = vmatpush.bf16.msra.mxu0 %v2534
  %2558 = vmatpush.bf16.msra.mxu0 %v2533
  %2559 = vmatpush.bf16.msra.mxu0 %v2532
  %2560 = vmatmul.bf16.gmra.mxu0 %v2541
  %v2561 = vpop.f32.mrf.mxu0
  %v2562 = vadd.f32 0.0, %v2561
  %v2563 = vpop.f32.mrf.mxu0
  %v2564 = vadd.f32 0.0, %v2563
  %2565 = vmatmul.bf16.gmra.mxu0 %v2544
  %v2566 = vpop.f32.mrf.mxu0
  %v2567 = vadd.f32 0.0, %v2566
  %v2568 = vpop.f32.mrf.mxu0
  %v2569 = vadd.f32 0.0, %v2568
  %2570 = vmatmul.bf16.gmra.mxu0 %v2547
  %v2571 = vpop.f32.mrf.mxu0
  %v2572 = vadd.f32 0.0, %v2571
  %v2573 = vpop.f32.mrf.mxu0
  %v2574 = vadd.f32 0.0, %v2573
  %2575 = vmatmul.bf16.gmra.mxu0 %v2550
  %v2576 = vpop.f32.mrf.mxu0
  %v2577 = vadd.f32 0.0, %v2576
  %v2578 = vpop.f32.mrf.mxu0
  %v2579 = vadd.f32 0.0, %v2578
  %2580 = vdwg.mxu0
  %2581 = vset.pattern.permute.xlu0 1
  %2582 = vperm.xlu0 %2581, %v2192
  %v2583 = vpop.permute.xlu0 %2582
  %2585 = vset.pattern.permute.xlu0 1
  %2586 = vperm.xlu0 %2585, %v2195
  %v2587 = vpop.permute.xlu0 %2586
  %2589 = vset.pattern.permute.xlu0 1
  %2590 = vperm.xlu0 %2589, %v2198
  %v2591 = vpop.permute.xlu0 %2590
  %2593 = vset.pattern.permute.xlu0 1
  %2594 = vperm.xlu0 %2593, %v2201
  %v2595 = vpop.permute.xlu0 %2594
  %2597 = vset.pattern.permute.xlu0 1
  %2598 = vperm.xlu0 %2597, %v2204
  %v2599 = vpop.permute.xlu0 %2598
  %2601 = vset.pattern.permute.xlu0 1
  %2602 = vperm.xlu0 %2601, %v2207
  %v2603 = vpop.permute.xlu0 %2602
  %2605 = vset.pattern.permute.xlu0 1
  %2606 = vperm.xlu0 %2605, %v2210
  %v2607 = vpop.permute.xlu0 %2606
  %2609 = vset.pattern.permute.xlu0 1
  %2610 = vperm.xlu0 %2609, %v2213
  %v2611 = vpop.permute.xlu0 %2610
  %v2613 = vperm.slane %v2231, 1
  %v2614 = vadd.f32 %v2583, %v2613
  %v2615 = vadd.f32 %v2587, %v2613
  %v2616 = vadd.f32 %v2591, %v2613
  %v2617 = vadd.f32 %v2595, %v2613
  %v2618 = vadd.f32 %v2599, %v2613
  %v2619 = vadd.f32 %v2603, %v2613
  %v2620 = vadd.f32 %v2607, %v2613
  %v2621 = vadd.f32 %v2611, %v2613
  %v2622 = vmul.f32 %v2614, 0.2
  %v2623 = vmul.f32 %v2615, 0.2
  %v2624 = vmul.f32 %v2616, 0.2
  %v2625 = vmul.f32 %v2617, 0.2
  %v2626 = vmul.f32 %v2618, 0.2
  %v2627 = vmul.f32 %v2619, 0.2
  %v2628 = vmul.f32 %v2620, 0.2
  %v2629 = vmul.f32 %v2621, 0.2
  %v2630 = vmax.f32 %v2614, %v2622
  %v2631 = vmax.f32 %v2615, %v2623
  %v2632 = vmax.f32 %v2616, %v2624
  %v2633 = vmax.f32 %v2617, %v2625
  %v2634 = vmax.f32 %v2618, %v2626
  %v2635 = vmax.f32 %v2619, %v2627
  %v2636 = vmax.f32 %v2620, %v2628
  %v2637 = vmax.f32 %v2621, %v2629
  %v2638 = vsel %vm529, %v2630, -1e+30
  %v2639 = vsel %vm530, %v2631, -1e+30
  %v2640 = vsel %vm531, %v2632, -1e+30
  %v2641 = vsel %vm532, %v2633, -1e+30
  %v2642 = vsel %vm533, %v2634, -1e+30
  %v2643 = vsel %vm534, %v2635, -1e+30
  %v2644 = vsel %vm535, %v2636, -1e+30
  %v2645 = vsel %vm536, %v2637, -1e+30
  %v2646 = vsel %vm545, %v2638, -inf
  %2647 = vmax.xlane.f32.xlu0 %v2646
  %v2648 = vpop.xlane.xlu0 %2647
  %v2649 = vsel %vm545, %v2639, -inf
  %2650 = vmax.xlane.f32.xlu0 %v2649
  %v2651 = vpop.xlane.xlu0 %2650
  %v2652 = vsel %vm545, %v2640, -inf
  %2653 = vmax.xlane.f32.xlu0 %v2652
  %v2654 = vpop.xlane.xlu0 %2653
  %v2655 = vsel %vm545, %v2641, -inf
  %2656 = vmax.xlane.f32.xlu0 %v2655
  %v2657 = vpop.xlane.xlu0 %2656
  %v2658 = vsel %vm545, %v2642, -inf
  %2659 = vmax.xlane.f32.xlu0 %v2658
  %v2660 = vpop.xlane.xlu0 %2659
  %v2661 = vsel %vm545, %v2643, -inf
  %2662 = vmax.xlane.f32.xlu0 %v2661
  %v2663 = vpop.xlane.xlu0 %2662
  %v2664 = vsel %vm545, %v2644, -inf
  %2665 = vmax.xlane.f32.xlu0 %v2664
  %v2666 = vpop.xlane.xlu0 %2665
  %v2667 = vsel %vm545, %v2645, -inf
  %2668 = vmax.xlane.f32.xlu0 %v2667
  %v2669 = vpop.xlane.xlu0 %2668
  %v2670 = vsub.f32 %v2638, %v2648
  %v2671 = vsub.f32 %v2639, %v2651
  %v2672 = vsub.f32 %v2640, %v2654
  %v2673 = vsub.f32 %v2641, %v2657
  %v2674 = vsub.f32 %v2642, %v2660
  %v2675 = vsub.f32 %v2643, %v2663
  %v2676 = vsub.f32 %v2644, %v2666
  %v2677 = vsub.f32 %v2645, %v2669
  %v2678 = vmul.f32 %v2670, 1.442695
  %v2679 = vpow.pop %v2678
  %v2680 = vmul.f32 %v2671, 1.442695
  %v2681 = vpow.pop %v2680
  %v2682 = vmul.f32 %v2672, 1.442695
  %v2683 = vpow.pop %v2682
  %v2684 = vmul.f32 %v2673, 1.442695
  %v2685 = vpow.pop %v2684
  %v2686 = vmul.f32 %v2674, 1.442695
  %v2687 = vpow.pop %v2686
  %v2688 = vmul.f32 %v2675, 1.442695
  %v2689 = vpow.pop %v2688
  %v2690 = vmul.f32 %v2676, 1.442695
  %v2691 = vpow.pop %v2690
  %v2692 = vmul.f32 %v2677, 1.442695
  %v2693 = vpow.pop %v2692
  %v2694 = vsel %vm545, %v2679, 0.0
  %2695 = vadd.xlane.f32.xlu0 %v2694
  %v2696 = vpop.xlane.xlu0 %2695
  %v2697 = vsel %vm545, %v2681, 0.0
  %2698 = vadd.xlane.f32.xlu0 %v2697
  %v2699 = vpop.xlane.xlu0 %2698
  %v2700 = vsel %vm545, %v2683, 0.0
  %2701 = vadd.xlane.f32.xlu0 %v2700
  %v2702 = vpop.xlane.xlu0 %2701
  %v2703 = vsel %vm545, %v2685, 0.0
  %2704 = vadd.xlane.f32.xlu0 %v2703
  %v2705 = vpop.xlane.xlu0 %2704
  %v2706 = vsel %vm545, %v2687, 0.0
  %2707 = vadd.xlane.f32.xlu0 %v2706
  %v2708 = vpop.xlane.xlu0 %2707
  %v2709 = vsel %vm545, %v2689, 0.0
  %2710 = vadd.xlane.f32.xlu0 %v2709
  %v2711 = vpop.xlane.xlu0 %2710
  %v2712 = vsel %vm545, %v2691, 0.0
  %2713 = vadd.xlane.f32.xlu0 %v2712
  %v2714 = vpop.xlane.xlu0 %2713
  %v2715 = vsel %vm545, %v2693, 0.0
  %2716 = vadd.xlane.f32.xlu0 %v2715
  %v2717 = vpop.xlane.xlu0 %2716
  %v2718 = vrcp.pop %v2696
  %v2719 = vmul.f32 %v2696, %v2718
  %v2720 = vsub.f32 1.0, %v2719
  %v2721 = vmul.f32 %v2718, %v2720
  %v2722 = vadd.f32 %v2718, %v2721
  %vm2723 = vweird.f32 %v2696
  %vm2724 = vweird.f32 %v2718
  %vm2725 = vmor %vm2723, %vm2724
  %v2726 = vsel %vm2725, %v2718, %v2722
  %v2727 = vand.u32 2147483647, %v2696
  %vm2728 = vcmp.eq.f32.partialorder %v2727, 8.507059e+37
  %v2729 = vand.u32 %v2696, 2147483648
  %v2730 = vor.u32 1.1754944e-38, %v2729
  %v2731 = vsel %vm2728, %v2730, %v2726
  %v2732 = vrcp.pop %v2699
  %v2733 = vmul.f32 %v2699, %v2732
  %v2734 = vsub.f32 1.0, %v2733
  %v2735 = vmul.f32 %v2732, %v2734
  %v2736 = vadd.f32 %v2732, %v2735
  %vm2737 = vweird.f32 %v2699
  %vm2738 = vweird.f32 %v2732
  %vm2739 = vmor %vm2737, %vm2738
  %v2740 = vsel %vm2739, %v2732, %v2736
  %v2741 = vand.u32 2147483647, %v2699
  %vm2742 = vcmp.eq.f32.partialorder %v2741, 8.507059e+37
  %v2743 = vand.u32 %v2699, 2147483648
  %v2744 = vor.u32 1.1754944e-38, %v2743
  %v2745 = vsel %vm2742, %v2744, %v2740
  %v2746 = vrcp.pop %v2702
  %v2747 = vmul.f32 %v2702, %v2746
  %v2748 = vsub.f32 1.0, %v2747
  %v2749 = vmul.f32 %v2746, %v2748
  %v2750 = vadd.f32 %v2746, %v2749
  %vm2751 = vweird.f32 %v2702
  %vm2752 = vweird.f32 %v2746
  %vm2753 = vmor %vm2751, %vm2752
  %v2754 = vsel %vm2753, %v2746, %v2750
  %v2755 = vand.u32 2147483647, %v2702
  %vm2756 = vcmp.eq.f32.partialorder %v2755, 8.507059e+37
  %v2757 = vand.u32 %v2702, 2147483648
  %v2758 = vor.u32 1.1754944e-38, %v2757
  %v2759 = vsel %vm2756, %v2758, %v2754
  %v2760 = vrcp.pop %v2705
  %v2761 = vmul.f32 %v2705, %v2760
  %v2762 = vsub.f32 1.0, %v2761
  %v2763 = vmul.f32 %v2760, %v2762
  %v2764 = vadd.f32 %v2760, %v2763
  %vm2765 = vweird.f32 %v2705
  %vm2766 = vweird.f32 %v2760
  %vm2767 = vmor %vm2765, %vm2766
  %v2768 = vsel %vm2767, %v2760, %v2764
  %v2769 = vand.u32 2147483647, %v2705
  %vm2770 = vcmp.eq.f32.partialorder %v2769, 8.507059e+37
  %v2771 = vand.u32 %v2705, 2147483648
  %v2772 = vor.u32 1.1754944e-38, %v2771
  %v2773 = vsel %vm2770, %v2772, %v2768
  %v2774 = vrcp.pop %v2708
  %v2775 = vmul.f32 %v2708, %v2774
  %v2776 = vsub.f32 1.0, %v2775
  %v2777 = vmul.f32 %v2774, %v2776
  %v2778 = vadd.f32 %v2774, %v2777
  %vm2779 = vweird.f32 %v2708
  %vm2780 = vweird.f32 %v2774
  %vm2781 = vmor %vm2779, %vm2780
  %v2782 = vsel %vm2781, %v2774, %v2778
  %v2783 = vand.u32 2147483647, %v2708
  %vm2784 = vcmp.eq.f32.partialorder %v2783, 8.507059e+37
  %v2785 = vand.u32 %v2708, 2147483648
  %v2786 = vor.u32 1.1754944e-38, %v2785
  %v2787 = vsel %vm2784, %v2786, %v2782
  %v2788 = vrcp.pop %v2711
  %v2789 = vmul.f32 %v2711, %v2788
  %v2790 = vsub.f32 1.0, %v2789
  %v2791 = vmul.f32 %v2788, %v2790
  %v2792 = vadd.f32 %v2788, %v2791
  %vm2793 = vweird.f32 %v2711
  %vm2794 = vweird.f32 %v2788
  %vm2795 = vmor %vm2793, %vm2794
  %v2796 = vsel %vm2795, %v2788, %v2792
  %v2797 = vand.u32 2147483647, %v2711
  %vm2798 = vcmp.eq.f32.partialorder %v2797, 8.507059e+37
  %v2799 = vand.u32 %v2711, 2147483648
  %v2800 = vor.u32 1.1754944e-38, %v2799
  %v2801 = vsel %vm2798, %v2800, %v2796
  %v2802 = vrcp.pop %v2714
  %v2803 = vmul.f32 %v2714, %v2802
  %v2804 = vsub.f32 1.0, %v2803
  %v2805 = vmul.f32 %v2802, %v2804
  %v2806 = vadd.f32 %v2802, %v2805
  %vm2807 = vweird.f32 %v2714
  %vm2808 = vweird.f32 %v2802
  %vm2809 = vmor %vm2807, %vm2808
  %v2810 = vsel %vm2809, %v2802, %v2806
  %v2811 = vand.u32 2147483647, %v2714
  %vm2812 = vcmp.eq.f32.partialorder %v2811, 8.507059e+37
  %v2813 = vand.u32 %v2714, 2147483648
  %v2814 = vor.u32 1.1754944e-38, %v2813
  %v2815 = vsel %vm2812, %v2814, %v2810
  %v2816 = vrcp.pop %v2717
  %v2817 = vmul.f32 %v2717, %v2816
  %v2818 = vsub.f32 1.0, %v2817
  %v2819 = vmul.f32 %v2816, %v2818
  %v2820 = vadd.f32 %v2816, %v2819
  %vm2821 = vweird.f32 %v2717
  %vm2822 = vweird.f32 %v2816
  %vm2823 = vmor %vm2821, %vm2822
  %v2824 = vsel %vm2823, %v2816, %v2820
  %v2825 = vand.u32 2147483647, %v2717
  %vm2826 = vcmp.eq.f32.partialorder %v2825, 8.507059e+37
  %v2827 = vand.u32 %v2717, 2147483648
  %v2828 = vor.u32 1.1754944e-38, %v2827
  %v2829 = vsel %vm2826, %v2828, %v2824
  %v2830 = vmul.f32 %v2679, %v2731
  %v2831 = vmul.f32 %v2681, %v2745
  %v2832 = vmul.f32 %v2683, %v2759
  %v2833 = vmul.f32 %v2685, %v2773
  %v2834 = vmul.f32 %v2687, %v2787
  %v2835 = vmul.f32 %v2689, %v2801
  %v2836 = vmul.f32 %v2691, %v2815
  %v2837 = vmul.f32 %v2693, %v2829
  %v2838 = vpack.c.bf16 %v2831, %v2830
  %v2839 = vpack.c.bf16 %v2833, %v2832
  %v2840 = vpack.c.bf16 %v2835, %v2834
  %v2841 = vpack.c.bf16 %v2837, %v2836
  %2842 = vrot.lane.b32.xlu0 %v2532, 120
  %v2843 = vpop.permute.xlu0 %2842
  %2844 = vrot.lane.b32.xlu0 %v2533, 120
  %v2845 = vpop.permute.xlu0 %2844
  %2846 = vrot.lane.b32.xlu0 %v2534, 120
  %v2847 = vpop.permute.xlu0 %2846
  %2848 = vrot.lane.b32.xlu0 %v2535, 120
  %v2849 = vpop.permute.xlu0 %2848
  %v2855 = vsel %vm545, %v2838, 0
  %v2858 = vsel %vm545, %v2839, 0
  %v2861 = vsel %vm545, %v2840, 0
  %v2864 = vsel %vm545, %v2841, 0
  %2866 = vmatpush.bf16.msra.mxu0 0
  %2867 = vmatpush.bf16.msra.mxu0 0
  %2868 = vmatpush.bf16.msra.mxu0 0
  %2869 = vmatpush.bf16.msra.mxu0 0
  %2870 = vmatpush.bf16.msra.mxu0 %v2849
  %2871 = vmatpush.bf16.msra.mxu0 %v2847
  %2872 = vmatpush.bf16.msra.mxu0 %v2845
  %2873 = vmatpush.bf16.msra.mxu0 %v2843
  %2874 = vmatmul.bf16.gmra.mxu0 %v2855
  %v2875 = vpop.f32.mrf.mxu0
  %v2876 = vadd.f32 0.0, %v2875
  %v2877 = vpop.f32.mrf.mxu0
  %v2878 = vadd.f32 0.0, %v2877
  %2879 = vmatmul.bf16.gmra.mxu0 %v2858
  %v2880 = vpop.f32.mrf.mxu0
  %v2881 = vadd.f32 0.0, %v2880
  %v2882 = vpop.f32.mrf.mxu0
  %v2883 = vadd.f32 0.0, %v2882
  %2884 = vmatmul.bf16.gmra.mxu0 %v2861
  %v2885 = vpop.f32.mrf.mxu0
  %v2886 = vadd.f32 0.0, %v2885
  %v2887 = vpop.f32.mrf.mxu0
  %v2888 = vadd.f32 0.0, %v2887
  %2889 = vmatmul.bf16.gmra.mxu0 %v2864
  %v2890 = vpop.f32.mrf.mxu0
  %v2891 = vadd.f32 0.0, %v2890
  %v2892 = vpop.f32.mrf.mxu0
  %v2893 = vadd.f32 0.0, %v2892
  %2894 = vdwg.mxu0
  %2895 = vset.pattern.permute.xlu0 2
  %2896 = vperm.xlu0 %2895, %v2192
  %v2897 = vpop.permute.xlu0 %2896
  %2899 = vset.pattern.permute.xlu0 2
  %2900 = vperm.xlu0 %2899, %v2195
  %v2901 = vpop.permute.xlu0 %2900
  %2903 = vset.pattern.permute.xlu0 2
  %2904 = vperm.xlu0 %2903, %v2198
  %v2905 = vpop.permute.xlu0 %2904
  %2907 = vset.pattern.permute.xlu0 2
  %2908 = vperm.xlu0 %2907, %v2201
  %v2909 = vpop.permute.xlu0 %2908
  %2911 = vset.pattern.permute.xlu0 2
  %2912 = vperm.xlu0 %2911, %v2204
  %v2913 = vpop.permute.xlu0 %2912
  %2915 = vset.pattern.permute.xlu0 2
  %2916 = vperm.xlu0 %2915, %v2207
  %v2917 = vpop.permute.xlu0 %2916
  %2919 = vset.pattern.permute.xlu0 2
  %2920 = vperm.xlu0 %2919, %v2210
  %v2921 = vpop.permute.xlu0 %2920
  %2923 = vset.pattern.permute.xlu0 2
  %2924 = vperm.xlu0 %2923, %v2213
  %v2925 = vpop.permute.xlu0 %2924
  %v2927 = vperm.slane %v2231, 2
  %v2928 = vadd.f32 %v2897, %v2927
  %v2929 = vadd.f32 %v2901, %v2927
  %v2930 = vadd.f32 %v2905, %v2927
  %v2931 = vadd.f32 %v2909, %v2927
  %v2932 = vadd.f32 %v2913, %v2927
  %v2933 = vadd.f32 %v2917, %v2927
  %v2934 = vadd.f32 %v2921, %v2927
  %v2935 = vadd.f32 %v2925, %v2927
  %v2936 = vmul.f32 %v2928, 0.2
  %v2937 = vmul.f32 %v2929, 0.2
  %v2938 = vmul.f32 %v2930, 0.2
  %v2939 = vmul.f32 %v2931, 0.2
  %v2940 = vmul.f32 %v2932, 0.2
  %v2941 = vmul.f32 %v2933, 0.2
  %v2942 = vmul.f32 %v2934, 0.2
  %v2943 = vmul.f32 %v2935, 0.2
  %v2944 = vmax.f32 %v2928, %v2936
  %v2945 = vmax.f32 %v2929, %v2937
  %v2946 = vmax.f32 %v2930, %v2938
  %v2947 = vmax.f32 %v2931, %v2939
  %v2948 = vmax.f32 %v2932, %v2940
  %v2949 = vmax.f32 %v2933, %v2941
  %v2950 = vmax.f32 %v2934, %v2942
  %v2951 = vmax.f32 %v2935, %v2943
  %v2952 = vsel %vm529, %v2944, -1e+30
  %v2953 = vsel %vm530, %v2945, -1e+30
  %v2954 = vsel %vm531, %v2946, -1e+30
  %v2955 = vsel %vm532, %v2947, -1e+30
  %v2956 = vsel %vm533, %v2948, -1e+30
  %v2957 = vsel %vm534, %v2949, -1e+30
  %v2958 = vsel %vm535, %v2950, -1e+30
  %v2959 = vsel %vm536, %v2951, -1e+30
  %v2960 = vsel %vm545, %v2952, -inf
  %2961 = vmax.xlane.f32.xlu0 %v2960
  %v2962 = vpop.xlane.xlu0 %2961
  %v2963 = vsel %vm545, %v2953, -inf
  %2964 = vmax.xlane.f32.xlu0 %v2963
  %v2965 = vpop.xlane.xlu0 %2964
  %v2966 = vsel %vm545, %v2954, -inf
  %2967 = vmax.xlane.f32.xlu0 %v2966
  %v2968 = vpop.xlane.xlu0 %2967
  %v2969 = vsel %vm545, %v2955, -inf
  %2970 = vmax.xlane.f32.xlu0 %v2969
  %v2971 = vpop.xlane.xlu0 %2970
  %v2972 = vsel %vm545, %v2956, -inf
  %2973 = vmax.xlane.f32.xlu0 %v2972
  %v2974 = vpop.xlane.xlu0 %2973
  %v2975 = vsel %vm545, %v2957, -inf
  %2976 = vmax.xlane.f32.xlu0 %v2975
  %v2977 = vpop.xlane.xlu0 %2976
  %v2978 = vsel %vm545, %v2958, -inf
  %2979 = vmax.xlane.f32.xlu0 %v2978
  %v2980 = vpop.xlane.xlu0 %2979
  %v2981 = vsel %vm545, %v2959, -inf
  %2982 = vmax.xlane.f32.xlu0 %v2981
  %v2983 = vpop.xlane.xlu0 %2982
  %v2984 = vsub.f32 %v2952, %v2962
  %v2985 = vsub.f32 %v2953, %v2965
  %v2986 = vsub.f32 %v2954, %v2968
  %v2987 = vsub.f32 %v2955, %v2971
  %v2988 = vsub.f32 %v2956, %v2974
  %v2989 = vsub.f32 %v2957, %v2977
  %v2990 = vsub.f32 %v2958, %v2980
  %v2991 = vsub.f32 %v2959, %v2983
  %v2992 = vmul.f32 %v2984, 1.442695
  %v2993 = vpow.pop %v2992
  %v2994 = vmul.f32 %v2985, 1.442695
  %v2995 = vpow.pop %v2994
  %v2996 = vmul.f32 %v2986, 1.442695
  %v2997 = vpow.pop %v2996
  %v2998 = vmul.f32 %v2987, 1.442695
  %v2999 = vpow.pop %v2998
  %v3000 = vmul.f32 %v2988, 1.442695
  %v3001 = vpow.pop %v3000
  %v3002 = vmul.f32 %v2989, 1.442695
  %v3003 = vpow.pop %v3002
  %v3004 = vmul.f32 %v2990, 1.442695
  %v3005 = vpow.pop %v3004
  %v3006 = vmul.f32 %v2991, 1.442695
  %v3007 = vpow.pop %v3006
  %v3008 = vsel %vm545, %v2993, 0.0
  %3009 = vadd.xlane.f32.xlu0 %v3008
  %v3010 = vpop.xlane.xlu0 %3009
  %v3011 = vsel %vm545, %v2995, 0.0
  %3012 = vadd.xlane.f32.xlu0 %v3011
  %v3013 = vpop.xlane.xlu0 %3012
  %v3014 = vsel %vm545, %v2997, 0.0
  %3015 = vadd.xlane.f32.xlu0 %v3014
  %v3016 = vpop.xlane.xlu0 %3015
  %v3017 = vsel %vm545, %v2999, 0.0
  %3018 = vadd.xlane.f32.xlu0 %v3017
  %v3019 = vpop.xlane.xlu0 %3018
  %v3020 = vsel %vm545, %v3001, 0.0
  %3021 = vadd.xlane.f32.xlu0 %v3020
  %v3022 = vpop.xlane.xlu0 %3021
  %v3023 = vsel %vm545, %v3003, 0.0
  %3024 = vadd.xlane.f32.xlu0 %v3023
  %v3025 = vpop.xlane.xlu0 %3024
  %v3026 = vsel %vm545, %v3005, 0.0
  %3027 = vadd.xlane.f32.xlu0 %v3026
  %v3028 = vpop.xlane.xlu0 %3027
  %v3029 = vsel %vm545, %v3007, 0.0
  %3030 = vadd.xlane.f32.xlu0 %v3029
  %v3031 = vpop.xlane.xlu0 %3030
  %v3032 = vrcp.pop %v3010
  %v3033 = vmul.f32 %v3010, %v3032
  %v3034 = vsub.f32 1.0, %v3033
  %v3035 = vmul.f32 %v3032, %v3034
  %v3036 = vadd.f32 %v3032, %v3035
  %vm3037 = vweird.f32 %v3010
  %vm3038 = vweird.f32 %v3032
  %vm3039 = vmor %vm3037, %vm3038
  %v3040 = vsel %vm3039, %v3032, %v3036
  %v3041 = vand.u32 2147483647, %v3010
  %vm3042 = vcmp.eq.f32.partialorder %v3041, 8.507059e+37
  %v3043 = vand.u32 %v3010, 2147483648
  %v3044 = vor.u32 1.1754944e-38, %v3043
  %v3045 = vsel %vm3042, %v3044, %v3040
  %v3046 = vrcp.pop %v3013
  %v3047 = vmul.f32 %v3013, %v3046
  %v3048 = vsub.f32 1.0, %v3047
  %v3049 = vmul.f32 %v3046, %v3048
  %v3050 = vadd.f32 %v3046, %v3049
  %vm3051 = vweird.f32 %v3013
  %vm3052 = vweird.f32 %v3046
  %vm3053 = vmor %vm3051, %vm3052
  %v3054 = vsel %vm3053, %v3046, %v3050
  %v3055 = vand.u32 2147483647, %v3013
  %vm3056 = vcmp.eq.f32.partialorder %v3055, 8.507059e+37
  %v3057 = vand.u32 %v3013, 2147483648
  %v3058 = vor.u32 1.1754944e-38, %v3057
  %v3059 = vsel %vm3056, %v3058, %v3054
  %v3060 = vrcp.pop %v3016
  %v3061 = vmul.f32 %v3016, %v3060
  %v3062 = vsub.f32 1.0, %v3061
  %v3063 = vmul.f32 %v3060, %v3062
  %v3064 = vadd.f32 %v3060, %v3063
  %vm3065 = vweird.f32 %v3016
  %vm3066 = vweird.f32 %v3060
  %vm3067 = vmor %vm3065, %vm3066
  %v3068 = vsel %vm3067, %v3060, %v3064
  %v3069 = vand.u32 2147483647, %v3016
  %vm3070 = vcmp.eq.f32.partialorder %v3069, 8.507059e+37
  %v3071 = vand.u32 %v3016, 2147483648
  %v3072 = vor.u32 1.1754944e-38, %v3071
  %v3073 = vsel %vm3070, %v3072, %v3068
  %v3074 = vrcp.pop %v3019
  %v3075 = vmul.f32 %v3019, %v3074
  %v3076 = vsub.f32 1.0, %v3075
  %v3077 = vmul.f32 %v3074, %v3076
  %v3078 = vadd.f32 %v3074, %v3077
  %vm3079 = vweird.f32 %v3019
  %vm3080 = vweird.f32 %v3074
  %vm3081 = vmor %vm3079, %vm3080
  %v3082 = vsel %vm3081, %v3074, %v3078
  %v3083 = vand.u32 2147483647, %v3019
  %vm3084 = vcmp.eq.f32.partialorder %v3083, 8.507059e+37
  %v3085 = vand.u32 %v3019, 2147483648
  %v3086 = vor.u32 1.1754944e-38, %v3085
  %v3087 = vsel %vm3084, %v3086, %v3082
  %v3088 = vrcp.pop %v3022
  %v3089 = vmul.f32 %v3022, %v3088
  %v3090 = vsub.f32 1.0, %v3089
  %v3091 = vmul.f32 %v3088, %v3090
  %v3092 = vadd.f32 %v3088, %v3091
  %vm3093 = vweird.f32 %v3022
  %vm3094 = vweird.f32 %v3088
  %vm3095 = vmor %vm3093, %vm3094
  %v3096 = vsel %vm3095, %v3088, %v3092
  %v3097 = vand.u32 2147483647, %v3022
  %vm3098 = vcmp.eq.f32.partialorder %v3097, 8.507059e+37
  %v3099 = vand.u32 %v3022, 2147483648
  %v3100 = vor.u32 1.1754944e-38, %v3099
  %v3101 = vsel %vm3098, %v3100, %v3096
  %v3102 = vrcp.pop %v3025
  %v3103 = vmul.f32 %v3025, %v3102
  %v3104 = vsub.f32 1.0, %v3103
  %v3105 = vmul.f32 %v3102, %v3104
  %v3106 = vadd.f32 %v3102, %v3105
  %vm3107 = vweird.f32 %v3025
  %vm3108 = vweird.f32 %v3102
  %vm3109 = vmor %vm3107, %vm3108
  %v3110 = vsel %vm3109, %v3102, %v3106
  %v3111 = vand.u32 2147483647, %v3025
  %vm3112 = vcmp.eq.f32.partialorder %v3111, 8.507059e+37
  %v3113 = vand.u32 %v3025, 2147483648
  %v3114 = vor.u32 1.1754944e-38, %v3113
  %v3115 = vsel %vm3112, %v3114, %v3110
  %v3116 = vrcp.pop %v3028
  %v3117 = vmul.f32 %v3028, %v3116
  %v3118 = vsub.f32 1.0, %v3117
  %v3119 = vmul.f32 %v3116, %v3118
  %v3120 = vadd.f32 %v3116, %v3119
  %vm3121 = vweird.f32 %v3028
  %vm3122 = vweird.f32 %v3116
  %vm3123 = vmor %vm3121, %vm3122
  %v3124 = vsel %vm3123, %v3116, %v3120
  %v3125 = vand.u32 2147483647, %v3028
  %vm3126 = vcmp.eq.f32.partialorder %v3125, 8.507059e+37
  %v3127 = vand.u32 %v3028, 2147483648
  %v3128 = vor.u32 1.1754944e-38, %v3127
  %v3129 = vsel %vm3126, %v3128, %v3124
  %v3130 = vrcp.pop %v3031
  %v3131 = vmul.f32 %v3031, %v3130
  %v3132 = vsub.f32 1.0, %v3131
  %v3133 = vmul.f32 %v3130, %v3132
  %v3134 = vadd.f32 %v3130, %v3133
  %vm3135 = vweird.f32 %v3031
  %vm3136 = vweird.f32 %v3130
  %vm3137 = vmor %vm3135, %vm3136
  %v3138 = vsel %vm3137, %v3130, %v3134
  %v3139 = vand.u32 2147483647, %v3031
  %vm3140 = vcmp.eq.f32.partialorder %v3139, 8.507059e+37
  %v3141 = vand.u32 %v3031, 2147483648
  %v3142 = vor.u32 1.1754944e-38, %v3141
  %v3143 = vsel %vm3140, %v3142, %v3138
  %v3144 = vmul.f32 %v2993, %v3045
  %v3145 = vmul.f32 %v2995, %v3059
  %v3146 = vmul.f32 %v2997, %v3073
  %v3147 = vmul.f32 %v2999, %v3087
  %v3148 = vmul.f32 %v3001, %v3101
  %v3149 = vmul.f32 %v3003, %v3115
  %v3150 = vmul.f32 %v3005, %v3129
  %v3151 = vmul.f32 %v3007, %v3143
  %v3152 = vpack.c.bf16 %v3145, %v3144
  %v3153 = vpack.c.bf16 %v3147, %v3146
  %v3154 = vpack.c.bf16 %v3149, %v3148
  %v3155 = vpack.c.bf16 %v3151, %v3150
  %3156 = vrot.lane.b32.xlu0 %v2532, 112
  %v3157 = vpop.permute.xlu0 %3156
  %3158 = vrot.lane.b32.xlu0 %v2533, 112
  %v3159 = vpop.permute.xlu0 %3158
  %3160 = vrot.lane.b32.xlu0 %v2534, 112
  %v3161 = vpop.permute.xlu0 %3160
  %3162 = vrot.lane.b32.xlu0 %v2535, 112
  %v3163 = vpop.permute.xlu0 %3162
  %v3169 = vsel %vm545, %v3152, 0
  %v3172 = vsel %vm545, %v3153, 0
  %v3175 = vsel %vm545, %v3154, 0
  %v3178 = vsel %vm545, %v3155, 0
  %3180 = vmatpush.bf16.msra.mxu0 0
  %3181 = vmatpush.bf16.msra.mxu0 0
  %3182 = vmatpush.bf16.msra.mxu0 0
  %3183 = vmatpush.bf16.msra.mxu0 0
  %3184 = vmatpush.bf16.msra.mxu0 %v3163
  %3185 = vmatpush.bf16.msra.mxu0 %v3161
  %3186 = vmatpush.bf16.msra.mxu0 %v3159
  %3187 = vmatpush.bf16.msra.mxu0 %v3157
  %3188 = vmatmul.bf16.gmra.mxu0 %v3169
  %v3189 = vpop.f32.mrf.mxu0
  %v3190 = vadd.f32 0.0, %v3189
  %v3191 = vpop.f32.mrf.mxu0
  %v3192 = vadd.f32 0.0, %v3191
  %3193 = vmatmul.bf16.gmra.mxu0 %v3172
  %v3194 = vpop.f32.mrf.mxu0
  %v3195 = vadd.f32 0.0, %v3194
  %v3196 = vpop.f32.mrf.mxu0
  %v3197 = vadd.f32 0.0, %v3196
  %3198 = vmatmul.bf16.gmra.mxu0 %v3175
  %v3199 = vpop.f32.mrf.mxu0
  %v3200 = vadd.f32 0.0, %v3199
  %v3201 = vpop.f32.mrf.mxu0
  %v3202 = vadd.f32 0.0, %v3201
  %3203 = vmatmul.bf16.gmra.mxu0 %v3178
  %v3204 = vpop.f32.mrf.mxu0
  %v3205 = vadd.f32 0.0, %v3204
  %v3206 = vpop.f32.mrf.mxu0
  %v3207 = vadd.f32 0.0, %v3206
  %3208 = vdwg.mxu0
  %3209 = vset.pattern.permute.xlu0 3
  %3210 = vperm.xlu0 %3209, %v2192
  %v3211 = vpop.permute.xlu0 %3210
  %3213 = vset.pattern.permute.xlu0 3
  %3214 = vperm.xlu0 %3213, %v2195
  %v3215 = vpop.permute.xlu0 %3214
  %3217 = vset.pattern.permute.xlu0 3
  %3218 = vperm.xlu0 %3217, %v2198
  %v3219 = vpop.permute.xlu0 %3218
  %3221 = vset.pattern.permute.xlu0 3
  %3222 = vperm.xlu0 %3221, %v2201
  %v3223 = vpop.permute.xlu0 %3222
  %3225 = vset.pattern.permute.xlu0 3
  %3226 = vperm.xlu0 %3225, %v2204
  %v3227 = vpop.permute.xlu0 %3226
  %3229 = vset.pattern.permute.xlu0 3
  %3230 = vperm.xlu0 %3229, %v2207
  %v3231 = vpop.permute.xlu0 %3230
  %3233 = vset.pattern.permute.xlu0 3
  %3234 = vperm.xlu0 %3233, %v2210
  %v3235 = vpop.permute.xlu0 %3234
  %3237 = vset.pattern.permute.xlu0 3
  %3238 = vperm.xlu0 %3237, %v2213
  %v3239 = vpop.permute.xlu0 %3238
  %v3241 = vperm.slane %v2231, 3
  %v3242 = vadd.f32 %v3211, %v3241
  %v3243 = vadd.f32 %v3215, %v3241
  %v3244 = vadd.f32 %v3219, %v3241
  %v3245 = vadd.f32 %v3223, %v3241
  %v3246 = vadd.f32 %v3227, %v3241
  %v3247 = vadd.f32 %v3231, %v3241
  %v3248 = vadd.f32 %v3235, %v3241
  %v3249 = vadd.f32 %v3239, %v3241
  %v3250 = vmul.f32 %v3242, 0.2
  %v3251 = vmul.f32 %v3243, 0.2
  %v3252 = vmul.f32 %v3244, 0.2
  %v3253 = vmul.f32 %v3245, 0.2
  %v3254 = vmul.f32 %v3246, 0.2
  %v3255 = vmul.f32 %v3247, 0.2
  %v3256 = vmul.f32 %v3248, 0.2
  %v3257 = vmul.f32 %v3249, 0.2
  %v3258 = vmax.f32 %v3242, %v3250
  %v3259 = vmax.f32 %v3243, %v3251
  %v3260 = vmax.f32 %v3244, %v3252
  %v3261 = vmax.f32 %v3245, %v3253
  %v3262 = vmax.f32 %v3246, %v3254
  %v3263 = vmax.f32 %v3247, %v3255
  %v3264 = vmax.f32 %v3248, %v3256
  %v3265 = vmax.f32 %v3249, %v3257
  %v3266 = vsel %vm529, %v3258, -1e+30
  %v3267 = vsel %vm530, %v3259, -1e+30
  %v3268 = vsel %vm531, %v3260, -1e+30
  %v3269 = vsel %vm532, %v3261, -1e+30
  %v3270 = vsel %vm533, %v3262, -1e+30
  %v3271 = vsel %vm534, %v3263, -1e+30
  %v3272 = vsel %vm535, %v3264, -1e+30
  %v3273 = vsel %vm536, %v3265, -1e+30
  %v3274 = vsel %vm545, %v3266, -inf
  %3275 = vmax.xlane.f32.xlu0 %v3274
  %v3276 = vpop.xlane.xlu0 %3275
  %v3277 = vsel %vm545, %v3267, -inf
  %3278 = vmax.xlane.f32.xlu0 %v3277
  %v3279 = vpop.xlane.xlu0 %3278
  %v3280 = vsel %vm545, %v3268, -inf
  %3281 = vmax.xlane.f32.xlu0 %v3280
  %v3282 = vpop.xlane.xlu0 %3281
  %v3283 = vsel %vm545, %v3269, -inf
  %3284 = vmax.xlane.f32.xlu0 %v3283
  %v3285 = vpop.xlane.xlu0 %3284
  %v3286 = vsel %vm545, %v3270, -inf
  %3287 = vmax.xlane.f32.xlu0 %v3286
  %v3288 = vpop.xlane.xlu0 %3287
  %v3289 = vsel %vm545, %v3271, -inf
  %3290 = vmax.xlane.f32.xlu0 %v3289
  %v3291 = vpop.xlane.xlu0 %3290
  %v3292 = vsel %vm545, %v3272, -inf
  %3293 = vmax.xlane.f32.xlu0 %v3292
  %v3294 = vpop.xlane.xlu0 %3293
  %v3295 = vsel %vm545, %v3273, -inf
  %3296 = vmax.xlane.f32.xlu0 %v3295
  %v3297 = vpop.xlane.xlu0 %3296
  %v3298 = vsub.f32 %v3266, %v3276
  %v3299 = vsub.f32 %v3267, %v3279
  %v3300 = vsub.f32 %v3268, %v3282
  %v3301 = vsub.f32 %v3269, %v3285
  %v3302 = vsub.f32 %v3270, %v3288
  %v3303 = vsub.f32 %v3271, %v3291
  %v3304 = vsub.f32 %v3272, %v3294
  %v3305 = vsub.f32 %v3273, %v3297
  %v3306 = vmul.f32 %v3298, 1.442695
  %v3307 = vpow.pop %v3306
  %v3308 = vmul.f32 %v3299, 1.442695
  %v3309 = vpow.pop %v3308
  %v3310 = vmul.f32 %v3300, 1.442695
  %v3311 = vpow.pop %v3310
  %v3312 = vmul.f32 %v3301, 1.442695
  %v3313 = vpow.pop %v3312
  %v3314 = vmul.f32 %v3302, 1.442695
  %v3315 = vpow.pop %v3314
  %v3316 = vmul.f32 %v3303, 1.442695
  %v3317 = vpow.pop %v3316
  %v3318 = vmul.f32 %v3304, 1.442695
  %v3319 = vpow.pop %v3318
  %v3320 = vmul.f32 %v3305, 1.442695
  %v3321 = vpow.pop %v3320
  %v3322 = vsel %vm545, %v3307, 0.0
  %3323 = vadd.xlane.f32.xlu0 %v3322
  %v3324 = vpop.xlane.xlu0 %3323
  %v3325 = vsel %vm545, %v3309, 0.0
  %3326 = vadd.xlane.f32.xlu0 %v3325
  %v3327 = vpop.xlane.xlu0 %3326
  %v3328 = vsel %vm545, %v3311, 0.0
  %3329 = vadd.xlane.f32.xlu0 %v3328
  %v3330 = vpop.xlane.xlu0 %3329
  %v3331 = vsel %vm545, %v3313, 0.0
  %3332 = vadd.xlane.f32.xlu0 %v3331
  %v3333 = vpop.xlane.xlu0 %3332
  %v3334 = vsel %vm545, %v3315, 0.0
  %3335 = vadd.xlane.f32.xlu0 %v3334
  %v3336 = vpop.xlane.xlu0 %3335
  %v3337 = vsel %vm545, %v3317, 0.0
  %3338 = vadd.xlane.f32.xlu0 %v3337
  %v3339 = vpop.xlane.xlu0 %3338
  %v3340 = vsel %vm545, %v3319, 0.0
  %3341 = vadd.xlane.f32.xlu0 %v3340
  %v3342 = vpop.xlane.xlu0 %3341
  %v3343 = vsel %vm545, %v3321, 0.0
  %3344 = vadd.xlane.f32.xlu0 %v3343
  %v3345 = vpop.xlane.xlu0 %3344
  %v3346 = vrcp.pop %v3324
  %v3347 = vmul.f32 %v3324, %v3346
  %v3348 = vsub.f32 1.0, %v3347
  %v3349 = vmul.f32 %v3346, %v3348
  %v3350 = vadd.f32 %v3346, %v3349
  %vm3351 = vweird.f32 %v3324
  %vm3352 = vweird.f32 %v3346
  %vm3353 = vmor %vm3351, %vm3352
  %v3354 = vsel %vm3353, %v3346, %v3350
  %v3355 = vand.u32 2147483647, %v3324
  %vm3356 = vcmp.eq.f32.partialorder %v3355, 8.507059e+37
  %v3357 = vand.u32 %v3324, 2147483648
  %v3358 = vor.u32 1.1754944e-38, %v3357
  %v3359 = vsel %vm3356, %v3358, %v3354
  %v3360 = vrcp.pop %v3327
  %v3361 = vmul.f32 %v3327, %v3360
  %v3362 = vsub.f32 1.0, %v3361
  %v3363 = vmul.f32 %v3360, %v3362
  %v3364 = vadd.f32 %v3360, %v3363
  %vm3365 = vweird.f32 %v3327
  %vm3366 = vweird.f32 %v3360
  %vm3367 = vmor %vm3365, %vm3366
  %v3368 = vsel %vm3367, %v3360, %v3364
  %v3369 = vand.u32 2147483647, %v3327
  %vm3370 = vcmp.eq.f32.partialorder %v3369, 8.507059e+37
  %v3371 = vand.u32 %v3327, 2147483648
  %v3372 = vor.u32 1.1754944e-38, %v3371
  %v3373 = vsel %vm3370, %v3372, %v3368
  %v3374 = vrcp.pop %v3330
  %v3375 = vmul.f32 %v3330, %v3374
  %v3376 = vsub.f32 1.0, %v3375
  %v3377 = vmul.f32 %v3374, %v3376
  %v3378 = vadd.f32 %v3374, %v3377
  %vm3379 = vweird.f32 %v3330
  %vm3380 = vweird.f32 %v3374
  %vm3381 = vmor %vm3379, %vm3380
  %v3382 = vsel %vm3381, %v3374, %v3378
  %v3383 = vand.u32 2147483647, %v3330
  %vm3384 = vcmp.eq.f32.partialorder %v3383, 8.507059e+37
  %v3385 = vand.u32 %v3330, 2147483648
  %v3386 = vor.u32 1.1754944e-38, %v3385
  %v3387 = vsel %vm3384, %v3386, %v3382
  %v3388 = vrcp.pop %v3333
  %v3389 = vmul.f32 %v3333, %v3388
  %v3390 = vsub.f32 1.0, %v3389
  %v3391 = vmul.f32 %v3388, %v3390
  %v3392 = vadd.f32 %v3388, %v3391
  %vm3393 = vweird.f32 %v3333
  %vm3394 = vweird.f32 %v3388
  %vm3395 = vmor %vm3393, %vm3394
  %v3396 = vsel %vm3395, %v3388, %v3392
  %v3397 = vand.u32 2147483647, %v3333
  %vm3398 = vcmp.eq.f32.partialorder %v3397, 8.507059e+37
  %v3399 = vand.u32 %v3333, 2147483648
  %v3400 = vor.u32 1.1754944e-38, %v3399
  %v3401 = vsel %vm3398, %v3400, %v3396
  %v3402 = vrcp.pop %v3336
  %v3403 = vmul.f32 %v3336, %v3402
  %v3404 = vsub.f32 1.0, %v3403
  %v3405 = vmul.f32 %v3402, %v3404
  %v3406 = vadd.f32 %v3402, %v3405
  %vm3407 = vweird.f32 %v3336
  %vm3408 = vweird.f32 %v3402
  %vm3409 = vmor %vm3407, %vm3408
  %v3410 = vsel %vm3409, %v3402, %v3406
  %v3411 = vand.u32 2147483647, %v3336
  %vm3412 = vcmp.eq.f32.partialorder %v3411, 8.507059e+37
  %v3413 = vand.u32 %v3336, 2147483648
  %v3414 = vor.u32 1.1754944e-38, %v3413
  %v3415 = vsel %vm3412, %v3414, %v3410
  %v3416 = vrcp.pop %v3339
  %v3417 = vmul.f32 %v3339, %v3416
  %v3418 = vsub.f32 1.0, %v3417
  %v3419 = vmul.f32 %v3416, %v3418
  %v3420 = vadd.f32 %v3416, %v3419
  %vm3421 = vweird.f32 %v3339
  %vm3422 = vweird.f32 %v3416
  %vm3423 = vmor %vm3421, %vm3422
  %v3424 = vsel %vm3423, %v3416, %v3420
  %v3425 = vand.u32 2147483647, %v3339
  %vm3426 = vcmp.eq.f32.partialorder %v3425, 8.507059e+37
  %v3427 = vand.u32 %v3339, 2147483648
  %v3428 = vor.u32 1.1754944e-38, %v3427
  %v3429 = vsel %vm3426, %v3428, %v3424
  %v3430 = vrcp.pop %v3342
  %v3431 = vmul.f32 %v3342, %v3430
  %v3432 = vsub.f32 1.0, %v3431
  %v3433 = vmul.f32 %v3430, %v3432
  %v3434 = vadd.f32 %v3430, %v3433
  %vm3435 = vweird.f32 %v3342
  %vm3436 = vweird.f32 %v3430
  %vm3437 = vmor %vm3435, %vm3436
  %v3438 = vsel %vm3437, %v3430, %v3434
  %v3439 = vand.u32 2147483647, %v3342
  %vm3440 = vcmp.eq.f32.partialorder %v3439, 8.507059e+37
  %v3441 = vand.u32 %v3342, 2147483648
  %v3442 = vor.u32 1.1754944e-38, %v3441
  %v3443 = vsel %vm3440, %v3442, %v3438
  %v3444 = vrcp.pop %v3345
  %v3445 = vmul.f32 %v3345, %v3444
  %v3446 = vsub.f32 1.0, %v3445
  %v3447 = vmul.f32 %v3444, %v3446
  %v3448 = vadd.f32 %v3444, %v3447
  %vm3449 = vweird.f32 %v3345
  %vm3450 = vweird.f32 %v3444
  %vm3451 = vmor %vm3449, %vm3450
  %v3452 = vsel %vm3451, %v3444, %v3448
  %v3453 = vand.u32 2147483647, %v3345
  %vm3454 = vcmp.eq.f32.partialorder %v3453, 8.507059e+37
  %v3455 = vand.u32 %v3345, 2147483648
  %v3456 = vor.u32 1.1754944e-38, %v3455
  %v3457 = vsel %vm3454, %v3456, %v3452
  %v3458 = vmul.f32 %v3307, %v3359
  %v3459 = vmul.f32 %v3309, %v3373
  %v3460 = vmul.f32 %v3311, %v3387
  %v3461 = vmul.f32 %v3313, %v3401
  %v3462 = vmul.f32 %v3315, %v3415
  %v3463 = vmul.f32 %v3317, %v3429
  %v3464 = vmul.f32 %v3319, %v3443
  %v3465 = vmul.f32 %v3321, %v3457
  %v3466 = vpack.c.bf16 %v3459, %v3458
  %v3467 = vpack.c.bf16 %v3461, %v3460
  %v3468 = vpack.c.bf16 %v3463, %v3462
  %v3469 = vpack.c.bf16 %v3465, %v3464
  %3470 = vrot.lane.b32.xlu0 %v2532, 104
  %v3471 = vpop.permute.xlu0 %3470
  %3472 = vrot.lane.b32.xlu0 %v2533, 104
  %v3473 = vpop.permute.xlu0 %3472
  %3474 = vrot.lane.b32.xlu0 %v2534, 104
  %v3475 = vpop.permute.xlu0 %3474
  %3476 = vrot.lane.b32.xlu0 %v2535, 104
  %v3477 = vpop.permute.xlu0 %3476
  %v3483 = vsel %vm545, %v3466, 0
  %v3486 = vsel %vm545, %v3467, 0
  %v3489 = vsel %vm545, %v3468, 0
  %v3492 = vsel %vm545, %v3469, 0
  %3494 = vmatpush.bf16.msra.mxu0 0
  %3495 = vmatpush.bf16.msra.mxu0 0
  %3496 = vmatpush.bf16.msra.mxu0 0
  %3497 = vmatpush.bf16.msra.mxu0 0
  %3498 = vmatpush.bf16.msra.mxu0 %v3477
  %3499 = vmatpush.bf16.msra.mxu0 %v3475
  %3500 = vmatpush.bf16.msra.mxu0 %v3473
  %3501 = vmatpush.bf16.msra.mxu0 %v3471
  %3502 = vmatmul.bf16.gmra.mxu0 %v3483
  %v3503 = vpop.f32.mrf.mxu0
  %v3504 = vadd.f32 0.0, %v3503
  %v3505 = vpop.f32.mrf.mxu0
  %v3506 = vadd.f32 0.0, %v3505
  %3507 = vmatmul.bf16.gmra.mxu0 %v3486
  %v3508 = vpop.f32.mrf.mxu0
  %v3509 = vadd.f32 0.0, %v3508
  %v3510 = vpop.f32.mrf.mxu0
  %v3511 = vadd.f32 0.0, %v3510
  %3512 = vmatmul.bf16.gmra.mxu0 %v3489
  %v3513 = vpop.f32.mrf.mxu0
  %v3514 = vadd.f32 0.0, %v3513
  %v3515 = vpop.f32.mrf.mxu0
  %v3516 = vadd.f32 0.0, %v3515
  %3517 = vmatmul.bf16.gmra.mxu0 %v3492
  %v3518 = vpop.f32.mrf.mxu0
  %v3519 = vadd.f32 0.0, %v3518
  %v3520 = vpop.f32.mrf.mxu0
  %v3521 = vadd.f32 0.0, %v3520
  %3522 = vdwg.mxu0
  %3531 = vrot.lane.b32.xlu0 %v2876, 8
  %v3532 = vpop.permute.xlu0 %3531
  %3533 = vrot.lane.b32.xlu0 %v2878, 8
  %v3534 = vpop.permute.xlu0 %3533
  %3535 = vrot.lane.b32.xlu0 %v2881, 8
  %v3536 = vpop.permute.xlu0 %3535
  %3537 = vrot.lane.b32.xlu0 %v2883, 8
  %v3538 = vpop.permute.xlu0 %3537
  %3539 = vrot.lane.b32.xlu0 %v2886, 8
  %v3540 = vpop.permute.xlu0 %3539
  %3541 = vrot.lane.b32.xlu0 %v2888, 8
  %v3542 = vpop.permute.xlu0 %3541
  %3543 = vrot.lane.b32.xlu0 %v2891, 8
  %v3544 = vpop.permute.xlu0 %3543
  %3545 = vrot.lane.b32.xlu0 %v2893, 8
  %v3546 = vpop.permute.xlu0 %3545
  %3563 = vrot.lane.b32.xlu0 %v3190, 16
  %v3564 = vpop.permute.xlu0 %3563
  %3565 = vrot.lane.b32.xlu0 %v3192, 16
  %v3566 = vpop.permute.xlu0 %3565
  %3567 = vrot.lane.b32.xlu0 %v3195, 16
  %v3568 = vpop.permute.xlu0 %3567
  %3569 = vrot.lane.b32.xlu0 %v3197, 16
  %v3570 = vpop.permute.xlu0 %3569
  %3571 = vrot.lane.b32.xlu0 %v3200, 16
  %v3572 = vpop.permute.xlu0 %3571
  %3573 = vrot.lane.b32.xlu0 %v3202, 16
  %v3574 = vpop.permute.xlu0 %3573
  %3575 = vrot.lane.b32.xlu0 %v3205, 16
  %v3576 = vpop.permute.xlu0 %3575
  %3577 = vrot.lane.b32.xlu0 %v3207, 16
  %v3578 = vpop.permute.xlu0 %3577
  %3595 = vrot.lane.b32.xlu0 %v3504, 24
  %v3596 = vpop.permute.xlu0 %3595
  %3597 = vrot.lane.b32.xlu0 %v3506, 24
  %v3598 = vpop.permute.xlu0 %3597
  %3599 = vrot.lane.b32.xlu0 %v3509, 24
  %v3600 = vpop.permute.xlu0 %3599
  %3601 = vrot.lane.b32.xlu0 %v3511, 24
  %v3602 = vpop.permute.xlu0 %3601
  %3603 = vrot.lane.b32.xlu0 %v3514, 24
  %v3604 = vpop.permute.xlu0 %3603
  %3605 = vrot.lane.b32.xlu0 %v3516, 24
  %v3606 = vpop.permute.xlu0 %3605
  %3607 = vrot.lane.b32.xlu0 %v3519, 24
  %v3608 = vpop.permute.xlu0 %3607
  %3609 = vrot.lane.b32.xlu0 %v3521, 24
  %v3610 = vpop.permute.xlu0 %3609
  %v3619 = vsel %vm1845, %v2562, %v3532
  %v3620 = vsel %vm1845, %v2564, %v3534
  %v3621 = vsel %vm1845, %v2567, %v3536
  %v3622 = vsel %vm1845, %v2569, %v3538
  %v3623 = vsel %vm1845, %v2572, %v3540
  %v3624 = vsel %vm1845, %v2574, %v3542
  %v3625 = vsel %vm1845, %v2577, %v3544
  %v3626 = vsel %vm1845, %v2579, %v3546
  %v3627 = vsel %vm1854, %v3619, %v3564
  %v3628 = vsel %vm1854, %v3620, %v3566
  %v3629 = vsel %vm1854, %v3621, %v3568
  %v3630 = vsel %vm1854, %v3622, %v3570
  %v3631 = vsel %vm1854, %v3623, %v3572
  %v3632 = vsel %vm1854, %v3624, %v3574
  %v3633 = vsel %vm1854, %v3625, %v3576
  %v3634 = vsel %vm1854, %v3626, %v3578
  %v3635 = vsel %vm1863, %v3627, %v3596
  %v3636 = vsel %vm1863, %v3628, %v3598
  %v3637 = vsel %vm1863, %v3629, %v3600
  %v3638 = vsel %vm1863, %v3630, %v3602
  %v3639 = vsel %vm1863, %v3631, %v3604
  %v3640 = vsel %vm1863, %v3632, %v3606
  %v3641 = vsel %vm1863, %v3633, %v3608
  %v3642 = vsel %vm1863, %v3634, %v3610
  %v3643 = vld [vmem:[%s17] sm:$0x1]
  %v3645 = vperm.slane %v3643, 0
  %v3647 = vadd.f32 %v3635, %v3645
  %v3648 = vadd.f32 %v3636, %v3645
  %v3649 = vadd.f32 %v3637, %v3645
  %v3650 = vadd.f32 %v3638, %v3645
  %v3651 = vadd.f32 %v3639, %v3645
  %v3652 = vadd.f32 %v3640, %v3645
  %v3653 = vadd.f32 %v3641, %v3645
  %v3654 = vadd.f32 %v3642, %v3645
  %v3655 = vld [vmem:[%s12] sm:$0xff]
  %v3656 = vld [vmem:[%s12 + $0x8] sm:$0xff]
  %v3657 = vld [vmem:[%s12 + $0x10] sm:$0xff]
  %v3658 = vld [vmem:[%s12 + $0x18] sm:$0xff]
  %v3659 = vpack.c.bf16 %v3656, %v3655
  %v3660 = vpack.c.bf16 %v3658, %v3657
  %v3661 = vld [vmem:[%s13] sm:$0x1]
  %v3663 = vperm.slane %v3661, 0
  %3665 = vmatpush.bf16.msra.mxu0 0
  %3666 = vmatpush.bf16.msra.mxu0 0
  %3667 = vmatpush.bf16.msra.mxu0 0
  %3668 = vmatpush.bf16.msra.mxu0 0
  %3669 = vmatpush.bf16.msra.mxu0 0
  %3670 = vmatpush.bf16.msra.mxu0 0
  %3671 = vmatpush.bf16.msra.mxu0 %v3660
  %3672 = vmatpush.bf16.msra.mxu0 %v3659
  %3673 = vmatmul.bf16.gmra.mxu0 %v2053
  %v3674 = vpop.f32.mrf.mxu0
  %v3675 = vadd.f32 %v3663, %v3674
  %v3676 = vpop.f32.mrf.mxu0
  %v3677 = vadd.f32 %v3663, %v3676
  %3678 = vmatmul.bf16.gmra.mxu0 %v2056
  %v3679 = vpop.f32.mrf.mxu0
  %v3680 = vadd.f32 %v3663, %v3679
  %v3681 = vpop.f32.mrf.mxu0
  %v3682 = vadd.f32 %v3663, %v3681
  %3683 = vmatmul.bf16.gmra.mxu0 %v2059
  %v3684 = vpop.f32.mrf.mxu0
  %v3685 = vadd.f32 %v3663, %v3684
  %v3686 = vpop.f32.mrf.mxu0
  %v3687 = vadd.f32 %v3663, %v3686
  %3688 = vmatmul.bf16.gmra.mxu0 %v2062
  %v3689 = vpop.f32.mrf.mxu0
  %v3690 = vadd.f32 %v3663, %v3689
  %v3691 = vpop.f32.mrf.mxu0
  %v3692 = vadd.f32 %v3663, %v3691
  %3693 = vdwg.mxu0
  %v3694 = vadd.f32 %v3675, %v3647
  %v3695 = vadd.f32 %v3677, %v3648
  %v3696 = vadd.f32 %v3680, %v3649
  %v3697 = vadd.f32 %v3682, %v3650
  %v3698 = vadd.f32 %v3685, %v3651
  %v3699 = vadd.f32 %v3687, %v3652
  %v3700 = vadd.f32 %v3690, %v3653
  %v3701 = vadd.f32 %v3692, %v3654
  %v3702 = vmax.f32 %v3694, 0.0
  %v3703 = vmax.f32 %v3695, 0.0
  %v3704 = vmax.f32 %v3696, 0.0
  %v3705 = vmax.f32 %v3697, 0.0
  %v3706 = vmax.f32 %v3698, 0.0
  %v3707 = vmax.f32 %v3699, 0.0
  %v3708 = vmax.f32 %v3700, 0.0
  %v3709 = vmax.f32 %v3701, 0.0
  %v3710 = vsel %vm98, %v3702, 0.0
  %v3711 = vsel %vm98, %v3703, 0.0
  %v3712 = vadd.f32 %v3710, %v3711
  %v3713 = vsel %vm98, %v3704, 0.0
  %v3714 = vadd.f32 %v3712, %v3713
  %v3715 = vsel %vm98, %v3705, 0.0
  %v3716 = vadd.f32 %v3714, %v3715
  %v3717 = vsel %vm98, %v3706, 0.0
  %v3718 = vadd.f32 %v3716, %v3717
  %v3719 = vsel %vm98, %v3707, 0.0
  %v3720 = vadd.f32 %v3718, %v3719
  %v3721 = vsel %vm98, %v3708, 0.0
  %v3722 = vadd.f32 %v3720, %v3721
  %v3723 = vsel %vm98, %v3709, 0.0
  %v3724 = vadd.f32 %v3722, %v3723
  %v3725 = vrot.slane %v3724, 4
  %v3726 = vadd.f32 %v3724, %v3725
  %v3727 = vrot.slane %v3726, 2
  %v3728 = vadd.f32 %v3726, %v3727
  %v3729 = vrot.slane %v3728, 1
  %v3730 = vadd.f32 %v3728, %v3729
  %v3731 = vmul.f32 %v3730, %v126
  %v3732 = vsub.f32 %v3702, %v3731
  %v3733 = vsub.f32 %v3703, %v3731
  %v3734 = vsub.f32 %v3704, %v3731
  %v3735 = vsub.f32 %v3705, %v3731
  %v3736 = vsub.f32 %v3706, %v3731
  %v3737 = vsub.f32 %v3707, %v3731
  %v3738 = vsub.f32 %v3708, %v3731
  %v3739 = vsub.f32 %v3709, %v3731
  %v3740 = vmul.f32 %v3732, %v3732
  %v3741 = vmul.f32 %v3733, %v3733
  %v3742 = vmul.f32 %v3734, %v3734
  %v3743 = vmul.f32 %v3735, %v3735
  %v3744 = vmul.f32 %v3736, %v3736
  %v3745 = vmul.f32 %v3737, %v3737
  %v3746 = vmul.f32 %v3738, %v3738
  %v3747 = vmul.f32 %v3739, %v3739
  %v3748 = vsel %vm98, %v3740, 0.0
  %v3749 = vsel %vm98, %v3741, 0.0
  %v3750 = vadd.f32 %v3748, %v3749
  %v3751 = vsel %vm98, %v3742, 0.0
  %v3752 = vadd.f32 %v3750, %v3751
  %v3753 = vsel %vm98, %v3743, 0.0
  %v3754 = vadd.f32 %v3752, %v3753
  %v3755 = vsel %vm98, %v3744, 0.0
  %v3756 = vadd.f32 %v3754, %v3755
  %v3757 = vsel %vm98, %v3745, 0.0
  %v3758 = vadd.f32 %v3756, %v3757
  %v3759 = vsel %vm98, %v3746, 0.0
  %v3760 = vadd.f32 %v3758, %v3759
  %v3761 = vsel %vm98, %v3747, 0.0
  %v3762 = vadd.f32 %v3760, %v3761
  %v3763 = vrot.slane %v3762, 4
  %v3764 = vadd.f32 %v3762, %v3763
  %v3765 = vrot.slane %v3764, 2
  %v3766 = vadd.f32 %v3764, %v3765
  %v3767 = vrot.slane %v3766, 1
  %v3768 = vadd.f32 %v3766, %v3767
  %v3769 = vmul.f32 %v3768, %v126
  %v3770 = vadd.f32 %v3769, 1e-05
  %v3771 = vrsqrt.pop %v3770
  %v3772 = vmul.f32 %v3771, %v3770
  %v3773 = vmul.f32 %v3772, %v3771
  %v3774 = vmul.f32 0.5, %v3773
  %v3775 = vsub.f32 1.5, %v3774
  %v3776 = vmul.f32 %v3771, %v3775
  %vm3777 = vweird.f32 %v3770
  %vm3778 = vweird.f32 %v3771
  %vm3779 = vmor %vm3777, %vm3778
  %v3780 = vsel %vm3779, %v3771, %v3776
  %v3781 = vmul.f32 %v3732, %v3780
  %v3782 = vmul.f32 %v3733, %v3780
  %v3783 = vmul.f32 %v3734, %v3780
  %v3784 = vmul.f32 %v3735, %v3780
  %v3785 = vmul.f32 %v3736, %v3780
  %v3786 = vmul.f32 %v3737, %v3780
  %v3787 = vmul.f32 %v3738, %v3780
  %v3788 = vmul.f32 %v3739, %v3780
  %v3789 = vld [vmem:[%s18] sm:$0x1]
  %v3791 = vperm.slane %v3789, 0
  %v3793 = vmul.f32 %v3781, %v3791
  %v3794 = vmul.f32 %v3782, %v3791
  %v3795 = vmul.f32 %v3783, %v3791
  %v3796 = vmul.f32 %v3784, %v3791
  %v3797 = vmul.f32 %v3785, %v3791
  %v3798 = vmul.f32 %v3786, %v3791
  %v3799 = vmul.f32 %v3787, %v3791
  %v3800 = vmul.f32 %v3788, %v3791
  %v3801 = vld [vmem:[%s19] sm:$0x1]
  %v3803 = vperm.slane %v3801, 0
  %v3805 = vadd.f32 %v3793, %v3803
  %v3806 = vadd.f32 %v3794, %v3803
  %v3807 = vadd.f32 %v3795, %v3803
  %v3808 = vadd.f32 %v3796, %v3803
  %v3809 = vadd.f32 %v3797, %v3803
  %v3810 = vadd.f32 %v3798, %v3803
  %v3811 = vadd.f32 %v3799, %v3803
  %v3812 = vadd.f32 %v3800, %v3803
  %v3813 = vpack.c.bf16 %v3806, %v3805
  %v3814 = vpack.c.bf16 %v3808, %v3807
  %v3815 = vpack.c.bf16 %v3810, %v3809
  %v3816 = vpack.c.bf16 %v3812, %v3811
  %v3817 = vld [vmem:[%s22] sm:$0xff]
  %v3818 = vld [vmem:[%s22 + $0x8] sm:$0xff]
  %v3819 = vld [vmem:[%s22 + $0x10] sm:$0xff]
  %v3820 = vld [vmem:[%s22 + $0x18] sm:$0xff]
  %v3821 = vpack.c.bf16 %v3818, %v3817
  %v3822 = vpack.c.bf16 %v3820, %v3819
  %v3824 = vsel %vm98, %v3813, 0
  %v3827 = vsel %vm98, %v3814, 0
  %v3830 = vsel %vm98, %v3815, 0
  %v3833 = vsel %vm98, %v3816, 0
  %3835 = vmatpush.bf16.msra.mxu0 0
  %3836 = vmatpush.bf16.msra.mxu0 0
  %3837 = vmatpush.bf16.msra.mxu0 0
  %3838 = vmatpush.bf16.msra.mxu0 0
  %3839 = vmatpush.bf16.msra.mxu0 0
  %3840 = vmatpush.bf16.msra.mxu0 0
  %3841 = vmatpush.bf16.msra.mxu0 %v3822
  %3842 = vmatpush.bf16.msra.mxu0 %v3821
  %3843 = vmatmul.bf16.gmra.mxu0 %v3824
  %v3844 = vpop.f32.mrf.mxu0
  %v3845 = vadd.f32 0.0, %v3844
  %v3846 = vpop.f32.mrf.mxu0
  %v3847 = vadd.f32 0.0, %v3846
  %3848 = vmatmul.bf16.gmra.mxu0 %v3827
  %v3849 = vpop.f32.mrf.mxu0
  %v3850 = vadd.f32 0.0, %v3849
  %v3851 = vpop.f32.mrf.mxu0
  %v3852 = vadd.f32 0.0, %v3851
  %3853 = vmatmul.bf16.gmra.mxu0 %v3830
  %v3854 = vpop.f32.mrf.mxu0
  %v3855 = vadd.f32 0.0, %v3854
  %v3856 = vpop.f32.mrf.mxu0
  %v3857 = vadd.f32 0.0, %v3856
  %3858 = vmatmul.bf16.gmra.mxu0 %v3833
  %v3859 = vpop.f32.mrf.mxu0
  %v3860 = vadd.f32 0.0, %v3859
  %v3861 = vpop.f32.mrf.mxu0
  %v3862 = vadd.f32 0.0, %v3861
  %3863 = vdwg.mxu0
  %v3864 = vpack.c.bf16 %v3847, %v3845
  %v3865 = vpack.c.bf16 %v3852, %v3850
  %v3866 = vpack.c.bf16 %v3857, %v3855
  %v3867 = vpack.c.bf16 %v3862, %v3860
  %v3868 = vld [vmem:[%s23] sm:$0x3]
  %vm3869 = vcmask 15360
  %v3871 = vsel %vm3869, %v3845, 0
  %v3874 = vsel %vm3869, %v3847, 0
  %v3877 = vsel %vm3869, %v3850, 0
  %v3880 = vsel %vm3869, %v3852, 0
  %v3883 = vsel %vm3869, %v3855, 0
  %v3886 = vsel %vm3869, %v3857, 0
  %v3889 = vsel %vm3869, %v3860, 0
  %v3892 = vsel %vm3869, %v3862, 0
  %vm3894 = vcmask 1041408
  %v3896 = vsel %vm3894, %v3868, 0
  %3898 = vmatpush.msra.mxu0 0.0
  %3899 = vmatpush.msra.mxu0 0.0
  %3900 = vmatpush.msra.mxu0 0.0
  %3901 = vmatpush.msra.mxu0 0.0
  %3902 = vmatpush.msra.mxu0 0.0
  %3903 = vmatpush.msra.mxu0 0.0
  %3904 = vmatpush.msra.mxu0 0.0
  %3905 = vmatpush.msra.mxu0 0.0
  %3906 = vmatpush.msra.mxu0 0.0
  %3907 = vmatpush.msra.mxu0 0.0
  %3908 = vmatpush.msra.mxu0 0.0
  %3909 = vmatpush.msra.mxu0 0.0
  %3910 = vmatpush.msra.mxu0 0.0
  %3911 = vmatpush.msra.mxu0 0.0
  %3912 = vmatpush.msra.mxu0 0.0
  %3913 = vmatpush.msra.mxu0 %v3896
  %3914 = vmatmul.f32.gmra.mxu0 %v3871
  %v3915 = vpop.f32.mrf.mxu0
  %v3916 = vadd.f32 0.0, %v3915
  %3917 = vmatmul.f32.gmra.mxu0 %v3874
  %v3918 = vpop.f32.mrf.mxu0
  %v3919 = vadd.f32 0.0, %v3918
  %3920 = vmatmul.f32.gmra.mxu0 %v3877
  %v3921 = vpop.f32.mrf.mxu0
  %v3922 = vadd.f32 0.0, %v3921
  %3923 = vmatmul.f32.gmra.mxu0 %v3880
  %v3924 = vpop.f32.mrf.mxu0
  %v3925 = vadd.f32 0.0, %v3924
  %3926 = vmatmul.f32.gmra.mxu0 %v3883
  %v3927 = vpop.f32.mrf.mxu0
  %v3928 = vadd.f32 0.0, %v3927
  %3929 = vmatmul.f32.gmra.mxu0 %v3886
  %v3930 = vpop.f32.mrf.mxu0
  %v3931 = vadd.f32 0.0, %v3930
  %3932 = vmatmul.f32.gmra.mxu0 %v3889
  %v3933 = vpop.f32.mrf.mxu0
  %v3934 = vadd.f32 0.0, %v3933
  %3935 = vmatmul.f32.gmra.mxu0 %v3892
  %v3936 = vpop.f32.mrf.mxu0
  %v3937 = vadd.f32 0.0, %v3936
  %3938 = vdwg.mxu0
  %v3939 = vld [vmem:[%s24] sm:$0x3]
  %v3941 = vsel %vm3894, %v3939, 0
  %3943 = vmatpush.msra.mxu0 0.0
  %3944 = vmatpush.msra.mxu0 0.0
  %3945 = vmatpush.msra.mxu0 0.0
  %3946 = vmatpush.msra.mxu0 0.0
  %3947 = vmatpush.msra.mxu0 0.0
  %3948 = vmatpush.msra.mxu0 0.0
  %3949 = vmatpush.msra.mxu0 0.0
  %3950 = vmatpush.msra.mxu0 0.0
  %3951 = vmatpush.msra.mxu0 0.0
  %3952 = vmatpush.msra.mxu0 0.0
  %3953 = vmatpush.msra.mxu0 0.0
  %3954 = vmatpush.msra.mxu0 0.0
  %3955 = vmatpush.msra.mxu0 0.0
  %3956 = vmatpush.msra.mxu0 0.0
  %3957 = vmatpush.msra.mxu0 0.0
  %3958 = vmatpush.msra.mxu0 %v3941
  %3959 = vmatmul.f32.gmra.mxu0 %v3871
  %v3960 = vpop.f32.mrf.mxu0
  %v3961 = vadd.f32 0.0, %v3960
  %3962 = vmatmul.f32.gmra.mxu0 %v3874
  %v3963 = vpop.f32.mrf.mxu0
  %v3964 = vadd.f32 0.0, %v3963
  %3965 = vmatmul.f32.gmra.mxu0 %v3877
  %v3966 = vpop.f32.mrf.mxu0
  %v3967 = vadd.f32 0.0, %v3966
  %3968 = vmatmul.f32.gmra.mxu0 %v3880
  %v3969 = vpop.f32.mrf.mxu0
  %v3970 = vadd.f32 0.0, %v3969
  %3971 = vmatmul.f32.gmra.mxu0 %v3883
  %v3972 = vpop.f32.mrf.mxu0
  %v3973 = vadd.f32 0.0, %v3972
  %3974 = vmatmul.f32.gmra.mxu0 %v3886
  %v3975 = vpop.f32.mrf.mxu0
  %v3976 = vadd.f32 0.0, %v3975
  %3977 = vmatmul.f32.gmra.mxu0 %v3889
  %v3978 = vpop.f32.mrf.mxu0
  %v3979 = vadd.f32 0.0, %v3978
  %3980 = vmatmul.f32.gmra.mxu0 %v3892
  %v3981 = vpop.f32.mrf.mxu0
  %v3982 = vadd.f32 0.0, %v3981
  %3983 = vdwg.mxu0
  %3984 = vxpose.xlu0.b32.start [1/16] %v3916, 128
  %3985 = vxpose.xlu0.b32.cont [2/16] %v3919, 128
  %3986 = vxpose.xlu0.b32.cont [3/16] %v3922, 128
  %3987 = vxpose.xlu0.b32.cont [4/16] %v3925, 128
  %3988 = vxpose.xlu0.b32.cont [5/16] %v3928, 128
  %3989 = vxpose.xlu0.b32.cont [6/16] %v3931, 128
  %3990 = vxpose.xlu0.b32.cont [7/16] %v3934, 128
  %3991 = vxpose.xlu0.b32.cont [8/16] %v3937, 128
  %3992 = vxpose.xlu0.b32.cont [9/16] 0.0, 128
  %3993 = vxpose.xlu0.b32.cont [10/16] 0.0, 128
  %3994 = vxpose.xlu0.b32.cont [11/16] 0.0, 128
  %3995 = vxpose.xlu0.b32.cont [12/16] 0.0, 128
  %3996 = vxpose.xlu0.b32.cont [13/16] 0.0, 128
  %3997 = vxpose.xlu0.b32.cont [14/16] 0.0, 128
  %3998 = vxpose.xlu0.b32.cont [15/16] 0.0, 128
  %3999 = vxpose.xlu0.b32.end [16/16] 0.0, 128
  %v4000 = vpop.trf.xlu0
  %v4001 = vpop.trf.xlu0
  %v4002 = vpop.trf.xlu0
  %v4003 = vpop.trf.xlu0
  %v4004 = vpop.trf.xlu0
  %v4005 = vpop.trf.xlu0
  %v4006 = vpop.trf.xlu0
  %v4007 = vpop.trf.xlu0
  %v4008 = vpop.trf.xlu0
  %v4009 = vpop.trf.xlu0
  %v4010 = vpop.trf.xlu0
  %v4011 = vpop.trf.xlu0
  %v4012 = vpop.trf.xlu0
  %v4013 = vpop.trf.xlu0
  %v4014 = vpop.trf.xlu0
  %v4015 = vpop.trf.xlu0
  %4017 = vset.pattern.permute.xlu0 0
  %4018 = vperm.xlu0 %4017, %v3961
  %v4019 = vpop.permute.xlu0 %4018
  %4022 = vset.pattern.permute.xlu0 0
  %4023 = vperm.xlu0 %4022, %v3964
  %v4024 = vpop.permute.xlu0 %4023
  %4027 = vset.pattern.permute.xlu0 0
  %4028 = vperm.xlu0 %4027, %v3967
  %v4029 = vpop.permute.xlu0 %4028
  %4032 = vset.pattern.permute.xlu0 0
  %4033 = vperm.xlu0 %4032, %v3970
  %v4034 = vpop.permute.xlu0 %4033
  %4037 = vset.pattern.permute.xlu0 0
  %4038 = vperm.xlu0 %4037, %v3973
  %v4039 = vpop.permute.xlu0 %4038
  %4042 = vset.pattern.permute.xlu0 0
  %4043 = vperm.xlu0 %4042, %v3976
  %v4044 = vpop.permute.xlu0 %4043
  %4047 = vset.pattern.permute.xlu0 0
  %4048 = vperm.xlu0 %4047, %v3979
  %v4049 = vpop.permute.xlu0 %4048
  %4052 = vset.pattern.permute.xlu0 0
  %4053 = vperm.xlu0 %4052, %v3982
  %v4054 = vpop.permute.xlu0 %4053
  %v4056 = vperm.slane %v4000, 0
  %v4057 = vadd.f32 %v4019, %v4056
  %v4058 = vadd.f32 %v4024, %v4056
  %v4059 = vadd.f32 %v4029, %v4056
  %v4060 = vadd.f32 %v4034, %v4056
  %v4061 = vadd.f32 %v4039, %v4056
  %v4062 = vadd.f32 %v4044, %v4056
  %v4063 = vadd.f32 %v4049, %v4056
  %v4064 = vadd.f32 %v4054, %v4056
  %v4065 = vmul.f32 %v4057, 0.2
  %v4066 = vmul.f32 %v4058, 0.2
  %v4067 = vmul.f32 %v4059, 0.2
  %v4068 = vmul.f32 %v4060, 0.2
  %v4069 = vmul.f32 %v4061, 0.2
  %v4070 = vmul.f32 %v4062, 0.2
  %v4071 = vmul.f32 %v4063, 0.2
  %v4072 = vmul.f32 %v4064, 0.2
  %v4073 = vmax.f32 %v4057, %v4065
  %v4074 = vmax.f32 %v4058, %v4066
  %v4075 = vmax.f32 %v4059, %v4067
  %v4076 = vmax.f32 %v4060, %v4068
  %v4077 = vmax.f32 %v4061, %v4069
  %v4078 = vmax.f32 %v4062, %v4070
  %v4079 = vmax.f32 %v4063, %v4071
  %v4080 = vmax.f32 %v4064, %v4072
  %v4081 = vsel %vm529, %v4073, -1e+30
  %v4082 = vsel %vm530, %v4074, -1e+30
  %v4083 = vsel %vm531, %v4075, -1e+30
  %v4084 = vsel %vm532, %v4076, -1e+30
  %v4085 = vsel %vm533, %v4077, -1e+30
  %v4086 = vsel %vm534, %v4078, -1e+30
  %v4087 = vsel %vm535, %v4079, -1e+30
  %v4088 = vsel %vm536, %v4080, -1e+30
  %v4089 = vsel %vm545, %v4081, -inf
  %4090 = vmax.xlane.f32.xlu0 %v4089
  %v4091 = vpop.xlane.xlu0 %4090
  %v4092 = vsel %vm545, %v4082, -inf
  %4093 = vmax.xlane.f32.xlu0 %v4092
  %v4094 = vpop.xlane.xlu0 %4093
  %v4095 = vsel %vm545, %v4083, -inf
  %4096 = vmax.xlane.f32.xlu0 %v4095
  %v4097 = vpop.xlane.xlu0 %4096
  %v4098 = vsel %vm545, %v4084, -inf
  %4099 = vmax.xlane.f32.xlu0 %v4098
  %v4100 = vpop.xlane.xlu0 %4099
  %v4101 = vsel %vm545, %v4085, -inf
  %4102 = vmax.xlane.f32.xlu0 %v4101
  %v4103 = vpop.xlane.xlu0 %4102
  %v4104 = vsel %vm545, %v4086, -inf
  %4105 = vmax.xlane.f32.xlu0 %v4104
  %v4106 = vpop.xlane.xlu0 %4105
  %v4107 = vsel %vm545, %v4087, -inf
  %4108 = vmax.xlane.f32.xlu0 %v4107
  %v4109 = vpop.xlane.xlu0 %4108
  %v4110 = vsel %vm545, %v4088, -inf
  %4111 = vmax.xlane.f32.xlu0 %v4110
  %v4112 = vpop.xlane.xlu0 %4111
  %v4113 = vsub.f32 %v4081, %v4091
  %v4114 = vsub.f32 %v4082, %v4094
  %v4115 = vsub.f32 %v4083, %v4097
  %v4116 = vsub.f32 %v4084, %v4100
  %v4117 = vsub.f32 %v4085, %v4103
  %v4118 = vsub.f32 %v4086, %v4106
  %v4119 = vsub.f32 %v4087, %v4109
  %v4120 = vsub.f32 %v4088, %v4112
  %v4121 = vmul.f32 %v4113, 1.442695
  %v4122 = vpow.pop %v4121
  %v4123 = vmul.f32 %v4114, 1.442695
  %v4124 = vpow.pop %v4123
  %v4125 = vmul.f32 %v4115, 1.442695
  %v4126 = vpow.pop %v4125
  %v4127 = vmul.f32 %v4116, 1.442695
  %v4128 = vpow.pop %v4127
  %v4129 = vmul.f32 %v4117, 1.442695
  %v4130 = vpow.pop %v4129
  %v4131 = vmul.f32 %v4118, 1.442695
  %v4132 = vpow.pop %v4131
  %v4133 = vmul.f32 %v4119, 1.442695
  %v4134 = vpow.pop %v4133
  %v4135 = vmul.f32 %v4120, 1.442695
  %v4136 = vpow.pop %v4135
  %v4137 = vsel %vm545, %v4122, 0.0
  %4138 = vadd.xlane.f32.xlu0 %v4137
  %v4139 = vpop.xlane.xlu0 %4138
  %v4140 = vsel %vm545, %v4124, 0.0
  %4141 = vadd.xlane.f32.xlu0 %v4140
  %v4142 = vpop.xlane.xlu0 %4141
  %v4143 = vsel %vm545, %v4126, 0.0
  %4144 = vadd.xlane.f32.xlu0 %v4143
  %v4145 = vpop.xlane.xlu0 %4144
  %v4146 = vsel %vm545, %v4128, 0.0
  %4147 = vadd.xlane.f32.xlu0 %v4146
  %v4148 = vpop.xlane.xlu0 %4147
  %v4149 = vsel %vm545, %v4130, 0.0
  %4150 = vadd.xlane.f32.xlu0 %v4149
  %v4151 = vpop.xlane.xlu0 %4150
  %v4152 = vsel %vm545, %v4132, 0.0
  %4153 = vadd.xlane.f32.xlu0 %v4152
  %v4154 = vpop.xlane.xlu0 %4153
  %v4155 = vsel %vm545, %v4134, 0.0
  %4156 = vadd.xlane.f32.xlu0 %v4155
  %v4157 = vpop.xlane.xlu0 %4156
  %v4158 = vsel %vm545, %v4136, 0.0
  %4159 = vadd.xlane.f32.xlu0 %v4158
  %v4160 = vpop.xlane.xlu0 %4159
  %v4161 = vrcp.pop %v4139
  %v4162 = vmul.f32 %v4139, %v4161
  %v4163 = vsub.f32 1.0, %v4162
  %v4164 = vmul.f32 %v4161, %v4163
  %v4165 = vadd.f32 %v4161, %v4164
  %vm4166 = vweird.f32 %v4139
  %vm4167 = vweird.f32 %v4161
  %vm4168 = vmor %vm4166, %vm4167
  %v4169 = vsel %vm4168, %v4161, %v4165
  %v4170 = vand.u32 2147483647, %v4139
  %vm4171 = vcmp.eq.f32.partialorder %v4170, 8.507059e+37
  %v4172 = vand.u32 %v4139, 2147483648
  %v4173 = vor.u32 1.1754944e-38, %v4172
  %v4174 = vsel %vm4171, %v4173, %v4169
  %v4175 = vrcp.pop %v4142
  %v4176 = vmul.f32 %v4142, %v4175
  %v4177 = vsub.f32 1.0, %v4176
  %v4178 = vmul.f32 %v4175, %v4177
  %v4179 = vadd.f32 %v4175, %v4178
  %vm4180 = vweird.f32 %v4142
  %vm4181 = vweird.f32 %v4175
  %vm4182 = vmor %vm4180, %vm4181
  %v4183 = vsel %vm4182, %v4175, %v4179
  %v4184 = vand.u32 2147483647, %v4142
  %vm4185 = vcmp.eq.f32.partialorder %v4184, 8.507059e+37
  %v4186 = vand.u32 %v4142, 2147483648
  %v4187 = vor.u32 1.1754944e-38, %v4186
  %v4188 = vsel %vm4185, %v4187, %v4183
  %v4189 = vrcp.pop %v4145
  %v4190 = vmul.f32 %v4145, %v4189
  %v4191 = vsub.f32 1.0, %v4190
  %v4192 = vmul.f32 %v4189, %v4191
  %v4193 = vadd.f32 %v4189, %v4192
  %vm4194 = vweird.f32 %v4145
  %vm4195 = vweird.f32 %v4189
  %vm4196 = vmor %vm4194, %vm4195
  %v4197 = vsel %vm4196, %v4189, %v4193
  %v4198 = vand.u32 2147483647, %v4145
  %vm4199 = vcmp.eq.f32.partialorder %v4198, 8.507059e+37
  %v4200 = vand.u32 %v4145, 2147483648
  %v4201 = vor.u32 1.1754944e-38, %v4200
  %v4202 = vsel %vm4199, %v4201, %v4197
  %v4203 = vrcp.pop %v4148
  %v4204 = vmul.f32 %v4148, %v4203
  %v4205 = vsub.f32 1.0, %v4204
  %v4206 = vmul.f32 %v4203, %v4205
  %v4207 = vadd.f32 %v4203, %v4206
  %vm4208 = vweird.f32 %v4148
  %vm4209 = vweird.f32 %v4203
  %vm4210 = vmor %vm4208, %vm4209
  %v4211 = vsel %vm4210, %v4203, %v4207
  %v4212 = vand.u32 2147483647, %v4148
  %vm4213 = vcmp.eq.f32.partialorder %v4212, 8.507059e+37
  %v4214 = vand.u32 %v4148, 2147483648
  %v4215 = vor.u32 1.1754944e-38, %v4214
  %v4216 = vsel %vm4213, %v4215, %v4211
  %v4217 = vrcp.pop %v4151
  %v4218 = vmul.f32 %v4151, %v4217
  %v4219 = vsub.f32 1.0, %v4218
  %v4220 = vmul.f32 %v4217, %v4219
  %v4221 = vadd.f32 %v4217, %v4220
  %vm4222 = vweird.f32 %v4151
  %vm4223 = vweird.f32 %v4217
  %vm4224 = vmor %vm4222, %vm4223
  %v4225 = vsel %vm4224, %v4217, %v4221
  %v4226 = vand.u32 2147483647, %v4151
  %vm4227 = vcmp.eq.f32.partialorder %v4226, 8.507059e+37
  %v4228 = vand.u32 %v4151, 2147483648
  %v4229 = vor.u32 1.1754944e-38, %v4228
  %v4230 = vsel %vm4227, %v4229, %v4225
  %v4231 = vrcp.pop %v4154
  %v4232 = vmul.f32 %v4154, %v4231
  %v4233 = vsub.f32 1.0, %v4232
  %v4234 = vmul.f32 %v4231, %v4233
  %v4235 = vadd.f32 %v4231, %v4234
  %vm4236 = vweird.f32 %v4154
  %vm4237 = vweird.f32 %v4231
  %vm4238 = vmor %vm4236, %vm4237
  %v4239 = vsel %vm4238, %v4231, %v4235
  %v4240 = vand.u32 2147483647, %v4154
  %vm4241 = vcmp.eq.f32.partialorder %v4240, 8.507059e+37
  %v4242 = vand.u32 %v4154, 2147483648
  %v4243 = vor.u32 1.1754944e-38, %v4242
  %v4244 = vsel %vm4241, %v4243, %v4239
  %v4245 = vrcp.pop %v4157
  %v4246 = vmul.f32 %v4157, %v4245
  %v4247 = vsub.f32 1.0, %v4246
  %v4248 = vmul.f32 %v4245, %v4247
  %v4249 = vadd.f32 %v4245, %v4248
  %vm4250 = vweird.f32 %v4157
  %vm4251 = vweird.f32 %v4245
  %vm4252 = vmor %vm4250, %vm4251
  %v4253 = vsel %vm4252, %v4245, %v4249
  %v4254 = vand.u32 2147483647, %v4157
  %vm4255 = vcmp.eq.f32.partialorder %v4254, 8.507059e+37
  %v4256 = vand.u32 %v4157, 2147483648
  %v4257 = vor.u32 1.1754944e-38, %v4256
  %v4258 = vsel %vm4255, %v4257, %v4253
  %v4259 = vrcp.pop %v4160
  %v4260 = vmul.f32 %v4160, %v4259
  %v4261 = vsub.f32 1.0, %v4260
  %v4262 = vmul.f32 %v4259, %v4261
  %v4263 = vadd.f32 %v4259, %v4262
  %vm4264 = vweird.f32 %v4160
  %vm4265 = vweird.f32 %v4259
  %vm4266 = vmor %vm4264, %vm4265
  %v4267 = vsel %vm4266, %v4259, %v4263
  %v4268 = vand.u32 2147483647, %v4160
  %vm4269 = vcmp.eq.f32.partialorder %v4268, 8.507059e+37
  %v4270 = vand.u32 %v4160, 2147483648
  %v4271 = vor.u32 1.1754944e-38, %v4270
  %v4272 = vsel %vm4269, %v4271, %v4267
  %v4273 = vmul.f32 %v4122, %v4174
  %v4274 = vmul.f32 %v4124, %v4188
  %v4275 = vmul.f32 %v4126, %v4202
  %v4276 = vmul.f32 %v4128, %v4216
  %v4277 = vmul.f32 %v4130, %v4230
  %v4278 = vmul.f32 %v4132, %v4244
  %v4279 = vmul.f32 %v4134, %v4258
  %v4280 = vmul.f32 %v4136, %v4272
  %v4281 = vpack.c.bf16 %v4274, %v4273
  %v4282 = vpack.c.bf16 %v4276, %v4275
  %v4283 = vpack.c.bf16 %v4278, %v4277
  %v4284 = vpack.c.bf16 %v4280, %v4279
  %v4285 = vld [vmem:[%s25] sm:$0x1]
  %v4287 = vperm.slane %v4285, 0
  %v4290 = vsel %vm545, %v4281, 0
  %v4293 = vsel %vm545, %v4282, 0
  %v4296 = vsel %vm545, %v4283, 0
  %v4299 = vsel %vm545, %v4284, 0
  %4301 = vmatpush.bf16.msra.mxu0 0
  %4302 = vmatpush.bf16.msra.mxu0 0
  %4303 = vmatpush.bf16.msra.mxu0 0
  %4304 = vmatpush.bf16.msra.mxu0 0
  %4305 = vmatpush.bf16.msra.mxu0 %v3867
  %4306 = vmatpush.bf16.msra.mxu0 %v3866
  %4307 = vmatpush.bf16.msra.mxu0 %v3865
  %4308 = vmatpush.bf16.msra.mxu0 %v3864
  %4309 = vmatmul.bf16.gmra.mxu0 %v4290
  %v4310 = vpop.f32.mrf.mxu0
  %v4311 = vadd.f32 %v4287, %v4310
  %v4312 = vpop.f32.mrf.mxu0
  %v4313 = vadd.f32 %v4287, %v4312
  %4314 = vmatmul.bf16.gmra.mxu0 %v4293
  %v4315 = vpop.f32.mrf.mxu0
  %v4316 = vadd.f32 %v4287, %v4315
  %v4317 = vpop.f32.mrf.mxu0
  %v4318 = vadd.f32 %v4287, %v4317
  %4319 = vmatmul.bf16.gmra.mxu0 %v4296
  %v4320 = vpop.f32.mrf.mxu0
  %v4321 = vadd.f32 %v4287, %v4320
  %v4322 = vpop.f32.mrf.mxu0
  %v4323 = vadd.f32 %v4287, %v4322
  %4324 = vmatmul.bf16.gmra.mxu0 %v4299
  %v4325 = vpop.f32.mrf.mxu0
  %v4326 = vadd.f32 %v4287, %v4325
  %v4327 = vpop.f32.mrf.mxu0
  %v4328 = vadd.f32 %v4287, %v4327
  %4329 = vdwg.mxu0
  %v4330 = vld [vmem:[%s20] sm:$0xff]
  %v4331 = vld [vmem:[%s20 + $0x8] sm:$0xff]
  %v4332 = vld [vmem:[%s20 + $0x10] sm:$0xff]
  %v4333 = vld [vmem:[%s20 + $0x18] sm:$0xff]
  %v4334 = vpack.c.bf16 %v4331, %v4330
  %v4335 = vpack.c.bf16 %v4333, %v4332
  %v4336 = vld [vmem:[%s21] sm:$0x1]
  %v4338 = vperm.slane %v4336, 0
  %4340 = vmatpush.bf16.msra.mxu0 0
  %4341 = vmatpush.bf16.msra.mxu0 0
  %4342 = vmatpush.bf16.msra.mxu0 0
  %4343 = vmatpush.bf16.msra.mxu0 0
  %4344 = vmatpush.bf16.msra.mxu0 0
  %4345 = vmatpush.bf16.msra.mxu0 0
  %4346 = vmatpush.bf16.msra.mxu0 %v4335
  %4347 = vmatpush.bf16.msra.mxu0 %v4334
  %4348 = vmatmul.bf16.gmra.mxu0 %v3824
  %v4349 = vpop.f32.mrf.mxu0
  %v4350 = vadd.f32 %v4338, %v4349
  %v4351 = vpop.f32.mrf.mxu0
  %v4352 = vadd.f32 %v4338, %v4351
  %4353 = vmatmul.bf16.gmra.mxu0 %v3827
  %v4354 = vpop.f32.mrf.mxu0
  %v4355 = vadd.f32 %v4338, %v4354
  %v4356 = vpop.f32.mrf.mxu0
  %v4357 = vadd.f32 %v4338, %v4356
  %4358 = vmatmul.bf16.gmra.mxu0 %v3830
  %v4359 = vpop.f32.mrf.mxu0
  %v4360 = vadd.f32 %v4338, %v4359
  %v4361 = vpop.f32.mrf.mxu0
  %v4362 = vadd.f32 %v4338, %v4361
  %4363 = vmatmul.bf16.gmra.mxu0 %v3833
  %v4364 = vpop.f32.mrf.mxu0
  %v4365 = vadd.f32 %v4338, %v4364
  %v4366 = vpop.f32.mrf.mxu0
  %v4367 = vadd.f32 %v4338, %v4366
  %4368 = vdwg.mxu0
  %v4369 = vadd.f32 %v4350, %v4311
  %v4370 = vadd.f32 %v4352, %v4313
  %v4371 = vadd.f32 %v4355, %v4316
  %v4372 = vadd.f32 %v4357, %v4318
  %v4373 = vadd.f32 %v4360, %v4321
  %v4374 = vadd.f32 %v4362, %v4323
  %v4375 = vadd.f32 %v4365, %v4326
  %v4376 = vadd.f32 %v4367, %v4328
  %v4377 = vmax.f32 %v4369, 0.0
  %v4378 = vmax.f32 %v4370, 0.0
  %v4379 = vmax.f32 %v4371, 0.0
  %v4380 = vmax.f32 %v4372, 0.0
  %v4381 = vmax.f32 %v4373, 0.0
  %v4382 = vmax.f32 %v4374, 0.0
  %v4383 = vmax.f32 %v4375, 0.0
  %v4384 = vmax.f32 %v4376, 0.0
  %4385 = vst.msk [vmem:[%s26] sm:$0xff] %vm3869, %v4377
  %4386 = vst.msk [vmem:[%s26 + $0x8] sm:$0xff] %vm3869, %v4378
  %4387 = vst.msk [vmem:[%s26 + $0x10] sm:$0xff] %vm3869, %v4379
  %4388 = vst.msk [vmem:[%s26 + $0x18] sm:$0xff] %vm3869, %v4380
  %4389 = vst.msk [vmem:[%s26 + $0x20] sm:$0xff] %vm3869, %v4381
  %4390 = vst.msk [vmem:[%s26 + $0x28] sm:$0xff] %vm3869, %v4382
  %4391 = vst.msk [vmem:[%s26 + $0x30] sm:$0xff] %vm3869, %v4383
  %4392 = vst.msk [vmem:[%s26 + $0x38] sm:$0xff] %vm3869, %v4384
  // Predicated region
  $region106: #{net_forward.1} parent=0 // pred_check
    _
  $region107: #{net_forward.1} parent=0 // pred_check_branch
    %4394 = sbr.rel (0) target = $region109
  $region108: #{net_forward.1} parent=0 // pred_region
    _
  $region109: #{net_forward.1} parent=0 // pred_fallthru
    _
  // Predicated region
  $region110: #{net_forward.1} parent=0 // pred_check
    _
  $region111: #{net_forward.1} parent=0 // pred_check_branch
    %4396 = sbr.rel (0) target = $region113
  $region112: #{net_forward.1} parent=0 // pred_region
    _
  $region113: #{net_forward.1} parent=0 // pred_fallthru
    _

</llo_original>
